<compile_context>
chip_gen: v6e
topology: v6e:2x2x1
jax: 0.10.0
libtpu: 0.0.40
codegen_flags: <defaults>
</compile_context>

<pallas_src>
import jax
import jax.numpy as jnp
from jax.experimental import pallas as pl
from jax.experimental.pallas import tpu as pltpu


def _encoder_kernel(x_ref, w1_ref, b1_ref, w2_ref, b2_ref, w3_ref, b3_ref, o_ref):
    # x_ref: (tm, 8) f32 rows (K padded 6->8); w*_ref: (K, N) bf16; b*_ref: (1, N) f32.
    x = x_ref[...].astype(jnp.bfloat16)

    # Layer 1: Linear(6, 1024) + ReLU (bias/ReLU in f32).
    # TODO(synk): Dropout(0.3) is inference-mode identity; add pltpu.prng_* masking for training.
    h = jnp.dot(x, w1_ref[...], preferred_element_type=jnp.float32) + b1_ref[...]
    h = jnp.maximum(h, 0.0)                                           # (tm, 1024) f32

    # Layer 2: Linear(1024, 512) + ReLU.
    h = jnp.dot(h.astype(jnp.bfloat16), w2_ref[...],
                preferred_element_type=jnp.float32) + b2_ref[...]
    h = jnp.maximum(h, 0.0)                                           # (tm, 512) f32

    # Layer 3: Linear(512, n_pad).  Padded output columns carry a -1e30 bias so
    # exp() underflows to exactly 0 and the softmax denominator is unchanged.
    logits = jnp.dot(h.astype(jnp.bfloat16), w3_ref[...],
                     preferred_element_type=jnp.float32) + b3_ref[...]

    # Row-wise numerically-stable softmax (== F.softmax(x3, dim=1) for 2-D x).
    m = jnp.max(logits, axis=-1, keepdims=True)
    p = jnp.exp(logits - m)
    denom = jnp.sum(p, axis=-1, keepdims=True)
    o_ref[...] = (p * pl.reciprocal(denom, approx=True)).astype(o_ref.dtype)


def _pick_tm(m):
    """Rows per grid step.

    Large tiles amortize the ~0.35 us per-step overhead and the per-step
    re-stream of the VMEM-resident weights into the MXU; mid-size batches are
    split into (>=) two steps so v7x's two TensorCores both get work under
    dimension_semantics=("parallel",).
    """
    m8 = max(8, -(-m // 8) * 8)          # sublane-align (f32 tile: 8 rows)
    cap = 512                            # bf16 operands -> activations well inside VMEM
    if m8 <= 2 * cap:
        if m8 >= 64:                     # worth splitting for the 2nd TensorCore
            return max(8, -(-(m8 // 2) // 8) * 8)
        return m8                        # tiny batch: one step, no extra overhead
    return cap


def transition_encoder_forward(x, w1, b1, w2, b2, w3, b3):
    """Forward pass of Transition_Encoder.

    x:  (batch, 6) float32
    w*: PyTorch Linear convention (out_ch, in_ch); b*: (out_ch,)
    returns (batch, n_variables) softmax probabilities.
    """
    assert x.ndim == 2, "Transition_Encoder softmax(dim=1) implies 2-D input (batch, 6)"
    M, in_ch = x.shape
    h1 = w1.shape[0]                     # 1024
    h2 = w2.shape[0]                     # 512
    n_vars = w3.shape[0]

    # --- one-time weight preparation (pre-transpose to (K,N), bf16, padding) ---
    k_pad = max(8, -(-in_ch // 8) * 8)                                   # 6 -> 8
    n_pad = -(-n_vars // 128) * 128                                      # lane-dense out

    x_k = jnp.pad(x, ((0, 0), (0, k_pad - in_ch))) if k_pad != in_ch else x

    w1t = jnp.pad(w1.T, ((0, k_pad - in_ch), (0, 0))).astype(jnp.bfloat16)   # (8, 1024)
    w2t = w2.T.astype(jnp.bfloat16)                                          # (1024, 512)
    w3t = jnp.pad(w3.T, ((0, 0), (0, n_pad - n_vars))).astype(jnp.bfloat16)  # (512, n_pad)

    b1_2d = b1.astype(jnp.float32).reshape(1, h1)
    b2_2d = b2.astype(jnp.float32).reshape(1, h2)
    b3_2d = jnp.pad(b3.astype(jnp.float32), (0, n_pad - n_vars),
                    constant_values=-1e30).reshape(1, n_pad)

    # --- row tiling ---
    tm = _pick_tm(M)
    m_pad = pl.cdiv(M, tm) * tm
    x_p = jnp.pad(x_k, ((0, m_pad - M), (0, 0))) if m_pad != M else x_k
    grid = (m_pad // tm,)

    def _call(single_buffer):
        def _const(shape):
            # Constant-index blocks: loaded once, VMEM-resident for the whole grid.
            if single_buffer:
                return pl.BlockSpec(shape, lambda i: (0,) * len(shape),
                                    pipeline_mode=pl.Buffered(1))
            return pl.BlockSpec(shape, lambda i: (0,) * len(shape))

        return pl.pallas_call(
            _encoder_kernel,
            out_shape=jax.ShapeDtypeStruct((m_pad, n_pad), jnp.float32),
            grid_spec=pltpu.PrefetchScalarGridSpec(
                num_scalar_prefetch=0,
                grid=grid,
                in_specs=[
                    pl.BlockSpec((tm, k_pad), lambda i: (i, 0)),   # x rows (streamed)
                    _const(w1t.shape), _const(b1_2d.shape),
                    _const(w2t.shape), _const(b2_2d.shape),
                    _const(w3t.shape), _const(b3_2d.shape),
                ],
                out_specs=pl.BlockSpec((tm, n_pad), lambda i: (i, 0)),
            ),
            compiler_params=pltpu.CompilerParams(
                dimension_semantics=("parallel",),
                vmem_limit_bytes=32 * 1024 * 1024,
            ),
        )(x_p, w1t, b1_2d, w2t, b2_2d, w3t, b3_2d)

    try:
        out_p = _call(single_buffer=True)
    except Exception:
        # Fallback for builds that don't accept per-block pipeline_mode on the
        # main pallas_call grid (costs ~1 MB of extra double-buffered VMEM only).
        out_p = _call(single_buffer=False)

    out = out_p[:M, :n_vars]
    return out.astype(x.dtype)


if __name__ == "__main__":
    # Small shapes consistent with the module: input feature dim fixed at 6.
    batch, in_ch, n_variables = 16, 6, 128

    key = jax.random.PRNGKey(0)
    keys = jax.random.split(key, 7)

    x = jax.random.normal(keys[0], (batch, in_ch), dtype=jnp.float32)

    def linear_init(kw, kb, fan_in, fan_out):
        # nn.Linear default init: U(-1/sqrt(fan_in), 1/sqrt(fan_in))
        bound = 1.0 / (fan_in ** 0.5)
        w = jax.random.uniform(kw, (fan_out, fan_in), jnp.float32, -bound, bound)
        b = jax.random.uniform(kb, (fan_out,), jnp.float32, -bound, bound)
        return w, b

    w1, b1 = linear_init(keys[1], keys[2], in_ch, 1024)
    w2, b2 = linear_init(keys[3], keys[4], 1024, 512)
    w3, b3 = linear_init(keys[5], keys[6], 512, n_variables)

    y = transition_encoder_forward(x, w1, b1, w2, b2, w3, b3)
    y = jax.block_until_ready(y)

    # Plain-JAX f32 reference of the same math (kernel uses bf16 MXU operands
    # with f32 accumulation + approx reciprocal, hence the loosened tolerances).
    r1 = jnp.maximum(x @ w1.T + b1, 0.0)
    r2 = jnp.maximum(r1 @ w2.T + b2, 0.0)
    r3 = r2 @ w3.T + b3
    y_ref = jax.nn.softmax(r3, axis=1)

    assert y.shape == (batch, n_variables)
    assert bool(jnp.allclose(jnp.sum(y, axis=1), 1.0, atol=1e-2))
    assert bool(jnp.allclose(y, y_ref, atol=1e-2, rtol=1e-2))

    print("KERNEL_OK")
</pallas_src>

<mosaic_0001>
module attributes {stable_mosaic.version = 11 : i64} {
  func.func @_encoder_kernel(%arg0: i32, %arg1: memref<16x8xf32, #tpu.memory_space<vmem>>, %arg2: memref<8x1024xbf16, #tpu.memory_space<vmem>>, %arg3: memref<1x1024xf32, #tpu.memory_space<vmem>>, %arg4: memref<1024x512xbf16, #tpu.memory_space<vmem>>, %arg5: memref<1x512xf32, #tpu.memory_space<vmem>>, %arg6: memref<512x128xbf16, #tpu.memory_space<vmem>>, %arg7: memref<1x128xf32, #tpu.memory_space<vmem>>, %arg8: memref<16x128xf32, #tpu.memory_space<vmem>>) attributes {dimension_semantics = [#tpu.dimension_semantics<parallel>], iteration_bounds = array<i64: 1>, scalar_prefetch = 0 : i64, scratch_operands = 0 : i64, tpu.core_type = #tpu.core_type<tc>, window_params = [{transform_indices = @transform_0, window_bounds = array<i64: 16, 8>}, {pipeline_mode = #tpu.pipeline_mode<synchronous>, transform_indices = @transform_1, window_bounds = array<i64: 8, 1024>}, {pipeline_mode = #tpu.pipeline_mode<synchronous>, transform_indices = @transform_2, window_bounds = array<i64: 1, 1024>}, {pipeline_mode = #tpu.pipeline_mode<synchronous>, transform_indices = @transform_3, window_bounds = array<i64: 1024, 512>}, {pipeline_mode = #tpu.pipeline_mode<synchronous>, transform_indices = @transform_4, window_bounds = array<i64: 1, 512>}, {pipeline_mode = #tpu.pipeline_mode<synchronous>, transform_indices = @transform_5, window_bounds = array<i64: 512, 128>}, {pipeline_mode = #tpu.pipeline_mode<synchronous>, transform_indices = @transform_6, window_bounds = array<i64: 1, 128>}, {transform_indices = @transform_7, window_bounds = array<i64: 16, 128>}]} {
    %c0 = arith.constant 0 : index
    %c0_0 = arith.constant 0 : index
    %0 = vector.load %arg1[%c0, %c0_0] : memref<16x8xf32, #tpu.memory_space<vmem>>, vector<16x8xf32>
    %1 = arith.truncf %0 : vector<16x8xf32> to vector<16x8xbf16>
    %c0_1 = arith.constant 0 : index
    %c0_2 = arith.constant 0 : index
    %2 = vector.load %arg2[%c0_1, %c0_2] : memref<8x1024xbf16, #tpu.memory_space<vmem>>, vector<8x1024xbf16>
    %cst = arith.constant dense<0.000000e+00> : vector<16x1024xf32>
    %3 = tpu.matmul %1, %2, %cst {dimension_numbers = #tpu.dot_dimension_numbers<[1], [0], [0], [1], [0, 0, 1, 1], [], []>} : vector<16x8xbf16>, vector<8x1024xbf16>, vector<16x1024xf32> -> vector<16x1024xf32>
    %c0_3 = arith.constant 0 : index
    %c0_4 = arith.constant 0 : index
    %4 = vector.load %arg3[%c0_3, %c0_4] : memref<1x1024xf32, #tpu.memory_space<vmem>>, vector<1x1024xf32>
    %5 = vector.broadcast %4 : vector<1x1024xf32> to vector<16x1024xf32>
    %6 = arith.addf %3, %5 : vector<16x1024xf32>
    %cst_5 = arith.constant 0.000000e+00 : f32
    %7 = vector.broadcast %cst_5 : f32 to vector<16x1024xf32>
    %8 = arith.maximumf %6, %7 : vector<16x1024xf32>
    %9 = arith.truncf %8 : vector<16x1024xf32> to vector<16x1024xbf16>
    %c0_6 = arith.constant 0 : index
    %c0_7 = arith.constant 0 : index
    %10 = vector.load %arg4[%c0_6, %c0_7] : memref<1024x512xbf16, #tpu.memory_space<vmem>>, vector<1024x512xbf16>
    %cst_8 = arith.constant dense<0.000000e+00> : vector<16x512xf32>
    %11 = tpu.matmul %9, %10, %cst_8 {dimension_numbers = #tpu.dot_dimension_numbers<[1], [0], [0], [1], [0, 0, 1, 1], [], []>} : vector<16x1024xbf16>, vector<1024x512xbf16>, vector<16x512xf32> -> vector<16x512xf32>
    %c0_9 = arith.constant 0 : index
    %c0_10 = arith.constant 0 : index
    %12 = vector.load %arg5[%c0_9, %c0_10] : memref<1x512xf32, #tpu.memory_space<vmem>>, vector<1x512xf32>
    %13 = vector.broadcast %12 : vector<1x512xf32> to vector<16x512xf32>
    %14 = arith.addf %11, %13 : vector<16x512xf32>
    %cst_11 = arith.constant 0.000000e+00 : f32
    %15 = vector.broadcast %cst_11 : f32 to vector<16x512xf32>
    %16 = arith.maximumf %14, %15 : vector<16x512xf32>
    %17 = arith.truncf %16 : vector<16x512xf32> to vector<16x512xbf16>
    %c0_12 = arith.constant 0 : index
    %c0_13 = arith.constant 0 : index
    %18 = vector.load %arg6[%c0_12, %c0_13] : memref<512x128xbf16, #tpu.memory_space<vmem>>, vector<512x128xbf16>
    %cst_14 = arith.constant dense<0.000000e+00> : vector<16x128xf32>
    %19 = tpu.matmul %17, %18, %cst_14 {dimension_numbers = #tpu.dot_dimension_numbers<[1], [0], [0], [1], [0, 0, 1, 1], [], []>} : vector<16x512xbf16>, vector<512x128xbf16>, vector<16x128xf32> -> vector<16x128xf32>
    %c0_15 = arith.constant 0 : index
    %c0_16 = arith.constant 0 : index
    %20 = vector.load %arg7[%c0_15, %c0_16] : memref<1x128xf32, #tpu.memory_space<vmem>>, vector<1x128xf32>
    %21 = vector.broadcast %20 : vector<1x128xf32> to vector<16x128xf32>
    %22 = arith.addf %19, %21 : vector<16x128xf32>
    %cst_17 = arith.constant dense<0xFF800000> : vector<16xf32>
    %23 = vector.multi_reduction <maximumf>, %22, %cst_17 [1] : vector<16x128xf32> to vector<16xf32>
    %24 = vector.shape_cast %23 : vector<16xf32> to vector<16x1xf32>
    %25 = vector.broadcast %24 : vector<16x1xf32> to vector<16x128xf32>
    %26 = arith.subf %22, %25 : vector<16x128xf32>
    %27 = math.exp %26 : vector<16x128xf32>
    %cst_18 = arith.constant dense<0.000000e+00> : vector<16xf32>
    %28 = vector.multi_reduction <add>, %27, %cst_18 [1] : vector<16x128xf32> to vector<16xf32>
    %29 = vector.shape_cast %28 : vector<16xf32> to vector<16x1xf32>
    %30 = tpu.reciprocal %29 {approx = true} : vector<16x1xf32> -> vector<16x1xf32>
    %31 = vector.broadcast %30 : vector<16x1xf32> to vector<16x128xf32>
    %32 = arith.mulf %27, %31 : vector<16x128xf32>
    %c0_19 = arith.constant 0 : index
    %c0_20 = arith.constant 0 : index
    %33 = vector.load %arg8[%c0_19, %c0_20] : memref<16x128xf32, #tpu.memory_space<vmem>>, vector<16x128xf32>
    tpu.vector_store %arg8[%c0_19, %c0_20], %32 {strides = array<i32>} : memref<16x128xf32, #tpu.memory_space<vmem>>, vector<16x128xf32>,
    return
  }
  func.func @transform_0(%arg0: i32) -> (i32, i32) {
    %c0_i32 = arith.constant 0 : i32
    %c0_i32_0 = arith.constant 0 : i32
    return %arg0, %c0_i32 : i32, i32
  }
  func.func @transform_1(%arg0: i32) -> (i32, i32) {
    %c0_i32 = arith.constant 0 : i32
    %c0_i32_0 = arith.constant 0 : i32
    %c0_i32_1 = arith.constant 0 : i32
    return %c0_i32, %c0_i32_0 : i32, i32
  }
  func.func @transform_2(%arg0: i32) -> (i32, i32) {
    %c0_i32 = arith.constant 0 : i32
    %c0_i32_0 = arith.constant 0 : i32
    %c0_i32_1 = arith.constant 0 : i32
    return %c0_i32, %c0_i32_0 : i32, i32
  }
  func.func @transform_3(%arg0: i32) -> (i32, i32) {
    %c0_i32 = arith.constant 0 : i32
    %c0_i32_0 = arith.constant 0 : i32
    %c0_i32_1 = arith.constant 0 : i32
    return %c0_i32, %c0_i32_0 : i32, i32
  }
  func.func @transform_4(%arg0: i32) -> (i32, i32) {
    %c0_i32 = arith.constant 0 : i32
    %c0_i32_0 = arith.constant 0 : i32
    %c0_i32_1 = arith.constant 0 : i32
    return %c0_i32, %c0_i32_0 : i32, i32
  }
  func.func @transform_5(%arg0: i32) -> (i32, i32) {
    %c0_i32 = arith.constant 0 : i32
    %c0_i32_0 = arith.constant 0 : i32
    %c0_i32_1 = arith.constant 0 : i32
    return %c0_i32, %c0_i32_0 : i32, i32
  }
  func.func @transform_6(%arg0: i32) -> (i32, i32) {
    %c0_i32 = arith.constant 0 : i32
    %c0_i32_0 = arith.constant 0 : i32
    %c0_i32_1 = arith.constant 0 : i32
    return %c0_i32, %c0_i32_0 : i32, i32
  }
  func.func @transform_7(%arg0: i32) -> (i32, i32) {
    %c0_i32 = arith.constant 0 : i32
    %c0_i32_0 = arith.constant 0 : i32
    return %arg0, %c0_i32 : i32, i32
  }
}

module attributes {stable_mosaic.version = 11 : i64} {
  func.func @_encoder_kernel(%arg0: i32, %arg1: memref<16x8xf32, #tpu.memory_space<vmem>>, %arg2: memref<8x1024xbf16, #tpu.memory_space<vmem>>, %arg3: memref<1x1024xf32, #tpu.memory_space<vmem>>, %arg4: memref<1024x512xbf16, #tpu.memory_space<vmem>>, %arg5: memref<1x512xf32, #tpu.memory_space<vmem>>, %arg6: memref<512x128xbf16, #tpu.memory_space<vmem>>, %arg7: memref<1x128xf32, #tpu.memory_space<vmem>>, %arg8: memref<16x128xf32, #tpu.memory_space<vmem>>) attributes {dimension_semantics = [#tpu.dimension_semantics<parallel>], iteration_bounds = array<i64: 1>, scalar_prefetch = 0 : i64, scratch_operands = 0 : i64, tpu.core_type = #tpu.core_type<tc>, window_params = [{transform_indices = @transform_0, window_bounds = array<i64: 16, 8>}, {pipeline_mode = #tpu.pipeline_mode<synchronous>, transform_indices = @transform_1, window_bounds = array<i64: 8, 1024>}, {pipeline_mode = #tpu.pipeline_mode<synchronous>, transform_indices = @transform_2, window_bounds = array<i64: 1, 1024>}, {pipeline_mode = #tpu.pipeline_mode<synchronous>, transform_indices = @transform_3, window_bounds = array<i64: 1024, 512>}, {pipeline_mode = #tpu.pipeline_mode<synchronous>, transform_indices = @transform_4, window_bounds = array<i64: 1, 512>}, {pipeline_mode = #tpu.pipeline_mode<synchronous>, transform_indices = @transform_5, window_bounds = array<i64: 512, 128>}, {pipeline_mode = #tpu.pipeline_mode<synchronous>, transform_indices = @transform_6, window_bounds = array<i64: 1, 128>}, {transform_indices = @transform_7, window_bounds = array<i64: 16, 128>}]} {
    %c0 = arith.constant 0 : index
    %c0_0 = arith.constant 0 : index
    %0 = vector.load %arg1[%c0, %c0_0] : memref<16x8xf32, #tpu.memory_space<vmem>>, vector<16x8xf32>
    %1 = arith.truncf %0 : vector<16x8xf32> to vector<16x8xbf16>
    %c0_1 = arith.constant 0 : index
    %c0_2 = arith.constant 0 : index
    %2 = vector.load %arg2[%c0_1, %c0_2] : memref<8x1024xbf16, #tpu.memory_space<vmem>>, vector<8x1024xbf16>
    %cst = arith.constant dense<0.000000e+00> : vector<16x1024xf32>
    %3 = tpu.matmul %1, %2, %cst {dimension_numbers = #tpu.dot_dimension_numbers<[1], [0], [0], [1], [0, 0, 1, 1], [], []>} : vector<16x8xbf16>, vector<8x1024xbf16>, vector<16x1024xf32> -> vector<16x1024xf32>
    %c0_3 = arith.constant 0 : index
    %c0_4 = arith.constant 0 : index
    %4 = vector.load %arg3[%c0_3, %c0_4] : memref<1x1024xf32, #tpu.memory_space<vmem>>, vector<1x1024xf32>
    %5 = vector.broadcast %4 : vector<1x1024xf32> to vector<16x1024xf32>
    %6 = arith.addf %3, %5 : vector<16x1024xf32>
    %cst_5 = arith.constant 0.000000e+00 : f32
    %7 = vector.broadcast %cst_5 : f32 to vector<16x1024xf32>
    %8 = arith.maximumf %6, %7 : vector<16x1024xf32>
    %9 = arith.truncf %8 : vector<16x1024xf32> to vector<16x1024xbf16>
    %c0_6 = arith.constant 0 : index
    %c0_7 = arith.constant 0 : index
    %10 = vector.load %arg4[%c0_6, %c0_7] : memref<1024x512xbf16, #tpu.memory_space<vmem>>, vector<1024x512xbf16>
    %cst_8 = arith.constant dense<0.000000e+00> : vector<16x512xf32>
    %11 = tpu.matmul %9, %10, %cst_8 {dimension_numbers = #tpu.dot_dimension_numbers<[1], [0], [0], [1], [0, 0, 1, 1], [], []>} : vector<16x1024xbf16>, vector<1024x512xbf16>, vector<16x512xf32> -> vector<16x512xf32>
    %c0_9 = arith.constant 0 : index
    %c0_10 = arith.constant 0 : index
    %12 = vector.load %arg5[%c0_9, %c0_10] : memref<1x512xf32, #tpu.memory_space<vmem>>, vector<1x512xf32>
    %13 = vector.broadcast %12 : vector<1x512xf32> to vector<16x512xf32>
    %14 = arith.addf %11, %13 : vector<16x512xf32>
    %cst_11 = arith.constant 0.000000e+00 : f32
    %15 = vector.broadcast %cst_11 : f32 to vector<16x512xf32>
    %16 = arith.maximumf %14, %15 : vector<16x512xf32>
    %17 = arith.truncf %16 : vector<16x512xf32> to vector<16x512xbf16>
    %c0_12 = arith.constant 0 : index
    %c0_13 = arith.constant 0 : index
    %18 = vector.load %arg6[%c0_12, %c0_13] : memref<512x128xbf16, #tpu.memory_space<vmem>>, vector<512x128xbf16>
    %cst_14 = arith.constant dense<0.000000e+00> : vector<16x128xf32>
    %19 = tpu.matmul %17, %18, %cst_14 {dimension_numbers = #tpu.dot_dimension_numbers<[1], [0], [0], [1], [0, 0, 1, 1], [], []>} : vector<16x512xbf16>, vector<512x128xbf16>, vector<16x128xf32> -> vector<16x128xf32>
    %c0_15 = arith.constant 0 : index
    %c0_16 = arith.constant 0 : index
    %20 = vector.load %arg7[%c0_15, %c0_16] : memref<1x128xf32, #tpu.memory_space<vmem>>, vector<1x128xf32>
    %21 = vector.broadcast %20 : vector<1x128xf32> to vector<16x128xf32>
    %22 = arith.addf %19, %21 : vector<16x128xf32>
    %cst_17 = arith.constant dense<0xFF800000> : vector<16xf32>
    %23 = vector.multi_reduction <maximumf>, %22, %cst_17 [1] : vector<16x128xf32> to vector<16xf32>
    %24 = vector.shape_cast %23 : vector<16xf32> to vector<16x1xf32>
    %25 = vector.broadcast %24 : vector<16x1xf32> to vector<16x128xf32>
    %26 = arith.subf %22, %25 : vector<16x128xf32>
    %27 = math.exp %26 : vector<16x128xf32>
    %cst_18 = arith.constant dense<0.000000e+00> : vector<16xf32>
    %28 = vector.multi_reduction <add>, %27, %cst_18 [1] : vector<16x128xf32> to vector<16xf32>
    %29 = vector.shape_cast %28 : vector<16xf32> to vector<16x1xf32>
    %30 = tpu.reciprocal %29 {approx = true} : vector<16x1xf32> -> vector<16x1xf32>
    %31 = vector.broadcast %30 : vector<16x1xf32> to vector<16x128xf32>
    %32 = arith.mulf %27, %31 : vector<16x128xf32>
    %c0_19 = arith.constant 0 : index
    %c0_20 = arith.constant 0 : index
    %33 = vector.load %arg8[%c0_19, %c0_20] : memref<16x128xf32, #tpu.memory_space<vmem>>, vector<16x128xf32>
    tpu.vector_store %arg8[%c0_19, %c0_20], %32 {strides = array<i32>} : memref<16x128xf32, #tpu.memory_space<vmem>>, vector<16x128xf32>,
    return
  }
  func.func @transform_0(%arg0: i32) -> (i32, i32) {
    %c0_i32 = arith.constant 0 : i32
    %c0_i32_0 = arith.constant 0 : i32
    return %arg0, %c0_i32 : i32, i32
  }
  func.func @transform_1(%arg0: i32) -> (i32, i32) {
    %c0_i32 = arith.constant 0 : i32
    %c0_i32_0 = arith.constant 0 : i32
    %c0_i32_1 = arith.constant 0 : i32
    return %c0_i32, %c0_i32_0 : i32, i32
  }
  func.func @transform_2(%arg0: i32) -> (i32, i32) {
    %c0_i32 = arith.constant 0 : i32
    %c0_i32_0 = arith.constant 0 : i32
    %c0_i32_1 = arith.constant 0 : i32
    return %c0_i32, %c0_i32_0 : i32, i32
  }
  func.func @transform_3(%arg0: i32) -> (i32, i32) {
    %c0_i32 = arith.constant 0 : i32
    %c0_i32_0 = arith.constant 0 : i32
    %c0_i32_1 = arith.constant 0 : i32
    return %c0_i32, %c0_i32_0 : i32, i32
  }
  func.func @transform_4(%arg0: i32) -> (i32, i32) {
    %c0_i32 = arith.constant 0 : i32
    %c0_i32_0 = arith.constant 0 : i32
    %c0_i32_1 = arith.constant 0 : i32
    return %c0_i32, %c0_i32_0 : i32, i32
  }
  func.func @transform_5(%arg0: i32) -> (i32, i32) {
    %c0_i32 = arith.constant 0 : i32
    %c0_i32_0 = arith.constant 0 : i32
    %c0_i32_1 = arith.constant 0 : i32
    return %c0_i32, %c0_i32_0 : i32, i32
  }
  func.func @transform_6(%arg0: i32) -> (i32, i32) {
    %c0_i32 = arith.constant 0 : i32
    %c0_i32_0 = arith.constant 0 : i32
    %c0_i32_1 = arith.constant 0 : i32
    return %c0_i32, %c0_i32_0 : i32, i32
  }
  func.func @transform_7(%arg0: i32) -> (i32, i32) {
    %c0_i32 = arith.constant 0 : i32
    %c0_i32_0 = arith.constant 0 : i32
    return %arg0, %c0_i32 : i32, i32
  }
}

</mosaic_0001>

<llo_original>
// kernel: tpu_custom_call.1
$region0: #{tpu_custom_call.1}
  #allocation0 [shape = 'u32[]', space=smem, size = 0x4, offset = 0x4, fixed_abs, tag = 'smem constant byte address 0x4 - core index']
  #allocation1 [shape = 'u32[144,128]{1,0:T(1,128)}', space=vmem, size = 0x12000, scoped, tag = 'internal scratch']
  %s0 = inlined_call_operand.vmem [shape: f32[16,8], index: 0, kind: input, shape index: {}]
  %s1 = inlined_call_operand.hbm [shape: bf16[8,1024], index: 1, kind: input, shape index: {}]
  %s2 = inlined_call_operand.vmem [shape: f32[1,1024], index: 2, kind: input, shape index: {}]
  %s3 = inlined_call_operand.hbm [shape: bf16[1024,512], index: 3, kind: input, shape index: {}]
  %s4 = inlined_call_operand.vmem [shape: f32[1,512], index: 4, kind: input, shape index: {}]
  %s5 = inlined_call_operand.hbm [shape: bf16[512,128], index: 5, kind: input, shape index: {}]
  %s6 = inlined_call_operand.vmem [shape: f32[1,128], index: 6, kind: input, shape index: {}]
  %s7 = inlined_call_operand.hbm [shape: f32[16,128], index: 7, kind: output, shape index: {}]
  %s8 = sld [smem:[#allocation0]]
  $region50: #{tpu_custom_call.1} parent=0
    _
  %s10 = ssub.s32 1, %s8
  %s11 = scalar_select 0, %s10, %s8
  $region1: #{tpu_custom_call.1} parent=0
    #allocation2 [shape = 'u8[16384]{0}', space=vmem, size = 0x4000, scoped, tag = 'input window, operand 1, single buffered']
    #allocation3 [shape = 's32[1]{0}', space=sflag, size = 0x4, scoped, tag = 'scoped memory for tpu_custom_call.1']
    #allocation4 [shape = 's32[1]{0}', space=sflag, size = 0x4, scoped, tag = 'scoped memory for tpu_custom_call.1']
    #allocation5 [shape = 'u8[1048576]{0}', space=vmem, size = 0x100000, scoped, tag = 'input window, operand 3, single buffered']
    #allocation6 [shape = 's32[1]{0}', space=sflag, size = 0x4, scoped, tag = 'scoped memory for tpu_custom_call.1']
    #allocation7 [shape = 'u8[131072]{0}', space=vmem, size = 0x20000, scoped, tag = 'input window, operand 5, single buffered']
    #allocation8 [shape = 'u8[8192]{0}', space=vmem, size = 0x2000, scoped, tag = 'output window, operand 0, single buffered']
    %12 = vsyncpa [#allocation3], 0
    %13 = vsyncpa [#allocation6], 0
    %14 = vsyncpa [#allocation4], 0
    // Predicated region
    $region2: #{tpu_custom_call.1} parent=1 // pred_check
      _
    $region3: #{tpu_custom_call.1} parent=1 // pred_check_branch
      %16 = sbr.rel (0) target = $region5
    $region4: #{tpu_custom_call.1} parent=1 // pred_region
      _
    $region5: #{tpu_custom_call.1} parent=1 // pred_fallthru
      _
    // Predicated region
    $region6: #{tpu_custom_call.1} parent=1 // pred_check
      _
    $region7: #{tpu_custom_call.1} parent=1 // pred_check_branch
      %18 = sbr.rel (0) target = $region9
    $region8: #{tpu_custom_call.1} parent=1 // pred_region
      %s20 = ssub.s32 512, 512
      %21 = vsyncadd [#allocation3], %s20
      %s23 = sshll.u32 [#allocation2], 4
      %s24 = int_to_ptr.vmem [resolvable:$true] %s23
      %26 = dma.hbm_to_vmem [thread:$0]  %s1, 512, %s24, [#allocation3]
    $region9: #{tpu_custom_call.1} parent=1 // pred_fallthru
      _
    // Predicated region
    $region10: #{tpu_custom_call.1} parent=1 // pred_check
      _
    $region11: #{tpu_custom_call.1} parent=1 // pred_check_branch
      %28 = sbr.rel (0) target = $region13
    $region12: #{tpu_custom_call.1} parent=1 // pred_region
      _
    $region13: #{tpu_custom_call.1} parent=1 // pred_fallthru
      _
    // Predicated region
    $region14: #{tpu_custom_call.1} parent=1 // pred_check
      _
    $region15: #{tpu_custom_call.1} parent=1 // pred_check_branch
      %30 = sbr.rel (0) target = $region17
    $region16: #{tpu_custom_call.1} parent=1 // pred_region
      %s32 = ssub.s32 32768, 32768
      %33 = vsyncadd [#allocation6], %s32
      %s34 = sshll.u32 [#allocation5], 4
      %s35 = int_to_ptr.vmem [resolvable:$true] %s34
      %40 = dma.hbm_to_vmem [thread:$0]  %s3, 32768, %s35, [#allocation6], 256, 256, 16
    $region17: #{tpu_custom_call.1} parent=1 // pred_fallthru
      _
    // Predicated region
    $region18: #{tpu_custom_call.1} parent=1 // pred_check
      _
    $region19: #{tpu_custom_call.1} parent=1 // pred_check_branch
      %42 = sbr.rel (0) target = $region21
    $region20: #{tpu_custom_call.1} parent=1 // pred_region
      _
    $region21: #{tpu_custom_call.1} parent=1 // pred_fallthru
      _
    // Predicated region
    $region22: #{tpu_custom_call.1} parent=1 // pred_check
      _
    $region23: #{tpu_custom_call.1} parent=1 // pred_check_branch
      %44 = sbr.rel (0) target = $region25
    $region24: #{tpu_custom_call.1} parent=1 // pred_region
      %s46 = ssub.s32 4096, 4096
      %47 = vsyncadd [#allocation6], %s46
      %s48 = sshll.u32 [#allocation7], 4
      %s49 = int_to_ptr.vmem [resolvable:$true] %s48
      %54 = dma.hbm_to_vmem [thread:$0]  %s5, 4096, %s49, [#allocation6], 64, 64, 4
    $region25: #{tpu_custom_call.1} parent=1 // pred_fallthru
      _
    // Predicated region
    $region26: #{tpu_custom_call.1} parent=1 // pred_check
      _
    $region27: #{tpu_custom_call.1} parent=1 // pred_check_branch
      %56 = sbr.rel (0) target = $region29
    $region28: #{tpu_custom_call.1} parent=1 // pred_region
      _
    $region29: #{tpu_custom_call.1} parent=1 // pred_fallthru
      _
    // Predicated region
    $region30: #{tpu_custom_call.1} parent=1 // pred_check
      _
    $region31: #{tpu_custom_call.1} parent=1 // pred_check_branch
      %58 = sbr.rel (0) target = $region33
    $region32: #{tpu_custom_call.1} parent=1 // pred_region
      %59 = dma.done [#allocation3], 512
    $region33: #{tpu_custom_call.1} parent=1 // pred_fallthru
      _
    // Predicated region
    $region34: #{tpu_custom_call.1} parent=1 // pred_check
      _
    $region35: #{tpu_custom_call.1} parent=1 // pred_check_branch
      %61 = sbr.rel (0) target = $region37
    $region36: #{tpu_custom_call.1} parent=1 // pred_region
      %62 = dma.done [#allocation6], 32768
    $region37: #{tpu_custom_call.1} parent=1 // pred_fallthru
      _
    // Predicated region
    $region38: #{tpu_custom_call.1} parent=1 // pred_check
      _
    $region39: #{tpu_custom_call.1} parent=1 // pred_check_branch
      %64 = sbr.rel (0) target = $region41
    $region40: #{tpu_custom_call.1} parent=1 // pred_region
      %65 = dma.done [#allocation6], 4096
    $region41: #{tpu_custom_call.1} parent=1 // pred_fallthru
      _
    %v67 = vld [vmem:[%s0] sm:$0xff]
    %v68 = vld [vmem:[%s0 + $0x8] sm:$0xff]
    %v69 = vpack.c.bf16 %v68, %v67
    %v70 = vld [vmem:[#allocation2] sm:$0xff]
    %v71 = vld [vmem:[#allocation2 + $0x8] sm:$0xff]
    %v72 = vld [vmem:[#allocation2 + $0x10] sm:$0xff]
    %v73 = vld [vmem:[#allocation2 + $0x18] sm:$0xff]
    %v74 = vld [vmem:[%s2] sm:$0xff]
    %v76 = vlaneseq
    %v77 = vshrl.u32 %v76, 7
    %v78 = vsub.s32 0, %v77
    %v79 = vrot.slane %v74, %v78
    %v80 = vlaneseq
    %v81 = vshrl.u32 %v80, 7
    %v82 = vsub.s32 1, %v81
    %v83 = vrot.slane %v74, %v82
    %v84 = vlaneseq
    %v85 = vshrl.u32 %v84, 7
    %v86 = vsub.s32 2, %v85
    %v87 = vrot.slane %v74, %v86
    %v88 = vlaneseq
    %v89 = vshrl.u32 %v88, 7
    %v90 = vsub.s32 3, %v89
    %v91 = vrot.slane %v74, %v90
    %v92 = vlaneseq
    %v93 = vshrl.u32 %v92, 7
    %v94 = vsub.s32 4, %v93
    %v95 = vrot.slane %v74, %v94
    %v96 = vlaneseq
    %v97 = vshrl.u32 %v96, 7
    %v98 = vsub.s32 5, %v97
    %v99 = vrot.slane %v74, %v98
    %v100 = vlaneseq
    %v101 = vshrl.u32 %v100, 7
    %v102 = vsub.s32 6, %v101
    %v103 = vrot.slane %v74, %v102
    %v104 = vlaneseq
    %v105 = vshrl.u32 %v104, 7
    %v106 = vsub.s32 7, %v105
    %v107 = vrot.slane %v74, %v106
    %v120 = vunpack.c.l.b16 %v70
    %v121 = vunpack.c.h.b16 %v70
    %v122 = vunpack.c.l.b16 %v71
    %v123 = vunpack.c.h.b16 %v71
    %v124 = vunpack.c.l.b16 %v72
    %v125 = vunpack.c.h.b16 %v72
    %v126 = vunpack.c.l.b16 %v73
    %v127 = vunpack.c.h.b16 %v73
    %v128 = vpack.c.b16 %v120, %v120
    %v129 = vpack.c.b16 %v121, %v121
    %v130 = vpack.c.b16 %v122, %v122
    %v131 = vpack.c.b16 %v123, %v123
    %v132 = vpack.c.b16 %v124, %v124
    %v133 = vpack.c.b16 %v125, %v125
    %v134 = vpack.c.b16 %v126, %v126
    %v135 = vpack.c.b16 %v127, %v127
    %vm136 = vcmask 64512
    %v138 = vsel %vm136, %v69, 0
    %vm140 = vcmask 1043456
    %v142 = vsel %vm140, %v128, 0
    %v145 = vsel %vm140, %v129, 0
    %v148 = vsel %vm140, %v130, 0
    %v151 = vsel %vm140, %v131, 0
    %v154 = vsel %vm140, %v132, 0
    %v157 = vsel %vm140, %v133, 0
    %v160 = vsel %vm140, %v134, 0
    %v163 = vsel %vm140, %v135, 0
    %165 = vmatprep.subr.bf16.mxu0 0
    %166 = vmatpush1.bf16.msra.mxu0 0
    %167 = vmatprep.subr.bf16.mxu0 0
    %168 = vmatpush1.bf16.msra.mxu0 0
    %169 = vmatprep.subr.bf16.mxu0 0
    %170 = vmatpush1.bf16.msra.mxu0 0
    %171 = vmatprep.subr.bf16.mxu0 0
    %172 = vmatpush1.bf16.msra.mxu0 0
    %173 = vmatprep.subr.bf16.mxu0 0
    %174 = vmatpush1.bf16.msra.mxu0 0
    %175 = vmatprep.subr.bf16.mxu0 0
    %176 = vmatpush1.bf16.msra.mxu0 0
    %177 = vmatprep.subr.bf16.mxu0 0
    %178 = vmatpush1.bf16.msra.mxu0 0
    %179 = vmatprep.subr.bf16.mxu0 %v145
    %180 = vmatpush1.bf16.msra.mxu0 %v142
    %181 = vmatprep.subr.bf16.mxu0 0
    %182 = vmatpush2.bf16.msra.mxu0 0
    %183 = vmatprep.subr.bf16.mxu0 0
    %184 = vmatpush2.bf16.msra.mxu0 0
    %185 = vmatprep.subr.bf16.mxu0 0
    %186 = vmatpush2.bf16.msra.mxu0 0
    %187 = vmatprep.subr.bf16.mxu0 0
    %188 = vmatpush2.bf16.msra.mxu0 0
    %189 = vmatprep.subr.bf16.mxu0 0
    %190 = vmatpush2.bf16.msra.mxu0 0
    %191 = vmatprep.subr.bf16.mxu0 0
    %192 = vmatpush2.bf16.msra.mxu0 0
    %193 = vmatprep.subr.bf16.mxu0 0
    %194 = vmatpush2.bf16.msra.mxu0 0
    %195 = vmatprep.subr.bf16.mxu0 0
    %196 = vmatpush2.bf16.msra.mxu0 0
    %197 = vmatprep.mubr.bf16.mxu0 0
    %198 = vmatmul.mubr.bf16.gmra.mxu0 %v138
    %v199 = vpop.f32.mrf.mxu0
    %v200 = vadd.f32 %v79, %v199
    %v201 = vpop.f32.mrf.mxu0
    %v202 = vadd.f32 %v83, %v201
    %v203 = vpop.f32.mrf.mxu0
    %v204 = vadd.f32 %v79, %v203
    %v205 = vpop.f32.mrf.mxu0
    %v206 = vadd.f32 %v83, %v205
    %207 = vdwg.mxu0
    %208 = vmatprep.subr.bf16.mxu0 0
    %209 = vmatpush1.bf16.msra.mxu0 0
    %210 = vmatprep.subr.bf16.mxu0 0
    %211 = vmatpush1.bf16.msra.mxu0 0
    %212 = vmatprep.subr.bf16.mxu0 0
    %213 = vmatpush1.bf16.msra.mxu0 0
    %214 = vmatprep.subr.bf16.mxu0 0
    %215 = vmatpush1.bf16.msra.mxu0 0
    %216 = vmatprep.subr.bf16.mxu0 0
    %217 = vmatpush1.bf16.msra.mxu0 0
    %218 = vmatprep.subr.bf16.mxu0 0
    %219 = vmatpush1.bf16.msra.mxu0 0
    %220 = vmatprep.subr.bf16.mxu0 0
    %221 = vmatpush1.bf16.msra.mxu0 0
    %222 = vmatprep.subr.bf16.mxu0 %v151
    %223 = vmatpush1.bf16.msra.mxu0 %v148
    %224 = vmatprep.subr.bf16.mxu0 0
    %225 = vmatpush2.bf16.msra.mxu0 0
    %226 = vmatprep.subr.bf16.mxu0 0
    %227 = vmatpush2.bf16.msra.mxu0 0
    %228 = vmatprep.subr.bf16.mxu0 0
    %229 = vmatpush2.bf16.msra.mxu0 0
    %230 = vmatprep.subr.bf16.mxu0 0
    %231 = vmatpush2.bf16.msra.mxu0 0
    %232 = vmatprep.subr.bf16.mxu0 0
    %233 = vmatpush2.bf16.msra.mxu0 0
    %234 = vmatprep.subr.bf16.mxu0 0
    %235 = vmatpush2.bf16.msra.mxu0 0
    %236 = vmatprep.subr.bf16.mxu0 0
    %237 = vmatpush2.bf16.msra.mxu0 0
    %238 = vmatprep.subr.bf16.mxu0 0
    %239 = vmatpush2.bf16.msra.mxu0 0
    %240 = vmatprep.mubr.bf16.mxu0 0
    %241 = vmatmul.mubr.bf16.gmra.mxu0 %v138
    %v242 = vpop.f32.mrf.mxu0
    %v243 = vadd.f32 %v87, %v242
    %v244 = vpop.f32.mrf.mxu0
    %v245 = vadd.f32 %v91, %v244
    %v246 = vpop.f32.mrf.mxu0
    %v247 = vadd.f32 %v87, %v246
    %v248 = vpop.f32.mrf.mxu0
    %v249 = vadd.f32 %v91, %v248
    %250 = vdwg.mxu0
    %251 = vmatprep.subr.bf16.mxu0 0
    %252 = vmatpush1.bf16.msra.mxu0 0
    %253 = vmatprep.subr.bf16.mxu0 0
    %254 = vmatpush1.bf16.msra.mxu0 0
    %255 = vmatprep.subr.bf16.mxu0 0
    %256 = vmatpush1.bf16.msra.mxu0 0
    %257 = vmatprep.subr.bf16.mxu0 0
    %258 = vmatpush1.bf16.msra.mxu0 0
    %259 = vmatprep.subr.bf16.mxu0 0
    %260 = vmatpush1.bf16.msra.mxu0 0
    %261 = vmatprep.subr.bf16.mxu0 0
    %262 = vmatpush1.bf16.msra.mxu0 0
    %263 = vmatprep.subr.bf16.mxu0 0
    %264 = vmatpush1.bf16.msra.mxu0 0
    %265 = vmatprep.subr.bf16.mxu0 %v157
    %266 = vmatpush1.bf16.msra.mxu0 %v154
    %267 = vmatprep.subr.bf16.mxu0 0
    %268 = vmatpush2.bf16.msra.mxu0 0
    %269 = vmatprep.subr.bf16.mxu0 0
    %270 = vmatpush2.bf16.msra.mxu0 0
    %271 = vmatprep.subr.bf16.mxu0 0
    %272 = vmatpush2.bf16.msra.mxu0 0
    %273 = vmatprep.subr.bf16.mxu0 0
    %274 = vmatpush2.bf16.msra.mxu0 0
    %275 = vmatprep.subr.bf16.mxu0 0
    %276 = vmatpush2.bf16.msra.mxu0 0
    %277 = vmatprep.subr.bf16.mxu0 0
    %278 = vmatpush2.bf16.msra.mxu0 0
    %279 = vmatprep.subr.bf16.mxu0 0
    %280 = vmatpush2.bf16.msra.mxu0 0
    %281 = vmatprep.subr.bf16.mxu0 0
    %282 = vmatpush2.bf16.msra.mxu0 0
    %283 = vmatprep.mubr.bf16.mxu0 0
    %284 = vmatmul.mubr.bf16.gmra.mxu0 %v138
    %v285 = vpop.f32.mrf.mxu0
    %v286 = vadd.f32 %v95, %v285
    %v287 = vpop.f32.mrf.mxu0
    %v288 = vadd.f32 %v99, %v287
    %v289 = vpop.f32.mrf.mxu0
    %v290 = vadd.f32 %v95, %v289
    %v291 = vpop.f32.mrf.mxu0
    %v292 = vadd.f32 %v99, %v291
    %293 = vdwg.mxu0
    %294 = vmatprep.subr.bf16.mxu0 0
    %295 = vmatpush1.bf16.msra.mxu0 0
    %296 = vmatprep.subr.bf16.mxu0 0
    %297 = vmatpush1.bf16.msra.mxu0 0
    %298 = vmatprep.subr.bf16.mxu0 0
    %299 = vmatpush1.bf16.msra.mxu0 0
    %300 = vmatprep.subr.bf16.mxu0 0
    %301 = vmatpush1.bf16.msra.mxu0 0
    %302 = vmatprep.subr.bf16.mxu0 0
    %303 = vmatpush1.bf16.msra.mxu0 0
    %304 = vmatprep.subr.bf16.mxu0 0
    %305 = vmatpush1.bf16.msra.mxu0 0
    %306 = vmatprep.subr.bf16.mxu0 0
    %307 = vmatpush1.bf16.msra.mxu0 0
    %308 = vmatprep.subr.bf16.mxu0 %v163
    %309 = vmatpush1.bf16.msra.mxu0 %v160
    %310 = vmatprep.subr.bf16.mxu0 0
    %311 = vmatpush2.bf16.msra.mxu0 0
    %312 = vmatprep.subr.bf16.mxu0 0
    %313 = vmatpush2.bf16.msra.mxu0 0
    %314 = vmatprep.subr.bf16.mxu0 0
    %315 = vmatpush2.bf16.msra.mxu0 0
    %316 = vmatprep.subr.bf16.mxu0 0
    %317 = vmatpush2.bf16.msra.mxu0 0
    %318 = vmatprep.subr.bf16.mxu0 0
    %319 = vmatpush2.bf16.msra.mxu0 0
    %320 = vmatprep.subr.bf16.mxu0 0
    %321 = vmatpush2.bf16.msra.mxu0 0
    %322 = vmatprep.subr.bf16.mxu0 0
    %323 = vmatpush2.bf16.msra.mxu0 0
    %324 = vmatprep.subr.bf16.mxu0 0
    %325 = vmatpush2.bf16.msra.mxu0 0
    %326 = vmatprep.mubr.bf16.mxu0 0
    %327 = vmatmul.mubr.bf16.gmra.mxu0 %v138
    %v328 = vpop.f32.mrf.mxu0
    %v329 = vadd.f32 %v103, %v328
    %v330 = vpop.f32.mrf.mxu0
    %v331 = vadd.f32 %v107, %v330
    %v332 = vpop.f32.mrf.mxu0
    %v333 = vadd.f32 %v103, %v332
    %v334 = vpop.f32.mrf.mxu0
    %v335 = vadd.f32 %v107, %v334
    %336 = vdwg.mxu0
    %v337 = vmax.f32 %v200, 0.0
    %v338 = vmax.f32 %v202, 0.0
    %v339 = vmax.f32 %v243, 0.0
    %v340 = vmax.f32 %v245, 0.0
    %v341 = vmax.f32 %v286, 0.0
    %v342 = vmax.f32 %v288, 0.0
    %v343 = vmax.f32 %v329, 0.0
    %v344 = vmax.f32 %v331, 0.0
    %v345 = vmax.f32 %v204, 0.0
    %v346 = vmax.f32 %v206, 0.0
    %v347 = vmax.f32 %v247, 0.0
    %v348 = vmax.f32 %v249, 0.0
    %v349 = vmax.f32 %v290, 0.0
    %v350 = vmax.f32 %v292, 0.0
    %v351 = vmax.f32 %v333, 0.0
    %v352 = vmax.f32 %v335, 0.0
    %v353 = vpack.c.bf16 %v345, %v337
    %v354 = vpack.c.bf16 %v346, %v338
    %v355 = vpack.c.bf16 %v347, %v339
    %v356 = vpack.c.bf16 %v348, %v340
    %v357 = vpack.c.bf16 %v349, %v341
    %v358 = vpack.c.bf16 %v350, %v342
    %v359 = vpack.c.bf16 %v351, %v343
    %v360 = vpack.c.bf16 %v352, %v344
    %v361 = vld [vmem:[#allocation5] sm:$0xff]
    %v362 = vld [vmem:[#allocation5 + $0x8] sm:$0xff]
    %v363 = vld [vmem:[#allocation5 + $0x10] sm:$0xff]
    %v364 = vld [vmem:[#allocation5 + $0x18] sm:$0xff]
    %v365 = vld [vmem:[#allocation5 + $0x20] sm:$0xff]
    %v366 = vld [vmem:[#allocation5 + $0x28] sm:$0xff]
    %v367 = vld [vmem:[#allocation5 + $0x30] sm:$0xff]
    %v368 = vld [vmem:[#allocation5 + $0x38] sm:$0xff]
    %v369 = vld [vmem:[#allocation5 + $0x40] sm:$0xff]
    %v370 = vld [vmem:[#allocation5 + $0x48] sm:$0xff]
    %v371 = vld [vmem:[#allocation5 + $0x50] sm:$0xff]
    %v372 = vld [vmem:[#allocation5 + $0x58] sm:$0xff]
    %v373 = vld [vmem:[#allocation5 + $0x60] sm:$0xff]
    %v374 = vld [vmem:[#allocation5 + $0x68] sm:$0xff]
    %v375 = vld [vmem:[#allocation5 + $0x70] sm:$0xff]
    %v376 = vld [vmem:[#allocation5 + $0x78] sm:$0xff]
    %v377 = vld [vmem:[#allocation5 + $0x80] sm:$0xff]
    %v378 = vld [vmem:[#allocation5 + $0x88] sm:$0xff]
    %v379 = vld [vmem:[#allocation5 + $0x90] sm:$0xff]
    %v380 = vld [vmem:[#allocation5 + $0x98] sm:$0xff]
    %v381 = vld [vmem:[#allocation5 + $0xa0] sm:$0xff]
    %v382 = vld [vmem:[#allocation5 + $0xa8] sm:$0xff]
    %v383 = vld [vmem:[#allocation5 + $0xb0] sm:$0xff]
    %v384 = vld [vmem:[#allocation5 + $0xb8] sm:$0xff]
    %v385 = vld [vmem:[#allocation5 + $0xc0] sm:$0xff]
    %v386 = vld [vmem:[#allocation5 + $0xc8] sm:$0xff]
    %v387 = vld [vmem:[#allocation5 + $0xd0] sm:$0xff]
    %v388 = vld [vmem:[#allocation5 + $0xd8] sm:$0xff]
    %v389 = vld [vmem:[#allocation5 + $0xe0] sm:$0xff]
    %v390 = vld [vmem:[#allocation5 + $0xe8] sm:$0xff]
    %v391 = vld [vmem:[#allocation5 + $0xf0] sm:$0xff]
    %v392 = vld [vmem:[#allocation5 + $0xf8] sm:$0xff]
    %v393 = vld [vmem:[#allocation5 + $0x100] sm:$0xff]
    %v394 = vld [vmem:[#allocation5 + $0x108] sm:$0xff]
    %v395 = vld [vmem:[#allocation5 + $0x110] sm:$0xff]
    %v396 = vld [vmem:[#allocation5 + $0x118] sm:$0xff]
    %v397 = vld [vmem:[#allocation5 + $0x120] sm:$0xff]
    %v398 = vld [vmem:[#allocation5 + $0x128] sm:$0xff]
    %v399 = vld [vmem:[#allocation5 + $0x130] sm:$0xff]
    %v400 = vld [vmem:[#allocation5 + $0x138] sm:$0xff]
    %v401 = vld [vmem:[#allocation5 + $0x140] sm:$0xff]
    %v402 = vld [vmem:[#allocation5 + $0x148] sm:$0xff]
    %v403 = vld [vmem:[#allocation5 + $0x150] sm:$0xff]
    %v404 = vld [vmem:[#allocation5 + $0x158] sm:$0xff]
    %v405 = vld [vmem:[#allocation5 + $0x160] sm:$0xff]
    %v406 = vld [vmem:[#allocation5 + $0x168] sm:$0xff]
    %v407 = vld [vmem:[#allocation5 + $0x170] sm:$0xff]
    %v408 = vld [vmem:[#allocation5 + $0x178] sm:$0xff]
    %v409 = vld [vmem:[#allocation5 + $0x180] sm:$0xff]
    %v410 = vld [vmem:[#allocation5 + $0x188] sm:$0xff]
    %v411 = vld [vmem:[#allocation5 + $0x190] sm:$0xff]
    %v412 = vld [vmem:[#allocation5 + $0x198] sm:$0xff]
    %v413 = vld [vmem:[#allocation5 + $0x1a0] sm:$0xff]
    %v414 = vld [vmem:[#allocation5 + $0x1a8] sm:$0xff]
    %v415 = vld [vmem:[#allocation5 + $0x1b0] sm:$0xff]
    %v416 = vld [vmem:[#allocation5 + $0x1b8] sm:$0xff]
    %v417 = vld [vmem:[#allocation5 + $0x1c0] sm:$0xff]
    %v418 = vld [vmem:[#allocation5 + $0x1c8] sm:$0xff]
    %v419 = vld [vmem:[#allocation5 + $0x1d0] sm:$0xff]
    %v420 = vld [vmem:[#allocation5 + $0x1d8] sm:$0xff]
    %v421 = vld [vmem:[#allocation5 + $0x1e0] sm:$0xff]
    %v422 = vld [vmem:[#allocation5 + $0x1e8] sm:$0xff]
    %v423 = vld [vmem:[#allocation5 + $0x1f0] sm:$0xff]
    %v424 = vld [vmem:[#allocation5 + $0x1f8] sm:$0xff]
    %v425 = vld [vmem:[#allocation5 + $0x200] sm:$0xff]
    %v426 = vld [vmem:[#allocation5 + $0x208] sm:$0xff]
    %v427 = vld [vmem:[#allocation5 + $0x210] sm:$0xff]
    %v428 = vld [vmem:[#allocation5 + $0x218] sm:$0xff]
    %v429 = vld [vmem:[#allocation5 + $0x220] sm:$0xff]
    %v430 = vld [vmem:[#allocation5 + $0x228] sm:$0xff]
    %v431 = vld [vmem:[#allocation5 + $0x230] sm:$0xff]
    %v432 = vld [vmem:[#allocation5 + $0x238] sm:$0xff]
    %v433 = vld [vmem:[#allocation5 + $0x240] sm:$0xff]
    %v434 = vld [vmem:[#allocation5 + $0x248] sm:$0xff]
    %v435 = vld [vmem:[#allocation5 + $0x250] sm:$0xff]
    %v436 = vld [vmem:[#allocation5 + $0x258] sm:$0xff]
    %v437 = vld [vmem:[#allocation5 + $0x260] sm:$0xff]
    %v438 = vld [vmem:[#allocation5 + $0x268] sm:$0xff]
    %v439 = vld [vmem:[#allocation5 + $0x270] sm:$0xff]
    %v440 = vld [vmem:[#allocation5 + $0x278] sm:$0xff]
    %v441 = vld [vmem:[#allocation5 + $0x280] sm:$0xff]
    %v442 = vld [vmem:[#allocation5 + $0x288] sm:$0xff]
    %v443 = vld [vmem:[#allocation5 + $0x290] sm:$0xff]
    %v444 = vld [vmem:[#allocation5 + $0x298] sm:$0xff]
    %v445 = vld [vmem:[#allocation5 + $0x2a0] sm:$0xff]
    %v446 = vld [vmem:[#allocation5 + $0x2a8] sm:$0xff]
    %v447 = vld [vmem:[#allocation5 + $0x2b0] sm:$0xff]
    %v448 = vld [vmem:[#allocation5 + $0x2b8] sm:$0xff]
    %v449 = vld [vmem:[#allocation5 + $0x2c0] sm:$0xff]
    %v450 = vld [vmem:[#allocation5 + $0x2c8] sm:$0xff]
    %v451 = vld [vmem:[#allocation5 + $0x2d0] sm:$0xff]
    %v452 = vld [vmem:[#allocation5 + $0x2d8] sm:$0xff]
    %v453 = vld [vmem:[#allocation5 + $0x2e0] sm:$0xff]
    %v454 = vld [vmem:[#allocation5 + $0x2e8] sm:$0xff]
    %v455 = vld [vmem:[#allocation5 + $0x2f0] sm:$0xff]
    %v456 = vld [vmem:[#allocation5 + $0x2f8] sm:$0xff]
    %v457 = vld [vmem:[#allocation5 + $0x300] sm:$0xff]
    %v458 = vld [vmem:[#allocation5 + $0x308] sm:$0xff]
    %v459 = vld [vmem:[#allocation5 + $0x310] sm:$0xff]
    %v460 = vld [vmem:[#allocation5 + $0x318] sm:$0xff]
    %v461 = vld [vmem:[#allocation5 + $0x320] sm:$0xff]
    %v462 = vld [vmem:[#allocation5 + $0x328] sm:$0xff]
    %v463 = vld [vmem:[#allocation5 + $0x330] sm:$0xff]
    %v464 = vld [vmem:[#allocation5 + $0x338] sm:$0xff]
    %v465 = vld [vmem:[#allocation5 + $0x340] sm:$0xff]
    %v466 = vld [vmem:[#allocation5 + $0x348] sm:$0xff]
    %v467 = vld [vmem:[#allocation5 + $0x350] sm:$0xff]
    %v468 = vld [vmem:[#allocation5 + $0x358] sm:$0xff]
    %v469 = vld [vmem:[#allocation5 + $0x360] sm:$0xff]
    %v470 = vld [vmem:[#allocation5 + $0x368] sm:$0xff]
    %v471 = vld [vmem:[#allocation5 + $0x370] sm:$0xff]
    %v472 = vld [vmem:[#allocation5 + $0x378] sm:$0xff]
    %v473 = vld [vmem:[#allocation5 + $0x380] sm:$0xff]
    %v474 = vld [vmem:[#allocation5 + $0x388] sm:$0xff]
    %v475 = vld [vmem:[#allocation5 + $0x390] sm:$0xff]
    %v476 = vld [vmem:[#allocation5 + $0x398] sm:$0xff]
    %v477 = vld [vmem:[#allocation5 + $0x3a0] sm:$0xff]
    %v478 = vld [vmem:[#allocation5 + $0x3a8] sm:$0xff]
    %v479 = vld [vmem:[#allocation5 + $0x3b0] sm:$0xff]
    %v480 = vld [vmem:[#allocation5 + $0x3b8] sm:$0xff]
    %v481 = vld [vmem:[#allocation5 + $0x3c0] sm:$0xff]
    %v482 = vld [vmem:[#allocation5 + $0x3c8] sm:$0xff]
    %v483 = vld [vmem:[#allocation5 + $0x3d0] sm:$0xff]
    %v484 = vld [vmem:[#allocation5 + $0x3d8] sm:$0xff]
    %v485 = vld [vmem:[#allocation5 + $0x3e0] sm:$0xff]
    %v486 = vld [vmem:[#allocation5 + $0x3e8] sm:$0xff]
    %v487 = vld [vmem:[#allocation5 + $0x3f0] sm:$0xff]
    %v488 = vld [vmem:[#allocation5 + $0x3f8] sm:$0xff]
    %v489 = vld [vmem:[#allocation5 + $0x400] sm:$0xff]
    %v490 = vld [vmem:[#allocation5 + $0x408] sm:$0xff]
    %v491 = vld [vmem:[#allocation5 + $0x410] sm:$0xff]
    %v492 = vld [vmem:[#allocation5 + $0x418] sm:$0xff]
    %v493 = vld [vmem:[#allocation5 + $0x420] sm:$0xff]
    %v494 = vld [vmem:[#allocation5 + $0x428] sm:$0xff]
    %v495 = vld [vmem:[#allocation5 + $0x430] sm:$0xff]
    %v496 = vld [vmem:[#allocation5 + $0x438] sm:$0xff]
    %v497 = vld [vmem:[#allocation5 + $0x440] sm:$0xff]
    %v498 = vld [vmem:[#allocation5 + $0x448] sm:$0xff]
    %v499 = vld [vmem:[#allocation5 + $0x450] sm:$0xff]
    %v500 = vld [vmem:[#allocation5 + $0x458] sm:$0xff]
    %v501 = vld [vmem:[#allocation5 + $0x460] sm:$0xff]
    %v502 = vld [vmem:[#allocation5 + $0x468] sm:$0xff]
    %v503 = vld [vmem:[#allocation5 + $0x470] sm:$0xff]
    %v504 = vld [vmem:[#allocation5 + $0x478] sm:$0xff]
    %v505 = vld [vmem:[#allocation5 + $0x480] sm:$0xff]
    %v506 = vld [vmem:[#allocation5 + $0x488] sm:$0xff]
    %v507 = vld [vmem:[#allocation5 + $0x490] sm:$0xff]
    %v508 = vld [vmem:[#allocation5 + $0x498] sm:$0xff]
    %v509 = vld [vmem:[#allocation5 + $0x4a0] sm:$0xff]
    %v510 = vld [vmem:[#allocation5 + $0x4a8] sm:$0xff]
    %v511 = vld [vmem:[#allocation5 + $0x4b0] sm:$0xff]
    %v512 = vld [vmem:[#allocation5 + $0x4b8] sm:$0xff]
    %v513 = vld [vmem:[#allocation5 + $0x4c0] sm:$0xff]
    %v514 = vld [vmem:[#allocation5 + $0x4c8] sm:$0xff]
    %v515 = vld [vmem:[#allocation5 + $0x4d0] sm:$0xff]
    %v516 = vld [vmem:[#allocation5 + $0x4d8] sm:$0xff]
    %v517 = vld [vmem:[#allocation5 + $0x4e0] sm:$0xff]
    %v518 = vld [vmem:[#allocation5 + $0x4e8] sm:$0xff]
    %v519 = vld [vmem:[#allocation5 + $0x4f0] sm:$0xff]
    %v520 = vld [vmem:[#allocation5 + $0x4f8] sm:$0xff]
    %v521 = vld [vmem:[#allocation5 + $0x500] sm:$0xff]
    %v522 = vld [vmem:[#allocation5 + $0x508] sm:$0xff]
    %v523 = vld [vmem:[#allocation5 + $0x510] sm:$0xff]
    %v524 = vld [vmem:[#allocation5 + $0x518] sm:$0xff]
    %v525 = vld [vmem:[#allocation5 + $0x520] sm:$0xff]
    %v526 = vld [vmem:[#allocation5 + $0x528] sm:$0xff]
    %v527 = vld [vmem:[#allocation5 + $0x530] sm:$0xff]
    %v528 = vld [vmem:[#allocation5 + $0x538] sm:$0xff]
    %v529 = vld [vmem:[#allocation5 + $0x540] sm:$0xff]
    %v530 = vld [vmem:[#allocation5 + $0x548] sm:$0xff]
    %v531 = vld [vmem:[#allocation5 + $0x550] sm:$0xff]
    %v532 = vld [vmem:[#allocation5 + $0x558] sm:$0xff]
    %v533 = vld [vmem:[#allocation5 + $0x560] sm:$0xff]
    %v534 = vld [vmem:[#allocation5 + $0x568] sm:$0xff]
    %v535 = vld [vmem:[#allocation5 + $0x570] sm:$0xff]
    %v536 = vld [vmem:[#allocation5 + $0x578] sm:$0xff]
    %v537 = vld [vmem:[#allocation5 + $0x580] sm:$0xff]
    %v538 = vld [vmem:[#allocation5 + $0x588] sm:$0xff]
    %v539 = vld [vmem:[#allocation5 + $0x590] sm:$0xff]
    %v540 = vld [vmem:[#allocation5 + $0x598] sm:$0xff]
    %v541 = vld [vmem:[#allocation5 + $0x5a0] sm:$0xff]
    %v542 = vld [vmem:[#allocation5 + $0x5a8] sm:$0xff]
    %v543 = vld [vmem:[#allocation5 + $0x5b0] sm:$0xff]
    %v544 = vld [vmem:[#allocation5 + $0x5b8] sm:$0xff]
    %v545 = vld [vmem:[#allocation5 + $0x5c0] sm:$0xff]
    %v546 = vld [vmem:[#allocation5 + $0x5c8] sm:$0xff]
    %v547 = vld [vmem:[#allocation5 + $0x5d0] sm:$0xff]
    %v548 = vld [vmem:[#allocation5 + $0x5d8] sm:$0xff]
    %v549 = vld [vmem:[#allocation5 + $0x5e0] sm:$0xff]
    %v550 = vld [vmem:[#allocation5 + $0x5e8] sm:$0xff]
    %v551 = vld [vmem:[#allocation5 + $0x5f0] sm:$0xff]
    %v552 = vld [vmem:[#allocation5 + $0x5f8] sm:$0xff]
    %v553 = vld [vmem:[#allocation5 + $0x600] sm:$0xff]
    %v554 = vld [vmem:[#allocation5 + $0x608] sm:$0xff]
    %v555 = vld [vmem:[#allocation5 + $0x610] sm:$0xff]
    %v556 = vld [vmem:[#allocation5 + $0x618] sm:$0xff]
    %v557 = vld [vmem:[#allocation5 + $0x620] sm:$0xff]
    %v558 = vld [vmem:[#allocation5 + $0x628] sm:$0xff]
    %v559 = vld [vmem:[#allocation5 + $0x630] sm:$0xff]
    %v560 = vld [vmem:[#allocation5 + $0x638] sm:$0xff]
    %v561 = vld [vmem:[#allocation5 + $0x640] sm:$0xff]
    %v562 = vld [vmem:[#allocation5 + $0x648] sm:$0xff]
    %v563 = vld [vmem:[#allocation5 + $0x650] sm:$0xff]
    %v564 = vld [vmem:[#allocation5 + $0x658] sm:$0xff]
    %v565 = vld [vmem:[#allocation5 + $0x660] sm:$0xff]
    %v566 = vld [vmem:[#allocation5 + $0x668] sm:$0xff]
    %v567 = vld [vmem:[#allocation5 + $0x670] sm:$0xff]
    %v568 = vld [vmem:[#allocation5 + $0x678] sm:$0xff]
    %v569 = vld [vmem:[#allocation5 + $0x680] sm:$0xff]
    %v570 = vld [vmem:[#allocation5 + $0x688] sm:$0xff]
    %v571 = vld [vmem:[#allocation5 + $0x690] sm:$0xff]
    %v572 = vld [vmem:[#allocation5 + $0x698] sm:$0xff]
    %v573 = vld [vmem:[#allocation5 + $0x6a0] sm:$0xff]
    %v574 = vld [vmem:[#allocation5 + $0x6a8] sm:$0xff]
    %v575 = vld [vmem:[#allocation5 + $0x6b0] sm:$0xff]
    %v576 = vld [vmem:[#allocation5 + $0x6b8] sm:$0xff]
    %v577 = vld [vmem:[#allocation5 + $0x6c0] sm:$0xff]
    %v578 = vld [vmem:[#allocation5 + $0x6c8] sm:$0xff]
    %v579 = vld [vmem:[#allocation5 + $0x6d0] sm:$0xff]
    %v580 = vld [vmem:[#allocation5 + $0x6d8] sm:$0xff]
    %v581 = vld [vmem:[#allocation5 + $0x6e0] sm:$0xff]
    %v582 = vld [vmem:[#allocation5 + $0x6e8] sm:$0xff]
    %v583 = vld [vmem:[#allocation5 + $0x6f0] sm:$0xff]
    %v584 = vld [vmem:[#allocation5 + $0x6f8] sm:$0xff]
    %v585 = vld [vmem:[#allocation5 + $0x700] sm:$0xff]
    %v586 = vld [vmem:[#allocation5 + $0x708] sm:$0xff]
    %v587 = vld [vmem:[#allocation5 + $0x710] sm:$0xff]
    %v588 = vld [vmem:[#allocation5 + $0x718] sm:$0xff]
    %v589 = vld [vmem:[#allocation5 + $0x720] sm:$0xff]
    %v590 = vld [vmem:[#allocation5 + $0x728] sm:$0xff]
    %v591 = vld [vmem:[#allocation5 + $0x730] sm:$0xff]
    %v592 = vld [vmem:[#allocation5 + $0x738] sm:$0xff]
    %v593 = vld [vmem:[#allocation5 + $0x740] sm:$0xff]
    %v594 = vld [vmem:[#allocation5 + $0x748] sm:$0xff]
    %v595 = vld [vmem:[#allocation5 + $0x750] sm:$0xff]
    %v596 = vld [vmem:[#allocation5 + $0x758] sm:$0xff]
    %v597 = vld [vmem:[#allocation5 + $0x760] sm:$0xff]
    %v598 = vld [vmem:[#allocation5 + $0x768] sm:$0xff]
    %v599 = vld [vmem:[#allocation5 + $0x770] sm:$0xff]
    %v600 = vld [vmem:[#allocation5 + $0x778] sm:$0xff]
    %v601 = vld [vmem:[#allocation5 + $0x780] sm:$0xff]
    %v602 = vld [vmem:[#allocation5 + $0x788] sm:$0xff]
    %v603 = vld [vmem:[#allocation5 + $0x790] sm:$0xff]
    %v604 = vld [vmem:[#allocation5 + $0x798] sm:$0xff]
    %v605 = vld [vmem:[#allocation5 + $0x7a0] sm:$0xff]
    %v606 = vld [vmem:[#allocation5 + $0x7a8] sm:$0xff]
    %v607 = vld [vmem:[#allocation5 + $0x7b0] sm:$0xff]
    %v608 = vld [vmem:[#allocation5 + $0x7b8] sm:$0xff]
    %v609 = vld [vmem:[#allocation5 + $0x7c0] sm:$0xff]
    %v610 = vld [vmem:[#allocation5 + $0x7c8] sm:$0xff]
    %v611 = vld [vmem:[#allocation5 + $0x7d0] sm:$0xff]
    %v612 = vld [vmem:[#allocation5 + $0x7d8] sm:$0xff]
    %v613 = vld [vmem:[#allocation5 + $0x7e0] sm:$0xff]
    %v614 = vld [vmem:[#allocation5 + $0x7e8] sm:$0xff]
    %v615 = vld [vmem:[#allocation5 + $0x7f0] sm:$0xff]
    %v616 = vld [vmem:[#allocation5 + $0x7f8] sm:$0xff]
    %v617 = vld [vmem:[%s4] sm:$0xf]
    %v619 = vlaneseq
    %v620 = vshrl.u32 %v619, 7
    %v621 = vsub.s32 0, %v620
    %v622 = vrot.slane %v617, %v621
    %v623 = vlaneseq
    %v624 = vshrl.u32 %v623, 7
    %v625 = vsub.s32 1, %v624
    %v626 = vrot.slane %v617, %v625
    %v627 = vlaneseq
    %v628 = vshrl.u32 %v627, 7
    %v629 = vsub.s32 2, %v628
    %v630 = vrot.slane %v617, %v629
    %v631 = vlaneseq
    %v632 = vshrl.u32 %v631, 7
    %v633 = vsub.s32 3, %v632
    %v634 = vrot.slane %v617, %v633
    %v895 = vunpack.c.l.b16 %v361
    %v896 = vunpack.c.h.b16 %v361
    %v897 = vunpack.c.l.b16 %v362
    %v898 = vunpack.c.h.b16 %v362
    %v899 = vunpack.c.l.b16 %v363
    %v900 = vunpack.c.h.b16 %v363
    %v901 = vunpack.c.l.b16 %v364
    %v902 = vunpack.c.h.b16 %v364
    %v903 = vunpack.c.l.b16 %v365
    %v904 = vunpack.c.h.b16 %v365
    %v905 = vunpack.c.l.b16 %v366
    %v906 = vunpack.c.h.b16 %v366
    %v907 = vunpack.c.l.b16 %v367
    %v908 = vunpack.c.h.b16 %v367
    %v909 = vunpack.c.l.b16 %v368
    %v910 = vunpack.c.h.b16 %v368
    %v911 = vunpack.c.l.b16 %v369
    %v912 = vunpack.c.h.b16 %v369
    %v913 = vunpack.c.l.b16 %v370
    %v914 = vunpack.c.h.b16 %v370
    %v915 = vunpack.c.l.b16 %v371
    %v916 = vunpack.c.h.b16 %v371
    %v917 = vunpack.c.l.b16 %v372
    %v918 = vunpack.c.h.b16 %v372
    %v919 = vunpack.c.l.b16 %v373
    %v920 = vunpack.c.h.b16 %v373
    %v921 = vunpack.c.l.b16 %v374
    %v922 = vunpack.c.h.b16 %v374
    %v923 = vunpack.c.l.b16 %v375
    %v924 = vunpack.c.h.b16 %v375
    %v925 = vunpack.c.l.b16 %v376
    %v926 = vunpack.c.h.b16 %v376
    %v927 = vunpack.c.l.b16 %v377
    %v928 = vunpack.c.h.b16 %v377
    %v929 = vunpack.c.l.b16 %v378
    %v930 = vunpack.c.h.b16 %v378
    %v931 = vunpack.c.l.b16 %v379
    %v932 = vunpack.c.h.b16 %v379
    %v933 = vunpack.c.l.b16 %v380
    %v934 = vunpack.c.h.b16 %v380
    %v935 = vunpack.c.l.b16 %v381
    %v936 = vunpack.c.h.b16 %v381
    %v937 = vunpack.c.l.b16 %v382
    %v938 = vunpack.c.h.b16 %v382
    %v939 = vunpack.c.l.b16 %v383
    %v940 = vunpack.c.h.b16 %v383
    %v941 = vunpack.c.l.b16 %v384
    %v942 = vunpack.c.h.b16 %v384
    %v943 = vunpack.c.l.b16 %v385
    %v944 = vunpack.c.h.b16 %v385
    %v945 = vunpack.c.l.b16 %v386
    %v946 = vunpack.c.h.b16 %v386
    %v947 = vunpack.c.l.b16 %v387
    %v948 = vunpack.c.h.b16 %v387
    %v949 = vunpack.c.l.b16 %v388
    %v950 = vunpack.c.h.b16 %v388
    %v951 = vunpack.c.l.b16 %v389
    %v952 = vunpack.c.h.b16 %v389
    %v953 = vunpack.c.l.b16 %v390
    %v954 = vunpack.c.h.b16 %v390
    %v955 = vunpack.c.l.b16 %v391
    %v956 = vunpack.c.h.b16 %v391
    %v957 = vunpack.c.l.b16 %v392
    %v958 = vunpack.c.h.b16 %v392
    %v959 = vunpack.c.l.b16 %v393
    %v960 = vunpack.c.h.b16 %v393
    %v961 = vunpack.c.l.b16 %v394
    %v962 = vunpack.c.h.b16 %v394
    %v963 = vunpack.c.l.b16 %v395
    %v964 = vunpack.c.h.b16 %v395
    %v965 = vunpack.c.l.b16 %v396
    %v966 = vunpack.c.h.b16 %v396
    %v967 = vunpack.c.l.b16 %v397
    %v968 = vunpack.c.h.b16 %v397
    %v969 = vunpack.c.l.b16 %v398
    %v970 = vunpack.c.h.b16 %v398
    %v971 = vunpack.c.l.b16 %v399
    %v972 = vunpack.c.h.b16 %v399
    %v973 = vunpack.c.l.b16 %v400
    %v974 = vunpack.c.h.b16 %v400
    %v975 = vunpack.c.l.b16 %v401
    %v976 = vunpack.c.h.b16 %v401
    %v977 = vunpack.c.l.b16 %v402
    %v978 = vunpack.c.h.b16 %v402
    %v979 = vunpack.c.l.b16 %v403
    %v980 = vunpack.c.h.b16 %v403
    %v981 = vunpack.c.l.b16 %v404
    %v982 = vunpack.c.h.b16 %v404
    %v983 = vunpack.c.l.b16 %v405
    %v984 = vunpack.c.h.b16 %v405
    %v985 = vunpack.c.l.b16 %v406
    %v986 = vunpack.c.h.b16 %v406
    %v987 = vunpack.c.l.b16 %v407
    %v988 = vunpack.c.h.b16 %v407
    %v989 = vunpack.c.l.b16 %v408
    %v990 = vunpack.c.h.b16 %v408
    %v991 = vunpack.c.l.b16 %v409
    %v992 = vunpack.c.h.b16 %v409
    %v993 = vunpack.c.l.b16 %v410
    %v994 = vunpack.c.h.b16 %v410
    %v995 = vunpack.c.l.b16 %v411
    %v996 = vunpack.c.h.b16 %v411
    %v997 = vunpack.c.l.b16 %v412
    %v998 = vunpack.c.h.b16 %v412
    %v999 = vunpack.c.l.b16 %v413
    %v1000 = vunpack.c.h.b16 %v413
    %v1001 = vunpack.c.l.b16 %v414
    %v1002 = vunpack.c.h.b16 %v414
    %v1003 = vunpack.c.l.b16 %v415
    %v1004 = vunpack.c.h.b16 %v415
    %v1005 = vunpack.c.l.b16 %v416
    %v1006 = vunpack.c.h.b16 %v416
    %v1007 = vunpack.c.l.b16 %v417
    %v1008 = vunpack.c.h.b16 %v417
    %v1009 = vunpack.c.l.b16 %v418
    %v1010 = vunpack.c.h.b16 %v418
    %v1011 = vunpack.c.l.b16 %v419
    %v1012 = vunpack.c.h.b16 %v419
    %v1013 = vunpack.c.l.b16 %v420
    %v1014 = vunpack.c.h.b16 %v420
    %v1015 = vunpack.c.l.b16 %v421
    %v1016 = vunpack.c.h.b16 %v421
    %v1017 = vunpack.c.l.b16 %v422
    %v1018 = vunpack.c.h.b16 %v422
    %v1019 = vunpack.c.l.b16 %v423
    %v1020 = vunpack.c.h.b16 %v423
    %v1021 = vunpack.c.l.b16 %v424
    %v1022 = vunpack.c.h.b16 %v424
    %v1023 = vunpack.c.l.b16 %v425
    %v1024 = vunpack.c.h.b16 %v425
    %v1025 = vunpack.c.l.b16 %v426
    %v1026 = vunpack.c.h.b16 %v426
    %v1027 = vunpack.c.l.b16 %v427
    %v1028 = vunpack.c.h.b16 %v427
    %v1029 = vunpack.c.l.b16 %v428
    %v1030 = vunpack.c.h.b16 %v428
    %v1031 = vunpack.c.l.b16 %v429
    %v1032 = vunpack.c.h.b16 %v429
    %v1033 = vunpack.c.l.b16 %v430
    %v1034 = vunpack.c.h.b16 %v430
    %v1035 = vunpack.c.l.b16 %v431
    %v1036 = vunpack.c.h.b16 %v431
    %v1037 = vunpack.c.l.b16 %v432
    %v1038 = vunpack.c.h.b16 %v432
    %v1039 = vunpack.c.l.b16 %v433
    %v1040 = vunpack.c.h.b16 %v433
    %v1041 = vunpack.c.l.b16 %v434
    %v1042 = vunpack.c.h.b16 %v434
    %v1043 = vunpack.c.l.b16 %v435
    %v1044 = vunpack.c.h.b16 %v435
    %v1045 = vunpack.c.l.b16 %v436
    %v1046 = vunpack.c.h.b16 %v436
    %v1047 = vunpack.c.l.b16 %v437
    %v1048 = vunpack.c.h.b16 %v437
    %v1049 = vunpack.c.l.b16 %v438
    %v1050 = vunpack.c.h.b16 %v438
    %v1051 = vunpack.c.l.b16 %v439
    %v1052 = vunpack.c.h.b16 %v439
    %v1053 = vunpack.c.l.b16 %v440
    %v1054 = vunpack.c.h.b16 %v440
    %v1055 = vunpack.c.l.b16 %v441
    %v1056 = vunpack.c.h.b16 %v441
    %v1057 = vunpack.c.l.b16 %v442
    %v1058 = vunpack.c.h.b16 %v442
    %v1059 = vunpack.c.l.b16 %v443
    %v1060 = vunpack.c.h.b16 %v443
    %v1061 = vunpack.c.l.b16 %v444
    %v1062 = vunpack.c.h.b16 %v444
    %v1063 = vunpack.c.l.b16 %v445
    %v1064 = vunpack.c.h.b16 %v445
    %v1065 = vunpack.c.l.b16 %v446
    %v1066 = vunpack.c.h.b16 %v446
    %v1067 = vunpack.c.l.b16 %v447
    %v1068 = vunpack.c.h.b16 %v447
    %v1069 = vunpack.c.l.b16 %v448
    %v1070 = vunpack.c.h.b16 %v448
    %v1071 = vunpack.c.l.b16 %v449
    %v1072 = vunpack.c.h.b16 %v449
    %v1073 = vunpack.c.l.b16 %v450
    %v1074 = vunpack.c.h.b16 %v450
    %v1075 = vunpack.c.l.b16 %v451
    %v1076 = vunpack.c.h.b16 %v451
    %v1077 = vunpack.c.l.b16 %v452
    %v1078 = vunpack.c.h.b16 %v452
    %v1079 = vunpack.c.l.b16 %v453
    %v1080 = vunpack.c.h.b16 %v453
    %v1081 = vunpack.c.l.b16 %v454
    %v1082 = vunpack.c.h.b16 %v454
    %v1083 = vunpack.c.l.b16 %v455
    %v1084 = vunpack.c.h.b16 %v455
    %v1085 = vunpack.c.l.b16 %v456
    %v1086 = vunpack.c.h.b16 %v456
    %v1087 = vunpack.c.l.b16 %v457
    %v1088 = vunpack.c.h.b16 %v457
    %v1089 = vunpack.c.l.b16 %v458
    %v1090 = vunpack.c.h.b16 %v458
    %v1091 = vunpack.c.l.b16 %v459
    %v1092 = vunpack.c.h.b16 %v459
    %v1093 = vunpack.c.l.b16 %v460
    %v1094 = vunpack.c.h.b16 %v460
    %v1095 = vunpack.c.l.b16 %v461
    %v1096 = vunpack.c.h.b16 %v461
    %v1097 = vunpack.c.l.b16 %v462
    %v1098 = vunpack.c.h.b16 %v462
    %v1099 = vunpack.c.l.b16 %v463
    %v1100 = vunpack.c.h.b16 %v463
    %v1101 = vunpack.c.l.b16 %v464
    %v1102 = vunpack.c.h.b16 %v464
    %v1103 = vunpack.c.l.b16 %v465
    %v1104 = vunpack.c.h.b16 %v465
    %v1105 = vunpack.c.l.b16 %v466
    %v1106 = vunpack.c.h.b16 %v466
    %v1107 = vunpack.c.l.b16 %v467
    %v1108 = vunpack.c.h.b16 %v467
    %v1109 = vunpack.c.l.b16 %v468
    %v1110 = vunpack.c.h.b16 %v468
    %v1111 = vunpack.c.l.b16 %v469
    %v1112 = vunpack.c.h.b16 %v469
    %v1113 = vunpack.c.l.b16 %v470
    %v1114 = vunpack.c.h.b16 %v470
    %v1115 = vunpack.c.l.b16 %v471
    %v1116 = vunpack.c.h.b16 %v471
    %v1117 = vunpack.c.l.b16 %v472
    %v1118 = vunpack.c.h.b16 %v472
    %v1119 = vunpack.c.l.b16 %v473
    %v1120 = vunpack.c.h.b16 %v473
    %v1121 = vunpack.c.l.b16 %v474
    %v1122 = vunpack.c.h.b16 %v474
    %v1123 = vunpack.c.l.b16 %v475
    %v1124 = vunpack.c.h.b16 %v475
    %v1125 = vunpack.c.l.b16 %v476
    %v1126 = vunpack.c.h.b16 %v476
    %v1127 = vunpack.c.l.b16 %v477
    %v1128 = vunpack.c.h.b16 %v477
    %v1129 = vunpack.c.l.b16 %v478
    %v1130 = vunpack.c.h.b16 %v478
    %v1131 = vunpack.c.l.b16 %v479
    %v1132 = vunpack.c.h.b16 %v479
    %v1133 = vunpack.c.l.b16 %v480
    %v1134 = vunpack.c.h.b16 %v480
    %v1135 = vunpack.c.l.b16 %v481
    %v1136 = vunpack.c.h.b16 %v481
    %v1137 = vunpack.c.l.b16 %v482
    %v1138 = vunpack.c.h.b16 %v482
    %v1139 = vunpack.c.l.b16 %v483
    %v1140 = vunpack.c.h.b16 %v483
    %v1141 = vunpack.c.l.b16 %v484
    %v1142 = vunpack.c.h.b16 %v484
    %v1143 = vunpack.c.l.b16 %v485
    %v1144 = vunpack.c.h.b16 %v485
    %v1145 = vunpack.c.l.b16 %v486
    %v1146 = vunpack.c.h.b16 %v486
    %v1147 = vunpack.c.l.b16 %v487
    %v1148 = vunpack.c.h.b16 %v487
    %v1149 = vunpack.c.l.b16 %v488
    %v1150 = vunpack.c.h.b16 %v488
    %v1151 = vunpack.c.l.b16 %v489
    %v1152 = vunpack.c.h.b16 %v489
    %v1153 = vunpack.c.l.b16 %v490
    %v1154 = vunpack.c.h.b16 %v490
    %v1155 = vunpack.c.l.b16 %v491
    %v1156 = vunpack.c.h.b16 %v491
    %v1157 = vunpack.c.l.b16 %v492
    %v1158 = vunpack.c.h.b16 %v492
    %v1159 = vunpack.c.l.b16 %v493
    %v1160 = vunpack.c.h.b16 %v493
    %v1161 = vunpack.c.l.b16 %v494
    %v1162 = vunpack.c.h.b16 %v494
    %v1163 = vunpack.c.l.b16 %v495
    %v1164 = vunpack.c.h.b16 %v495
    %v1165 = vunpack.c.l.b16 %v496
    %v1166 = vunpack.c.h.b16 %v496
    %v1167 = vunpack.c.l.b16 %v497
    %v1168 = vunpack.c.h.b16 %v497
    %v1169 = vunpack.c.l.b16 %v498
    %v1170 = vunpack.c.h.b16 %v498
    %v1171 = vunpack.c.l.b16 %v499
    %v1172 = vunpack.c.h.b16 %v499
    %v1173 = vunpack.c.l.b16 %v500
    %v1174 = vunpack.c.h.b16 %v500
    %v1175 = vunpack.c.l.b16 %v501
    %v1176 = vunpack.c.h.b16 %v501
    %v1177 = vunpack.c.l.b16 %v502
    %v1178 = vunpack.c.h.b16 %v502
    %v1179 = vunpack.c.l.b16 %v503
    %v1180 = vunpack.c.h.b16 %v503
    %v1181 = vunpack.c.l.b16 %v504
    %v1182 = vunpack.c.h.b16 %v504
    %v1183 = vunpack.c.l.b16 %v505
    %v1184 = vunpack.c.h.b16 %v505
    %v1185 = vunpack.c.l.b16 %v506
    %v1186 = vunpack.c.h.b16 %v506
    %v1187 = vunpack.c.l.b16 %v507
    %v1188 = vunpack.c.h.b16 %v507
    %v1189 = vunpack.c.l.b16 %v508
    %v1190 = vunpack.c.h.b16 %v508
    %v1191 = vunpack.c.l.b16 %v509
    %v1192 = vunpack.c.h.b16 %v509
    %v1193 = vunpack.c.l.b16 %v510
    %v1194 = vunpack.c.h.b16 %v510
    %v1195 = vunpack.c.l.b16 %v511
    %v1196 = vunpack.c.h.b16 %v511
    %v1197 = vunpack.c.l.b16 %v512
    %v1198 = vunpack.c.h.b16 %v512
    %v1199 = vunpack.c.l.b16 %v513
    %v1200 = vunpack.c.h.b16 %v513
    %v1201 = vunpack.c.l.b16 %v514
    %v1202 = vunpack.c.h.b16 %v514
    %v1203 = vunpack.c.l.b16 %v515
    %v1204 = vunpack.c.h.b16 %v515
    %v1205 = vunpack.c.l.b16 %v516
    %v1206 = vunpack.c.h.b16 %v516
    %v1207 = vunpack.c.l.b16 %v517
    %v1208 = vunpack.c.h.b16 %v517
    %v1209 = vunpack.c.l.b16 %v518
    %v1210 = vunpack.c.h.b16 %v518
    %v1211 = vunpack.c.l.b16 %v519
    %v1212 = vunpack.c.h.b16 %v519
    %v1213 = vunpack.c.l.b16 %v520
    %v1214 = vunpack.c.h.b16 %v520
    %v1215 = vunpack.c.l.b16 %v521
    %v1216 = vunpack.c.h.b16 %v521
    %v1217 = vunpack.c.l.b16 %v522
    %v1218 = vunpack.c.h.b16 %v522
    %v1219 = vunpack.c.l.b16 %v523
    %v1220 = vunpack.c.h.b16 %v523
    %v1221 = vunpack.c.l.b16 %v524
    %v1222 = vunpack.c.h.b16 %v524
    %v1223 = vunpack.c.l.b16 %v525
    %v1224 = vunpack.c.h.b16 %v525
    %v1225 = vunpack.c.l.b16 %v526
    %v1226 = vunpack.c.h.b16 %v526
    %v1227 = vunpack.c.l.b16 %v527
    %v1228 = vunpack.c.h.b16 %v527
    %v1229 = vunpack.c.l.b16 %v528
    %v1230 = vunpack.c.h.b16 %v528
    %v1231 = vunpack.c.l.b16 %v529
    %v1232 = vunpack.c.h.b16 %v529
    %v1233 = vunpack.c.l.b16 %v530
    %v1234 = vunpack.c.h.b16 %v530
    %v1235 = vunpack.c.l.b16 %v531
    %v1236 = vunpack.c.h.b16 %v531
    %v1237 = vunpack.c.l.b16 %v532
    %v1238 = vunpack.c.h.b16 %v532
    %v1239 = vunpack.c.l.b16 %v533
    %v1240 = vunpack.c.h.b16 %v533
    %v1241 = vunpack.c.l.b16 %v534
    %v1242 = vunpack.c.h.b16 %v534
    %v1243 = vunpack.c.l.b16 %v535
    %v1244 = vunpack.c.h.b16 %v535
    %v1245 = vunpack.c.l.b16 %v536
    %v1246 = vunpack.c.h.b16 %v536
    %v1247 = vunpack.c.l.b16 %v537
    %v1248 = vunpack.c.h.b16 %v537
    %v1249 = vunpack.c.l.b16 %v538
    %v1250 = vunpack.c.h.b16 %v538
    %v1251 = vunpack.c.l.b16 %v539
    %v1252 = vunpack.c.h.b16 %v539
    %v1253 = vunpack.c.l.b16 %v540
    %v1254 = vunpack.c.h.b16 %v540
    %v1255 = vunpack.c.l.b16 %v541
    %v1256 = vunpack.c.h.b16 %v541
    %v1257 = vunpack.c.l.b16 %v542
    %v1258 = vunpack.c.h.b16 %v542
    %v1259 = vunpack.c.l.b16 %v543
    %v1260 = vunpack.c.h.b16 %v543
    %v1261 = vunpack.c.l.b16 %v544
    %v1262 = vunpack.c.h.b16 %v544
    %v1263 = vunpack.c.l.b16 %v545
    %v1264 = vunpack.c.h.b16 %v545
    %v1265 = vunpack.c.l.b16 %v546
    %v1266 = vunpack.c.h.b16 %v546
    %v1267 = vunpack.c.l.b16 %v547
    %v1268 = vunpack.c.h.b16 %v547
    %v1269 = vunpack.c.l.b16 %v548
    %v1270 = vunpack.c.h.b16 %v548
    %v1271 = vunpack.c.l.b16 %v549
    %v1272 = vunpack.c.h.b16 %v549
    %v1273 = vunpack.c.l.b16 %v550
    %v1274 = vunpack.c.h.b16 %v550
    %v1275 = vunpack.c.l.b16 %v551
    %v1276 = vunpack.c.h.b16 %v551
    %v1277 = vunpack.c.l.b16 %v552
    %v1278 = vunpack.c.h.b16 %v552
    %v1279 = vunpack.c.l.b16 %v553
    %v1280 = vunpack.c.h.b16 %v553
    %v1281 = vunpack.c.l.b16 %v554
    %v1282 = vunpack.c.h.b16 %v554
    %v1283 = vunpack.c.l.b16 %v555
    %v1284 = vunpack.c.h.b16 %v555
    %v1285 = vunpack.c.l.b16 %v556
    %v1286 = vunpack.c.h.b16 %v556
    %v1287 = vunpack.c.l.b16 %v557
    %v1288 = vunpack.c.h.b16 %v557
    %v1289 = vunpack.c.l.b16 %v558
    %v1290 = vunpack.c.h.b16 %v558
    %v1291 = vunpack.c.l.b16 %v559
    %v1292 = vunpack.c.h.b16 %v559
    %v1293 = vunpack.c.l.b16 %v560
    %v1294 = vunpack.c.h.b16 %v560
    %v1295 = vunpack.c.l.b16 %v561
    %v1296 = vunpack.c.h.b16 %v561
    %v1297 = vunpack.c.l.b16 %v562
    %v1298 = vunpack.c.h.b16 %v562
    %v1299 = vunpack.c.l.b16 %v563
    %v1300 = vunpack.c.h.b16 %v563
    %v1301 = vunpack.c.l.b16 %v564
    %v1302 = vunpack.c.h.b16 %v564
    %v1303 = vunpack.c.l.b16 %v565
    %v1304 = vunpack.c.h.b16 %v565
    %v1305 = vunpack.c.l.b16 %v566
    %v1306 = vunpack.c.h.b16 %v566
    %v1307 = vunpack.c.l.b16 %v567
    %v1308 = vunpack.c.h.b16 %v567
    %v1309 = vunpack.c.l.b16 %v568
    %v1310 = vunpack.c.h.b16 %v568
    %v1311 = vunpack.c.l.b16 %v569
    %v1312 = vunpack.c.h.b16 %v569
    %v1313 = vunpack.c.l.b16 %v570
    %v1314 = vunpack.c.h.b16 %v570
    %v1315 = vunpack.c.l.b16 %v571
    %v1316 = vunpack.c.h.b16 %v571
    %v1317 = vunpack.c.l.b16 %v572
    %v1318 = vunpack.c.h.b16 %v572
    %v1319 = vunpack.c.l.b16 %v573
    %v1320 = vunpack.c.h.b16 %v573
    %v1321 = vunpack.c.l.b16 %v574
    %v1322 = vunpack.c.h.b16 %v574
    %v1323 = vunpack.c.l.b16 %v575
    %v1324 = vunpack.c.h.b16 %v575
    %v1325 = vunpack.c.l.b16 %v576
    %v1326 = vunpack.c.h.b16 %v576
    %v1327 = vunpack.c.l.b16 %v577
    %v1328 = vunpack.c.h.b16 %v577
    %v1329 = vunpack.c.l.b16 %v578
    %v1330 = vunpack.c.h.b16 %v578
    %v1331 = vunpack.c.l.b16 %v579
    %v1332 = vunpack.c.h.b16 %v579
    %v1333 = vunpack.c.l.b16 %v580
    %v1334 = vunpack.c.h.b16 %v580
    %v1335 = vunpack.c.l.b16 %v581
    %v1336 = vunpack.c.h.b16 %v581
    %v1337 = vunpack.c.l.b16 %v582
    %v1338 = vunpack.c.h.b16 %v582
    %v1339 = vunpack.c.l.b16 %v583
    %v1340 = vunpack.c.h.b16 %v583
    %v1341 = vunpack.c.l.b16 %v584
    %v1342 = vunpack.c.h.b16 %v584
    %v1343 = vunpack.c.l.b16 %v585
    %v1344 = vunpack.c.h.b16 %v585
    %v1345 = vunpack.c.l.b16 %v586
    %v1346 = vunpack.c.h.b16 %v586
    %v1347 = vunpack.c.l.b16 %v587
    %v1348 = vunpack.c.h.b16 %v587
    %v1349 = vunpack.c.l.b16 %v588
    %v1350 = vunpack.c.h.b16 %v588
    %v1351 = vunpack.c.l.b16 %v589
    %v1352 = vunpack.c.h.b16 %v589
    %v1353 = vunpack.c.l.b16 %v590
    %v1354 = vunpack.c.h.b16 %v590
    %v1355 = vunpack.c.l.b16 %v591
    %v1356 = vunpack.c.h.b16 %v591
    %v1357 = vunpack.c.l.b16 %v592
    %v1358 = vunpack.c.h.b16 %v592
    %v1359 = vunpack.c.l.b16 %v593
    %v1360 = vunpack.c.h.b16 %v593
    %v1361 = vunpack.c.l.b16 %v594
    %v1362 = vunpack.c.h.b16 %v594
    %v1363 = vunpack.c.l.b16 %v595
    %v1364 = vunpack.c.h.b16 %v595
    %v1365 = vunpack.c.l.b16 %v596
    %v1366 = vunpack.c.h.b16 %v596
    %v1367 = vunpack.c.l.b16 %v597
    %v1368 = vunpack.c.h.b16 %v597
    %v1369 = vunpack.c.l.b16 %v598
    %v1370 = vunpack.c.h.b16 %v598
    %v1371 = vunpack.c.l.b16 %v599
    %v1372 = vunpack.c.h.b16 %v599
    %v1373 = vunpack.c.l.b16 %v600
    %v1374 = vunpack.c.h.b16 %v600
    %v1375 = vunpack.c.l.b16 %v601
    %v1376 = vunpack.c.h.b16 %v601
    %v1377 = vunpack.c.l.b16 %v602
    %v1378 = vunpack.c.h.b16 %v602
    %v1379 = vunpack.c.l.b16 %v603
    %v1380 = vunpack.c.h.b16 %v603
    %v1381 = vunpack.c.l.b16 %v604
    %v1382 = vunpack.c.h.b16 %v604
    %v1383 = vunpack.c.l.b16 %v605
    %v1384 = vunpack.c.h.b16 %v605
    %v1385 = vunpack.c.l.b16 %v606
    %v1386 = vunpack.c.h.b16 %v606
    %v1387 = vunpack.c.l.b16 %v607
    %v1388 = vunpack.c.h.b16 %v607
    %v1389 = vunpack.c.l.b16 %v608
    %v1390 = vunpack.c.h.b16 %v608
    %v1391 = vunpack.c.l.b16 %v609
    %v1392 = vunpack.c.h.b16 %v609
    %v1393 = vunpack.c.l.b16 %v610
    %v1394 = vunpack.c.h.b16 %v610
    %v1395 = vunpack.c.l.b16 %v611
    %v1396 = vunpack.c.h.b16 %v611
    %v1397 = vunpack.c.l.b16 %v612
    %v1398 = vunpack.c.h.b16 %v612
    %v1399 = vunpack.c.l.b16 %v613
    %v1400 = vunpack.c.h.b16 %v613
    %v1401 = vunpack.c.l.b16 %v614
    %v1402 = vunpack.c.h.b16 %v614
    %v1403 = vunpack.c.l.b16 %v615
    %v1404 = vunpack.c.h.b16 %v615
    %v1405 = vunpack.c.l.b16 %v616
    %v1406 = vunpack.c.h.b16 %v616
    %v1407 = vpack.c.b16 %v899, %v895
    %v1408 = vpack.c.b16 %v900, %v896
    %v1409 = vpack.c.b16 %v901, %v897
    %v1410 = vpack.c.b16 %v902, %v898
    %v1411 = vpack.c.b16 %v907, %v903
    %v1412 = vpack.c.b16 %v908, %v904
    %v1413 = vpack.c.b16 %v909, %v905
    %v1414 = vpack.c.b16 %v910, %v906
    %v1415 = vpack.c.b16 %v915, %v911
    %v1416 = vpack.c.b16 %v916, %v912
    %v1417 = vpack.c.b16 %v917, %v913
    %v1418 = vpack.c.b16 %v918, %v914
    %v1419 = vpack.c.b16 %v923, %v919
    %v1420 = vpack.c.b16 %v924, %v920
    %v1421 = vpack.c.b16 %v925, %v921
    %v1422 = vpack.c.b16 %v926, %v922
    %v1423 = vpack.c.b16 %v931, %v927
    %v1424 = vpack.c.b16 %v932, %v928
    %v1425 = vpack.c.b16 %v933, %v929
    %v1426 = vpack.c.b16 %v934, %v930
    %v1427 = vpack.c.b16 %v939, %v935
    %v1428 = vpack.c.b16 %v940, %v936
    %v1429 = vpack.c.b16 %v941, %v937
    %v1430 = vpack.c.b16 %v942, %v938
    %v1431 = vpack.c.b16 %v947, %v943
    %v1432 = vpack.c.b16 %v948, %v944
    %v1433 = vpack.c.b16 %v949, %v945
    %v1434 = vpack.c.b16 %v950, %v946
    %v1435 = vpack.c.b16 %v955, %v951
    %v1436 = vpack.c.b16 %v956, %v952
    %v1437 = vpack.c.b16 %v957, %v953
    %v1438 = vpack.c.b16 %v958, %v954
    %v1439 = vpack.c.b16 %v963, %v959
    %v1440 = vpack.c.b16 %v964, %v960
    %v1441 = vpack.c.b16 %v965, %v961
    %v1442 = vpack.c.b16 %v966, %v962
    %v1443 = vpack.c.b16 %v971, %v967
    %v1444 = vpack.c.b16 %v972, %v968
    %v1445 = vpack.c.b16 %v973, %v969
    %v1446 = vpack.c.b16 %v974, %v970
    %v1447 = vpack.c.b16 %v979, %v975
    %v1448 = vpack.c.b16 %v980, %v976
    %v1449 = vpack.c.b16 %v981, %v977
    %v1450 = vpack.c.b16 %v982, %v978
    %v1451 = vpack.c.b16 %v987, %v983
    %v1452 = vpack.c.b16 %v988, %v984
    %v1453 = vpack.c.b16 %v989, %v985
    %v1454 = vpack.c.b16 %v990, %v986
    %v1455 = vpack.c.b16 %v995, %v991
    %v1456 = vpack.c.b16 %v996, %v992
    %v1457 = vpack.c.b16 %v997, %v993
    %v1458 = vpack.c.b16 %v998, %v994
    %v1459 = vpack.c.b16 %v1003, %v999
    %v1460 = vpack.c.b16 %v1004, %v1000
    %v1461 = vpack.c.b16 %v1005, %v1001
    %v1462 = vpack.c.b16 %v1006, %v1002
    %v1463 = vpack.c.b16 %v1011, %v1007
    %v1464 = vpack.c.b16 %v1012, %v1008
    %v1465 = vpack.c.b16 %v1013, %v1009
    %v1466 = vpack.c.b16 %v1014, %v1010
    %v1467 = vpack.c.b16 %v1019, %v1015
    %v1468 = vpack.c.b16 %v1020, %v1016
    %v1469 = vpack.c.b16 %v1021, %v1017
    %v1470 = vpack.c.b16 %v1022, %v1018
    %v1471 = vpack.c.b16 %v1027, %v1023
    %v1472 = vpack.c.b16 %v1028, %v1024
    %v1473 = vpack.c.b16 %v1029, %v1025
    %v1474 = vpack.c.b16 %v1030, %v1026
    %v1475 = vpack.c.b16 %v1035, %v1031
    %v1476 = vpack.c.b16 %v1036, %v1032
    %v1477 = vpack.c.b16 %v1037, %v1033
    %v1478 = vpack.c.b16 %v1038, %v1034
    %v1479 = vpack.c.b16 %v1043, %v1039
    %v1480 = vpack.c.b16 %v1044, %v1040
    %v1481 = vpack.c.b16 %v1045, %v1041
    %v1482 = vpack.c.b16 %v1046, %v1042
    %v1483 = vpack.c.b16 %v1051, %v1047
    %v1484 = vpack.c.b16 %v1052, %v1048
    %v1485 = vpack.c.b16 %v1053, %v1049
    %v1486 = vpack.c.b16 %v1054, %v1050
    %v1487 = vpack.c.b16 %v1059, %v1055
    %v1488 = vpack.c.b16 %v1060, %v1056
    %v1489 = vpack.c.b16 %v1061, %v1057
    %v1490 = vpack.c.b16 %v1062, %v1058
    %v1491 = vpack.c.b16 %v1067, %v1063
    %v1492 = vpack.c.b16 %v1068, %v1064
    %v1493 = vpack.c.b16 %v1069, %v1065
    %v1494 = vpack.c.b16 %v1070, %v1066
    %v1495 = vpack.c.b16 %v1075, %v1071
    %v1496 = vpack.c.b16 %v1076, %v1072
    %v1497 = vpack.c.b16 %v1077, %v1073
    %v1498 = vpack.c.b16 %v1078, %v1074
    %v1499 = vpack.c.b16 %v1083, %v1079
    %v1500 = vpack.c.b16 %v1084, %v1080
    %v1501 = vpack.c.b16 %v1085, %v1081
    %v1502 = vpack.c.b16 %v1086, %v1082
    %v1503 = vpack.c.b16 %v1091, %v1087
    %v1504 = vpack.c.b16 %v1092, %v1088
    %v1505 = vpack.c.b16 %v1093, %v1089
    %v1506 = vpack.c.b16 %v1094, %v1090
    %v1507 = vpack.c.b16 %v1099, %v1095
    %v1508 = vpack.c.b16 %v1100, %v1096
    %v1509 = vpack.c.b16 %v1101, %v1097
    %v1510 = vpack.c.b16 %v1102, %v1098
    %v1511 = vpack.c.b16 %v1107, %v1103
    %v1512 = vpack.c.b16 %v1108, %v1104
    %v1513 = vpack.c.b16 %v1109, %v1105
    %v1514 = vpack.c.b16 %v1110, %v1106
    %v1515 = vpack.c.b16 %v1115, %v1111
    %v1516 = vpack.c.b16 %v1116, %v1112
    %v1517 = vpack.c.b16 %v1117, %v1113
    %v1518 = vpack.c.b16 %v1118, %v1114
    %v1519 = vpack.c.b16 %v1123, %v1119
    %v1520 = vpack.c.b16 %v1124, %v1120
    %v1521 = vpack.c.b16 %v1125, %v1121
    %v1522 = vpack.c.b16 %v1126, %v1122
    %v1523 = vpack.c.b16 %v1131, %v1127
    %v1524 = vpack.c.b16 %v1132, %v1128
    %v1525 = vpack.c.b16 %v1133, %v1129
    %v1526 = vpack.c.b16 %v1134, %v1130
    %v1527 = vpack.c.b16 %v1139, %v1135
    %v1528 = vpack.c.b16 %v1140, %v1136
    %v1529 = vpack.c.b16 %v1141, %v1137
    %v1530 = vpack.c.b16 %v1142, %v1138
    %v1531 = vpack.c.b16 %v1147, %v1143
    %v1532 = vpack.c.b16 %v1148, %v1144
    %v1533 = vpack.c.b16 %v1149, %v1145
    %v1534 = vpack.c.b16 %v1150, %v1146
    %v1535 = vpack.c.b16 %v1155, %v1151
    %v1536 = vpack.c.b16 %v1156, %v1152
    %v1537 = vpack.c.b16 %v1157, %v1153
    %v1538 = vpack.c.b16 %v1158, %v1154
    %v1539 = vpack.c.b16 %v1163, %v1159
    %v1540 = vpack.c.b16 %v1164, %v1160
    %v1541 = vpack.c.b16 %v1165, %v1161
    %v1542 = vpack.c.b16 %v1166, %v1162
    %v1543 = vpack.c.b16 %v1171, %v1167
    %v1544 = vpack.c.b16 %v1172, %v1168
    %v1545 = vpack.c.b16 %v1173, %v1169
    %v1546 = vpack.c.b16 %v1174, %v1170
    %v1547 = vpack.c.b16 %v1179, %v1175
    %v1548 = vpack.c.b16 %v1180, %v1176
    %v1549 = vpack.c.b16 %v1181, %v1177
    %v1550 = vpack.c.b16 %v1182, %v1178
    %v1551 = vpack.c.b16 %v1187, %v1183
    %v1552 = vpack.c.b16 %v1188, %v1184
    %v1553 = vpack.c.b16 %v1189, %v1185
    %v1554 = vpack.c.b16 %v1190, %v1186
    %v1555 = vpack.c.b16 %v1195, %v1191
    %v1556 = vpack.c.b16 %v1196, %v1192
    %v1557 = vpack.c.b16 %v1197, %v1193
    %v1558 = vpack.c.b16 %v1198, %v1194
    %v1559 = vpack.c.b16 %v1203, %v1199
    %v1560 = vpack.c.b16 %v1204, %v1200
    %v1561 = vpack.c.b16 %v1205, %v1201
    %v1562 = vpack.c.b16 %v1206, %v1202
    %v1563 = vpack.c.b16 %v1211, %v1207
    %v1564 = vpack.c.b16 %v1212, %v1208
    %v1565 = vpack.c.b16 %v1213, %v1209
    %v1566 = vpack.c.b16 %v1214, %v1210
    %v1567 = vpack.c.b16 %v1219, %v1215
    %v1568 = vpack.c.b16 %v1220, %v1216
    %v1569 = vpack.c.b16 %v1221, %v1217
    %v1570 = vpack.c.b16 %v1222, %v1218
    %v1571 = vpack.c.b16 %v1227, %v1223
    %v1572 = vpack.c.b16 %v1228, %v1224
    %v1573 = vpack.c.b16 %v1229, %v1225
    %v1574 = vpack.c.b16 %v1230, %v1226
    %v1575 = vpack.c.b16 %v1235, %v1231
    %v1576 = vpack.c.b16 %v1236, %v1232
    %v1577 = vpack.c.b16 %v1237, %v1233
    %v1578 = vpack.c.b16 %v1238, %v1234
    %v1579 = vpack.c.b16 %v1243, %v1239
    %v1580 = vpack.c.b16 %v1244, %v1240
    %v1581 = vpack.c.b16 %v1245, %v1241
    %v1582 = vpack.c.b16 %v1246, %v1242
    %v1583 = vpack.c.b16 %v1251, %v1247
    %v1584 = vpack.c.b16 %v1252, %v1248
    %v1585 = vpack.c.b16 %v1253, %v1249
    %v1586 = vpack.c.b16 %v1254, %v1250
    %v1587 = vpack.c.b16 %v1259, %v1255
    %v1588 = vpack.c.b16 %v1260, %v1256
    %v1589 = vpack.c.b16 %v1261, %v1257
    %v1590 = vpack.c.b16 %v1262, %v1258
    %v1591 = vpack.c.b16 %v1267, %v1263
    %v1592 = vpack.c.b16 %v1268, %v1264
    %v1593 = vpack.c.b16 %v1269, %v1265
    %v1594 = vpack.c.b16 %v1270, %v1266
    %v1595 = vpack.c.b16 %v1275, %v1271
    %v1596 = vpack.c.b16 %v1276, %v1272
    %v1597 = vpack.c.b16 %v1277, %v1273
    %v1598 = vpack.c.b16 %v1278, %v1274
    %v1599 = vpack.c.b16 %v1283, %v1279
    %v1600 = vpack.c.b16 %v1284, %v1280
    %v1601 = vpack.c.b16 %v1285, %v1281
    %v1602 = vpack.c.b16 %v1286, %v1282
    %v1603 = vpack.c.b16 %v1291, %v1287
    %v1604 = vpack.c.b16 %v1292, %v1288
    %v1605 = vpack.c.b16 %v1293, %v1289
    %v1606 = vpack.c.b16 %v1294, %v1290
    %v1607 = vpack.c.b16 %v1299, %v1295
    %v1608 = vpack.c.b16 %v1300, %v1296
    %v1609 = vpack.c.b16 %v1301, %v1297
    %v1610 = vpack.c.b16 %v1302, %v1298
    %v1611 = vpack.c.b16 %v1307, %v1303
    %v1612 = vpack.c.b16 %v1308, %v1304
    %v1613 = vpack.c.b16 %v1309, %v1305
    %v1614 = vpack.c.b16 %v1310, %v1306
    %v1615 = vpack.c.b16 %v1315, %v1311
    %v1616 = vpack.c.b16 %v1316, %v1312
    %v1617 = vpack.c.b16 %v1317, %v1313
    %v1618 = vpack.c.b16 %v1318, %v1314
    %v1619 = vpack.c.b16 %v1323, %v1319
    %v1620 = vpack.c.b16 %v1324, %v1320
    %v1621 = vpack.c.b16 %v1325, %v1321
    %v1622 = vpack.c.b16 %v1326, %v1322
    %v1623 = vpack.c.b16 %v1331, %v1327
    %v1624 = vpack.c.b16 %v1332, %v1328
    %v1625 = vpack.c.b16 %v1333, %v1329
    %v1626 = vpack.c.b16 %v1334, %v1330
    %v1627 = vpack.c.b16 %v1339, %v1335
    %v1628 = vpack.c.b16 %v1340, %v1336
    %v1629 = vpack.c.b16 %v1341, %v1337
    %v1630 = vpack.c.b16 %v1342, %v1338
    %v1631 = vpack.c.b16 %v1347, %v1343
    %v1632 = vpack.c.b16 %v1348, %v1344
    %v1633 = vpack.c.b16 %v1349, %v1345
    %v1634 = vpack.c.b16 %v1350, %v1346
    %v1635 = vpack.c.b16 %v1355, %v1351
    %v1636 = vpack.c.b16 %v1356, %v1352
    %v1637 = vpack.c.b16 %v1357, %v1353
    %v1638 = vpack.c.b16 %v1358, %v1354
    %v1639 = vpack.c.b16 %v1363, %v1359
    %v1640 = vpack.c.b16 %v1364, %v1360
    %v1641 = vpack.c.b16 %v1365, %v1361
    %v1642 = vpack.c.b16 %v1366, %v1362
    %v1643 = vpack.c.b16 %v1371, %v1367
    %v1644 = vpack.c.b16 %v1372, %v1368
    %v1645 = vpack.c.b16 %v1373, %v1369
    %v1646 = vpack.c.b16 %v1374, %v1370
    %v1647 = vpack.c.b16 %v1379, %v1375
    %v1648 = vpack.c.b16 %v1380, %v1376
    %v1649 = vpack.c.b16 %v1381, %v1377
    %v1650 = vpack.c.b16 %v1382, %v1378
    %v1651 = vpack.c.b16 %v1387, %v1383
    %v1652 = vpack.c.b16 %v1388, %v1384
    %v1653 = vpack.c.b16 %v1389, %v1385
    %v1654 = vpack.c.b16 %v1390, %v1386
    %v1655 = vpack.c.b16 %v1395, %v1391
    %v1656 = vpack.c.b16 %v1396, %v1392
    %v1657 = vpack.c.b16 %v1397, %v1393
    %v1658 = vpack.c.b16 %v1398, %v1394
    %v1659 = vpack.c.b16 %v1403, %v1399
    %v1660 = vpack.c.b16 %v1404, %v1400
    %v1661 = vpack.c.b16 %v1405, %v1401
    %v1662 = vpack.c.b16 %v1406, %v1402
    %1919 = vmatprep.subr.bf16.mxu0 %v1436
    %1920 = vmatpush1.bf16.msra.mxu0 %v1435
    %1921 = vmatprep.subr.bf16.mxu0 %v1432
    %1922 = vmatpush1.bf16.msra.mxu0 %v1431
    %1923 = vmatprep.subr.bf16.mxu0 %v1428
    %1924 = vmatpush1.bf16.msra.mxu0 %v1427
    %1925 = vmatprep.subr.bf16.mxu0 %v1424
    %1926 = vmatpush1.bf16.msra.mxu0 %v1423
    %1927 = vmatprep.subr.bf16.mxu0 %v1420
    %1928 = vmatpush1.bf16.msra.mxu0 %v1419
    %1929 = vmatprep.subr.bf16.mxu0 %v1416
    %1930 = vmatpush1.bf16.msra.mxu0 %v1415
    %1931 = vmatprep.subr.bf16.mxu0 %v1412
    %1932 = vmatpush1.bf16.msra.mxu0 %v1411
    %1933 = vmatprep.subr.bf16.mxu0 %v1408
    %1934 = vmatpush1.bf16.msra.mxu0 %v1407
    %1935 = vmatprep.subr.bf16.mxu0 %v1468
    %1936 = vmatpush2.bf16.msra.mxu0 %v1467
    %1937 = vmatprep.subr.bf16.mxu0 %v1464
    %1938 = vmatpush2.bf16.msra.mxu0 %v1463
    %1939 = vmatprep.subr.bf16.mxu0 %v1460
    %1940 = vmatpush2.bf16.msra.mxu0 %v1459
    %1941 = vmatprep.subr.bf16.mxu0 %v1456
    %1942 = vmatpush2.bf16.msra.mxu0 %v1455
    %1943 = vmatprep.subr.bf16.mxu0 %v1452
    %1944 = vmatpush2.bf16.msra.mxu0 %v1451
    %1945 = vmatprep.subr.bf16.mxu0 %v1448
    %1946 = vmatpush2.bf16.msra.mxu0 %v1447
    %1947 = vmatprep.subr.bf16.mxu0 %v1444
    %1948 = vmatpush2.bf16.msra.mxu0 %v1443
    %1949 = vmatprep.subr.bf16.mxu0 %v1440
    %1950 = vmatpush2.bf16.msra.mxu0 %v1439
    %1951 = vmatprep.mubr.bf16.mxu0 %v354
    %1952 = vmatmul.mubr.bf16.gmra.mxu0 %v353
    %v1953 = vpop.f32.mrf.mxu0
    %v1954 = vadd.f32 %v622, %v1953
    %v1955 = vpop.f32.mrf.mxu0
    %v1956 = vadd.f32 %v626, %v1955
    %v1957 = vpop.f32.mrf.mxu0
    %v1958 = vadd.f32 %v622, %v1957
    %v1959 = vpop.f32.mrf.mxu0
    %v1960 = vadd.f32 %v626, %v1959
    %1961 = vdwg.mxu0
    %1962 = vmatprep.subr.bf16.mxu0 %v1500
    %1963 = vmatpush1.bf16.msra.mxu0 %v1499
    %1964 = vmatprep.subr.bf16.mxu0 %v1496
    %1965 = vmatpush1.bf16.msra.mxu0 %v1495
    %1966 = vmatprep.subr.bf16.mxu0 %v1492
    %1967 = vmatpush1.bf16.msra.mxu0 %v1491
    %1968 = vmatprep.subr.bf16.mxu0 %v1488
    %1969 = vmatpush1.bf16.msra.mxu0 %v1487
    %1970 = vmatprep.subr.bf16.mxu0 %v1484
    %1971 = vmatpush1.bf16.msra.mxu0 %v1483
    %1972 = vmatprep.subr.bf16.mxu0 %v1480
    %1973 = vmatpush1.bf16.msra.mxu0 %v1479
    %1974 = vmatprep.subr.bf16.mxu0 %v1476
    %1975 = vmatpush1.bf16.msra.mxu0 %v1475
    %1976 = vmatprep.subr.bf16.mxu0 %v1472
    %1977 = vmatpush1.bf16.msra.mxu0 %v1471
    %1978 = vmatprep.subr.bf16.mxu0 %v1532
    %1979 = vmatpush2.bf16.msra.mxu0 %v1531
    %1980 = vmatprep.subr.bf16.mxu0 %v1528
    %1981 = vmatpush2.bf16.msra.mxu0 %v1527
    %1982 = vmatprep.subr.bf16.mxu0 %v1524
    %1983 = vmatpush2.bf16.msra.mxu0 %v1523
    %1984 = vmatprep.subr.bf16.mxu0 %v1520
    %1985 = vmatpush2.bf16.msra.mxu0 %v1519
    %1986 = vmatprep.subr.bf16.mxu0 %v1516
    %1987 = vmatpush2.bf16.msra.mxu0 %v1515
    %1988 = vmatprep.subr.bf16.mxu0 %v1512
    %1989 = vmatpush2.bf16.msra.mxu0 %v1511
    %1990 = vmatprep.subr.bf16.mxu0 %v1508
    %1991 = vmatpush2.bf16.msra.mxu0 %v1507
    %1992 = vmatprep.subr.bf16.mxu0 %v1504
    %1993 = vmatpush2.bf16.msra.mxu0 %v1503
    %1994 = vmatprep.mubr.bf16.mxu0 %v356
    %1995 = vmatmul.mubr.bf16.gmra.mxu0 %v355
    %v1996 = vpop.f32.mrf.mxu0
    %v1997 = vadd.f32 %v1954, %v1996
    %v1998 = vpop.f32.mrf.mxu0
    %v1999 = vadd.f32 %v1956, %v1998
    %v2000 = vpop.f32.mrf.mxu0
    %v2001 = vadd.f32 %v1958, %v2000
    %v2002 = vpop.f32.mrf.mxu0
    %v2003 = vadd.f32 %v1960, %v2002
    %2004 = vdwg.mxu0
    %2005 = vmatprep.subr.bf16.mxu0 %v1564
    %2006 = vmatpush1.bf16.msra.mxu0 %v1563
    %2007 = vmatprep.subr.bf16.mxu0 %v1560
    %2008 = vmatpush1.bf16.msra.mxu0 %v1559
    %2009 = vmatprep.subr.bf16.mxu0 %v1556
    %2010 = vmatpush1.bf16.msra.mxu0 %v1555
    %2011 = vmatprep.subr.bf16.mxu0 %v1552
    %2012 = vmatpush1.bf16.msra.mxu0 %v1551
    %2013 = vmatprep.subr.bf16.mxu0 %v1548
    %2014 = vmatpush1.bf16.msra.mxu0 %v1547
    %2015 = vmatprep.subr.bf16.mxu0 %v1544
    %2016 = vmatpush1.bf16.msra.mxu0 %v1543
    %2017 = vmatprep.subr.bf16.mxu0 %v1540
    %2018 = vmatpush1.bf16.msra.mxu0 %v1539
    %2019 = vmatprep.subr.bf16.mxu0 %v1536
    %2020 = vmatpush1.bf16.msra.mxu0 %v1535
    %2021 = vmatprep.subr.bf16.mxu0 %v1596
    %2022 = vmatpush2.bf16.msra.mxu0 %v1595
    %2023 = vmatprep.subr.bf16.mxu0 %v1592
    %2024 = vmatpush2.bf16.msra.mxu0 %v1591
    %2025 = vmatprep.subr.bf16.mxu0 %v1588
    %2026 = vmatpush2.bf16.msra.mxu0 %v1587
    %2027 = vmatprep.subr.bf16.mxu0 %v1584
    %2028 = vmatpush2.bf16.msra.mxu0 %v1583
    %2029 = vmatprep.subr.bf16.mxu0 %v1580
    %2030 = vmatpush2.bf16.msra.mxu0 %v1579
    %2031 = vmatprep.subr.bf16.mxu0 %v1576
    %2032 = vmatpush2.bf16.msra.mxu0 %v1575
    %2033 = vmatprep.subr.bf16.mxu0 %v1572
    %2034 = vmatpush2.bf16.msra.mxu0 %v1571
    %2035 = vmatprep.subr.bf16.mxu0 %v1568
    %2036 = vmatpush2.bf16.msra.mxu0 %v1567
    %2037 = vmatprep.mubr.bf16.mxu0 %v358
    %2038 = vmatmul.mubr.bf16.gmra.mxu0 %v357
    %v2039 = vpop.f32.mrf.mxu0
    %v2040 = vadd.f32 %v1997, %v2039
    %v2041 = vpop.f32.mrf.mxu0
    %v2042 = vadd.f32 %v1999, %v2041
    %v2043 = vpop.f32.mrf.mxu0
    %v2044 = vadd.f32 %v2001, %v2043
    %v2045 = vpop.f32.mrf.mxu0
    %v2046 = vadd.f32 %v2003, %v2045
    %2047 = vdwg.mxu0
    %2048 = vmatprep.subr.bf16.mxu0 %v1628
    %2049 = vmatpush1.bf16.msra.mxu0 %v1627
    %2050 = vmatprep.subr.bf16.mxu0 %v1624
    %2051 = vmatpush1.bf16.msra.mxu0 %v1623
    %2052 = vmatprep.subr.bf16.mxu0 %v1620
    %2053 = vmatpush1.bf16.msra.mxu0 %v1619
    %2054 = vmatprep.subr.bf16.mxu0 %v1616
    %2055 = vmatpush1.bf16.msra.mxu0 %v1615
    %2056 = vmatprep.subr.bf16.mxu0 %v1612
    %2057 = vmatpush1.bf16.msra.mxu0 %v1611
    %2058 = vmatprep.subr.bf16.mxu0 %v1608
    %2059 = vmatpush1.bf16.msra.mxu0 %v1607
    %2060 = vmatprep.subr.bf16.mxu0 %v1604
    %2061 = vmatpush1.bf16.msra.mxu0 %v1603
    %2062 = vmatprep.subr.bf16.mxu0 %v1600
    %2063 = vmatpush1.bf16.msra.mxu0 %v1599
    %2064 = vmatprep.subr.bf16.mxu0 %v1660
    %2065 = vmatpush2.bf16.msra.mxu0 %v1659
    %2066 = vmatprep.subr.bf16.mxu0 %v1656
    %2067 = vmatpush2.bf16.msra.mxu0 %v1655
    %2068 = vmatprep.subr.bf16.mxu0 %v1652
    %2069 = vmatpush2.bf16.msra.mxu0 %v1651
    %2070 = vmatprep.subr.bf16.mxu0 %v1648
    %2071 = vmatpush2.bf16.msra.mxu0 %v1647
    %2072 = vmatprep.subr.bf16.mxu0 %v1644
    %2073 = vmatpush2.bf16.msra.mxu0 %v1643
    %2074 = vmatprep.subr.bf16.mxu0 %v1640
    %2075 = vmatpush2.bf16.msra.mxu0 %v1639
    %2076 = vmatprep.subr.bf16.mxu0 %v1636
    %2077 = vmatpush2.bf16.msra.mxu0 %v1635
    %2078 = vmatprep.subr.bf16.mxu0 %v1632
    %2079 = vmatpush2.bf16.msra.mxu0 %v1631
    %2080 = vmatprep.mubr.bf16.mxu0 %v360
    %2081 = vmatmul.mubr.bf16.gmra.mxu0 %v359
    %v2082 = vpop.f32.mrf.mxu0
    %v2083 = vadd.f32 %v2040, %v2082
    %v2084 = vpop.f32.mrf.mxu0
    %v2085 = vadd.f32 %v2042, %v2084
    %v2086 = vpop.f32.mrf.mxu0
    %v2087 = vadd.f32 %v2044, %v2086
    %v2088 = vpop.f32.mrf.mxu0
    %v2089 = vadd.f32 %v2046, %v2088
    %2090 = vdwg.mxu0
    %2091 = vmatprep.subr.bf16.mxu0 %v1438
    %2092 = vmatpush1.bf16.msra.mxu0 %v1437
    %2093 = vmatprep.subr.bf16.mxu0 %v1434
    %2094 = vmatpush1.bf16.msra.mxu0 %v1433
    %2095 = vmatprep.subr.bf16.mxu0 %v1430
    %2096 = vmatpush1.bf16.msra.mxu0 %v1429
    %2097 = vmatprep.subr.bf16.mxu0 %v1426
    %2098 = vmatpush1.bf16.msra.mxu0 %v1425
    %2099 = vmatprep.subr.bf16.mxu0 %v1422
    %2100 = vmatpush1.bf16.msra.mxu0 %v1421
    %2101 = vmatprep.subr.bf16.mxu0 %v1418
    %2102 = vmatpush1.bf16.msra.mxu0 %v1417
    %2103 = vmatprep.subr.bf16.mxu0 %v1414
    %2104 = vmatpush1.bf16.msra.mxu0 %v1413
    %2105 = vmatprep.subr.bf16.mxu0 %v1410
    %2106 = vmatpush1.bf16.msra.mxu0 %v1409
    %2107 = vmatprep.subr.bf16.mxu0 %v1470
    %2108 = vmatpush2.bf16.msra.mxu0 %v1469
    %2109 = vmatprep.subr.bf16.mxu0 %v1466
    %2110 = vmatpush2.bf16.msra.mxu0 %v1465
    %2111 = vmatprep.subr.bf16.mxu0 %v1462
    %2112 = vmatpush2.bf16.msra.mxu0 %v1461
    %2113 = vmatprep.subr.bf16.mxu0 %v1458
    %2114 = vmatpush2.bf16.msra.mxu0 %v1457
    %2115 = vmatprep.subr.bf16.mxu0 %v1454
    %2116 = vmatpush2.bf16.msra.mxu0 %v1453
    %2117 = vmatprep.subr.bf16.mxu0 %v1450
    %2118 = vmatpush2.bf16.msra.mxu0 %v1449
    %2119 = vmatprep.subr.bf16.mxu0 %v1446
    %2120 = vmatpush2.bf16.msra.mxu0 %v1445
    %2121 = vmatprep.subr.bf16.mxu0 %v1442
    %2122 = vmatpush2.bf16.msra.mxu0 %v1441
    %2123 = vmatprep.mubr.bf16.mxu0 %v354
    %2124 = vmatmul.mubr.bf16.gmra.mxu0 %v353
    %v2125 = vpop.f32.mrf.mxu0
    %v2126 = vadd.f32 %v630, %v2125
    %v2127 = vpop.f32.mrf.mxu0
    %v2128 = vadd.f32 %v634, %v2127
    %v2129 = vpop.f32.mrf.mxu0
    %v2130 = vadd.f32 %v630, %v2129
    %v2131 = vpop.f32.mrf.mxu0
    %v2132 = vadd.f32 %v634, %v2131
    %2133 = vdwg.mxu0
    %2134 = vmatprep.subr.bf16.mxu0 %v1502
    %2135 = vmatpush1.bf16.msra.mxu0 %v1501
    %2136 = vmatprep.subr.bf16.mxu0 %v1498
    %2137 = vmatpush1.bf16.msra.mxu0 %v1497
    %2138 = vmatprep.subr.bf16.mxu0 %v1494
    %2139 = vmatpush1.bf16.msra.mxu0 %v1493
    %2140 = vmatprep.subr.bf16.mxu0 %v1490
    %2141 = vmatpush1.bf16.msra.mxu0 %v1489
    %2142 = vmatprep.subr.bf16.mxu0 %v1486
    %2143 = vmatpush1.bf16.msra.mxu0 %v1485
    %2144 = vmatprep.subr.bf16.mxu0 %v1482
    %2145 = vmatpush1.bf16.msra.mxu0 %v1481
    %2146 = vmatprep.subr.bf16.mxu0 %v1478
    %2147 = vmatpush1.bf16.msra.mxu0 %v1477
    %2148 = vmatprep.subr.bf16.mxu0 %v1474
    %2149 = vmatpush1.bf16.msra.mxu0 %v1473
    %2150 = vmatprep.subr.bf16.mxu0 %v1534
    %2151 = vmatpush2.bf16.msra.mxu0 %v1533
    %2152 = vmatprep.subr.bf16.mxu0 %v1530
    %2153 = vmatpush2.bf16.msra.mxu0 %v1529
    %2154 = vmatprep.subr.bf16.mxu0 %v1526
    %2155 = vmatpush2.bf16.msra.mxu0 %v1525
    %2156 = vmatprep.subr.bf16.mxu0 %v1522
    %2157 = vmatpush2.bf16.msra.mxu0 %v1521
    %2158 = vmatprep.subr.bf16.mxu0 %v1518
    %2159 = vmatpush2.bf16.msra.mxu0 %v1517
    %2160 = vmatprep.subr.bf16.mxu0 %v1514
    %2161 = vmatpush2.bf16.msra.mxu0 %v1513
    %2162 = vmatprep.subr.bf16.mxu0 %v1510
    %2163 = vmatpush2.bf16.msra.mxu0 %v1509
    %2164 = vmatprep.subr.bf16.mxu0 %v1506
    %2165 = vmatpush2.bf16.msra.mxu0 %v1505
    %2166 = vmatprep.mubr.bf16.mxu0 %v356
    %2167 = vmatmul.mubr.bf16.gmra.mxu0 %v355
    %v2168 = vpop.f32.mrf.mxu0
    %v2169 = vadd.f32 %v2126, %v2168
    %v2170 = vpop.f32.mrf.mxu0
    %v2171 = vadd.f32 %v2128, %v2170
    %v2172 = vpop.f32.mrf.mxu0
    %v2173 = vadd.f32 %v2130, %v2172
    %v2174 = vpop.f32.mrf.mxu0
    %v2175 = vadd.f32 %v2132, %v2174
    %2176 = vdwg.mxu0
    %2177 = vmatprep.subr.bf16.mxu0 %v1566
    %2178 = vmatpush1.bf16.msra.mxu0 %v1565
    %2179 = vmatprep.subr.bf16.mxu0 %v1562
    %2180 = vmatpush1.bf16.msra.mxu0 %v1561
    %2181 = vmatprep.subr.bf16.mxu0 %v1558
    %2182 = vmatpush1.bf16.msra.mxu0 %v1557
    %2183 = vmatprep.subr.bf16.mxu0 %v1554
    %2184 = vmatpush1.bf16.msra.mxu0 %v1553
    %2185 = vmatprep.subr.bf16.mxu0 %v1550
    %2186 = vmatpush1.bf16.msra.mxu0 %v1549
    %2187 = vmatprep.subr.bf16.mxu0 %v1546
    %2188 = vmatpush1.bf16.msra.mxu0 %v1545
    %2189 = vmatprep.subr.bf16.mxu0 %v1542
    %2190 = vmatpush1.bf16.msra.mxu0 %v1541
    %2191 = vmatprep.subr.bf16.mxu0 %v1538
    %2192 = vmatpush1.bf16.msra.mxu0 %v1537
    %2193 = vmatprep.subr.bf16.mxu0 %v1598
    %2194 = vmatpush2.bf16.msra.mxu0 %v1597
    %2195 = vmatprep.subr.bf16.mxu0 %v1594
    %2196 = vmatpush2.bf16.msra.mxu0 %v1593
    %2197 = vmatprep.subr.bf16.mxu0 %v1590
    %2198 = vmatpush2.bf16.msra.mxu0 %v1589
    %2199 = vmatprep.subr.bf16.mxu0 %v1586
    %2200 = vmatpush2.bf16.msra.mxu0 %v1585
    %2201 = vmatprep.subr.bf16.mxu0 %v1582
    %2202 = vmatpush2.bf16.msra.mxu0 %v1581
    %2203 = vmatprep.subr.bf16.mxu0 %v1578
    %2204 = vmatpush2.bf16.msra.mxu0 %v1577
    %2205 = vmatprep.subr.bf16.mxu0 %v1574
    %2206 = vmatpush2.bf16.msra.mxu0 %v1573
    %2207 = vmatprep.subr.bf16.mxu0 %v1570
    %2208 = vmatpush2.bf16.msra.mxu0 %v1569
    %2209 = vmatprep.mubr.bf16.mxu0 %v358
    %2210 = vmatmul.mubr.bf16.gmra.mxu0 %v357
    %v2211 = vpop.f32.mrf.mxu0
    %v2212 = vadd.f32 %v2169, %v2211
    %v2213 = vpop.f32.mrf.mxu0
    %v2214 = vadd.f32 %v2171, %v2213
    %v2215 = vpop.f32.mrf.mxu0
    %v2216 = vadd.f32 %v2173, %v2215
    %v2217 = vpop.f32.mrf.mxu0
    %v2218 = vadd.f32 %v2175, %v2217
    %2219 = vdwg.mxu0
    %2220 = vmatprep.subr.bf16.mxu0 %v1630
    %2221 = vmatpush1.bf16.msra.mxu0 %v1629
    %2222 = vmatprep.subr.bf16.mxu0 %v1626
    %2223 = vmatpush1.bf16.msra.mxu0 %v1625
    %2224 = vmatprep.subr.bf16.mxu0 %v1622
    %2225 = vmatpush1.bf16.msra.mxu0 %v1621
    %2226 = vmatprep.subr.bf16.mxu0 %v1618
    %2227 = vmatpush1.bf16.msra.mxu0 %v1617
    %2228 = vmatprep.subr.bf16.mxu0 %v1614
    %2229 = vmatpush1.bf16.msra.mxu0 %v1613
    %2230 = vmatprep.subr.bf16.mxu0 %v1610
    %2231 = vmatpush1.bf16.msra.mxu0 %v1609
    %2232 = vmatprep.subr.bf16.mxu0 %v1606
    %2233 = vmatpush1.bf16.msra.mxu0 %v1605
    %2234 = vmatprep.subr.bf16.mxu0 %v1602
    %2235 = vmatpush1.bf16.msra.mxu0 %v1601
    %2236 = vmatprep.subr.bf16.mxu0 %v1662
    %2237 = vmatpush2.bf16.msra.mxu0 %v1661
    %2238 = vmatprep.subr.bf16.mxu0 %v1658
    %2239 = vmatpush2.bf16.msra.mxu0 %v1657
    %2240 = vmatprep.subr.bf16.mxu0 %v1654
    %2241 = vmatpush2.bf16.msra.mxu0 %v1653
    %2242 = vmatprep.subr.bf16.mxu0 %v1650
    %2243 = vmatpush2.bf16.msra.mxu0 %v1649
    %2244 = vmatprep.subr.bf16.mxu0 %v1646
    %2245 = vmatpush2.bf16.msra.mxu0 %v1645
    %2246 = vmatprep.subr.bf16.mxu0 %v1642
    %2247 = vmatpush2.bf16.msra.mxu0 %v1641
    %2248 = vmatprep.subr.bf16.mxu0 %v1638
    %2249 = vmatpush2.bf16.msra.mxu0 %v1637
    %2250 = vmatprep.subr.bf16.mxu0 %v1634
    %2251 = vmatpush2.bf16.msra.mxu0 %v1633
    %2252 = vmatprep.mubr.bf16.mxu0 %v360
    %2253 = vmatmul.mubr.bf16.gmra.mxu0 %v359
    %v2254 = vpop.f32.mrf.mxu0
    %v2255 = vadd.f32 %v2212, %v2254
    %v2256 = vpop.f32.mrf.mxu0
    %v2257 = vadd.f32 %v2214, %v2256
    %v2258 = vpop.f32.mrf.mxu0
    %v2259 = vadd.f32 %v2216, %v2258
    %v2260 = vpop.f32.mrf.mxu0
    %v2261 = vadd.f32 %v2218, %v2260
    %2262 = vdwg.mxu0
    %v2263 = vmax.f32 %v2083, 0.0
    %v2264 = vmax.f32 %v2085, 0.0
    %v2265 = vmax.f32 %v2255, 0.0
    %v2266 = vmax.f32 %v2257, 0.0
    %v2267 = vmax.f32 %v2087, 0.0
    %v2268 = vmax.f32 %v2089, 0.0
    %v2269 = vmax.f32 %v2259, 0.0
    %v2270 = vmax.f32 %v2261, 0.0
    %v2271 = vpack.c.bf16 %v2267, %v2263
    %v2272 = vpack.c.bf16 %v2268, %v2264
    %v2273 = vpack.c.bf16 %v2269, %v2265
    %v2274 = vpack.c.bf16 %v2270, %v2266
    %v2275 = vld [vmem:[#allocation7] sm:$0xf]
    %v2276 = vld [vmem:[#allocation7 + $0x4] sm:$0xf]
    %v2277 = vld [vmem:[#allocation7 + $0x8] sm:$0xf]
    %v2278 = vld [vmem:[#allocation7 + $0xc] sm:$0xf]
    %v2279 = vld [vmem:[#allocation7 + $0x10] sm:$0xf]
    %v2280 = vld [vmem:[#allocation7 + $0x14] sm:$0xf]
    %v2281 = vld [vmem:[#allocation7 + $0x18] sm:$0xf]
    %v2282 = vld [vmem:[#allocation7 + $0x1c] sm:$0xf]
    %v2283 = vld [vmem:[#allocation7 + $0x20] sm:$0xf]
    %v2284 = vld [vmem:[#allocation7 + $0x24] sm:$0xf]
    %v2285 = vld [vmem:[#allocation7 + $0x28] sm:$0xf]
    %v2286 = vld [vmem:[#allocation7 + $0x2c] sm:$0xf]
    %v2287 = vld [vmem:[#allocation7 + $0x30] sm:$0xf]
    %v2288 = vld [vmem:[#allocation7 + $0x34] sm:$0xf]
    %v2289 = vld [vmem:[#allocation7 + $0x38] sm:$0xf]
    %v2290 = vld [vmem:[#allocation7 + $0x3c] sm:$0xf]
    %v2291 = vld [vmem:[#allocation7 + $0x40] sm:$0xf]
    %v2292 = vld [vmem:[#allocation7 + $0x44] sm:$0xf]
    %v2293 = vld [vmem:[#allocation7 + $0x48] sm:$0xf]
    %v2294 = vld [vmem:[#allocation7 + $0x4c] sm:$0xf]
    %v2295 = vld [vmem:[#allocation7 + $0x50] sm:$0xf]
    %v2296 = vld [vmem:[#allocation7 + $0x54] sm:$0xf]
    %v2297 = vld [vmem:[#allocation7 + $0x58] sm:$0xf]
    %v2298 = vld [vmem:[#allocation7 + $0x5c] sm:$0xf]
    %v2299 = vld [vmem:[#allocation7 + $0x60] sm:$0xf]
    %v2300 = vld [vmem:[#allocation7 + $0x64] sm:$0xf]
    %v2301 = vld [vmem:[#allocation7 + $0x68] sm:$0xf]
    %v2302 = vld [vmem:[#allocation7 + $0x6c] sm:$0xf]
    %v2303 = vld [vmem:[#allocation7 + $0x70] sm:$0xf]
    %v2304 = vld [vmem:[#allocation7 + $0x74] sm:$0xf]
    %v2305 = vld [vmem:[#allocation7 + $0x78] sm:$0xf]
    %v2306 = vld [vmem:[#allocation7 + $0x7c] sm:$0xf]
    %v2307 = vld [vmem:[#allocation7 + $0x80] sm:$0xf]
    %v2308 = vld [vmem:[#allocation7 + $0x84] sm:$0xf]
    %v2309 = vld [vmem:[#allocation7 + $0x88] sm:$0xf]
    %v2310 = vld [vmem:[#allocation7 + $0x8c] sm:$0xf]
    %v2311 = vld [vmem:[#allocation7 + $0x90] sm:$0xf]
    %v2312 = vld [vmem:[#allocation7 + $0x94] sm:$0xf]
    %v2313 = vld [vmem:[#allocation7 + $0x98] sm:$0xf]
    %v2314 = vld [vmem:[#allocation7 + $0x9c] sm:$0xf]
    %v2315 = vld [vmem:[#allocation7 + $0xa0] sm:$0xf]
    %v2316 = vld [vmem:[#allocation7 + $0xa4] sm:$0xf]
    %v2317 = vld [vmem:[#allocation7 + $0xa8] sm:$0xf]
    %v2318 = vld [vmem:[#allocation7 + $0xac] sm:$0xf]
    %v2319 = vld [vmem:[#allocation7 + $0xb0] sm:$0xf]
    %v2320 = vld [vmem:[#allocation7 + $0xb4] sm:$0xf]
    %v2321 = vld [vmem:[#allocation7 + $0xb8] sm:$0xf]
    %v2322 = vld [vmem:[#allocation7 + $0xbc] sm:$0xf]
    %v2323 = vld [vmem:[#allocation7 + $0xc0] sm:$0xf]
    %v2324 = vld [vmem:[#allocation7 + $0xc4] sm:$0xf]
    %v2325 = vld [vmem:[#allocation7 + $0xc8] sm:$0xf]
    %v2326 = vld [vmem:[#allocation7 + $0xcc] sm:$0xf]
    %v2327 = vld [vmem:[#allocation7 + $0xd0] sm:$0xf]
    %v2328 = vld [vmem:[#allocation7 + $0xd4] sm:$0xf]
    %v2329 = vld [vmem:[#allocation7 + $0xd8] sm:$0xf]
    %v2330 = vld [vmem:[#allocation7 + $0xdc] sm:$0xf]
    %v2331 = vld [vmem:[#allocation7 + $0xe0] sm:$0xf]
    %v2332 = vld [vmem:[#allocation7 + $0xe4] sm:$0xf]
    %v2333 = vld [vmem:[#allocation7 + $0xe8] sm:$0xf]
    %v2334 = vld [vmem:[#allocation7 + $0xec] sm:$0xf]
    %v2335 = vld [vmem:[#allocation7 + $0xf0] sm:$0xf]
    %v2336 = vld [vmem:[#allocation7 + $0xf4] sm:$0xf]
    %v2337 = vld [vmem:[#allocation7 + $0xf8] sm:$0xf]
    %v2338 = vld [vmem:[#allocation7 + $0xfc] sm:$0xf]
    %v2339 = vld [vmem:[%s6] sm:$0x1]
    %v2341 = vlaneseq
    %v2342 = vshrl.u32 %v2341, 7
    %v2343 = vsub.s32 0, %v2342
    %v2344 = vrot.slane %v2339, %v2343
    %v2410 = vunpack.c.l.b16 %v2275
    %v2411 = vunpack.c.l.b16 %v2276
    %v2412 = vunpack.c.l.b16 %v2277
    %v2413 = vunpack.c.l.b16 %v2278
    %v2414 = vunpack.c.l.b16 %v2279
    %v2415 = vunpack.c.l.b16 %v2280
    %v2416 = vunpack.c.l.b16 %v2281
    %v2417 = vunpack.c.l.b16 %v2282
    %v2418 = vunpack.c.l.b16 %v2283
    %v2419 = vunpack.c.l.b16 %v2284
    %v2420 = vunpack.c.l.b16 %v2285
    %v2421 = vunpack.c.l.b16 %v2286
    %v2422 = vunpack.c.l.b16 %v2287
    %v2423 = vunpack.c.l.b16 %v2288
    %v2424 = vunpack.c.l.b16 %v2289
    %v2425 = vunpack.c.l.b16 %v2290
    %v2426 = vunpack.c.l.b16 %v2291
    %v2427 = vunpack.c.l.b16 %v2292
    %v2428 = vunpack.c.l.b16 %v2293
    %v2429 = vunpack.c.l.b16 %v2294
    %v2430 = vunpack.c.l.b16 %v2295
    %v2431 = vunpack.c.l.b16 %v2296
    %v2432 = vunpack.c.l.b16 %v2297
    %v2433 = vunpack.c.l.b16 %v2298
    %v2434 = vunpack.c.l.b16 %v2299
    %v2435 = vunpack.c.l.b16 %v2300
    %v2436 = vunpack.c.l.b16 %v2301
    %v2437 = vunpack.c.l.b16 %v2302
    %v2438 = vunpack.c.l.b16 %v2303
    %v2439 = vunpack.c.l.b16 %v2304
    %v2440 = vunpack.c.l.b16 %v2305
    %v2441 = vunpack.c.l.b16 %v2306
    %v2442 = vunpack.c.l.b16 %v2307
    %v2443 = vunpack.c.l.b16 %v2308
    %v2444 = vunpack.c.l.b16 %v2309
    %v2445 = vunpack.c.l.b16 %v2310
    %v2446 = vunpack.c.l.b16 %v2311
    %v2447 = vunpack.c.l.b16 %v2312
    %v2448 = vunpack.c.l.b16 %v2313
    %v2449 = vunpack.c.l.b16 %v2314
    %v2450 = vunpack.c.l.b16 %v2315
    %v2451 = vunpack.c.l.b16 %v2316
    %v2452 = vunpack.c.l.b16 %v2317
    %v2453 = vunpack.c.l.b16 %v2318
    %v2454 = vunpack.c.l.b16 %v2319
    %v2455 = vunpack.c.l.b16 %v2320
    %v2456 = vunpack.c.l.b16 %v2321
    %v2457 = vunpack.c.l.b16 %v2322
    %v2458 = vunpack.c.l.b16 %v2323
    %v2459 = vunpack.c.l.b16 %v2324
    %v2460 = vunpack.c.l.b16 %v2325
    %v2461 = vunpack.c.l.b16 %v2326
    %v2462 = vunpack.c.l.b16 %v2327
    %v2463 = vunpack.c.l.b16 %v2328
    %v2464 = vunpack.c.l.b16 %v2329
    %v2465 = vunpack.c.l.b16 %v2330
    %v2466 = vunpack.c.l.b16 %v2331
    %v2467 = vunpack.c.l.b16 %v2332
    %v2468 = vunpack.c.l.b16 %v2333
    %v2469 = vunpack.c.l.b16 %v2334
    %v2470 = vunpack.c.l.b16 %v2335
    %v2471 = vunpack.c.l.b16 %v2336
    %v2472 = vunpack.c.l.b16 %v2337
    %v2473 = vunpack.c.l.b16 %v2338
    %v2474 = vpack.c.b16 %v2411, %v2410
    %v2475 = vpack.c.b16 %v2413, %v2412
    %v2476 = vpack.c.b16 %v2415, %v2414
    %v2477 = vpack.c.b16 %v2417, %v2416
    %v2478 = vpack.c.b16 %v2419, %v2418
    %v2479 = vpack.c.b16 %v2421, %v2420
    %v2480 = vpack.c.b16 %v2423, %v2422
    %v2481 = vpack.c.b16 %v2425, %v2424
    %v2482 = vpack.c.b16 %v2427, %v2426
    %v2483 = vpack.c.b16 %v2429, %v2428
    %v2484 = vpack.c.b16 %v2431, %v2430
    %v2485 = vpack.c.b16 %v2433, %v2432
    %v2486 = vpack.c.b16 %v2435, %v2434
    %v2487 = vpack.c.b16 %v2437, %v2436
    %v2488 = vpack.c.b16 %v2439, %v2438
    %v2489 = vpack.c.b16 %v2441, %v2440
    %v2490 = vpack.c.b16 %v2443, %v2442
    %v2491 = vpack.c.b16 %v2445, %v2444
    %v2492 = vpack.c.b16 %v2447, %v2446
    %v2493 = vpack.c.b16 %v2449, %v2448
    %v2494 = vpack.c.b16 %v2451, %v2450
    %v2495 = vpack.c.b16 %v2453, %v2452
    %v2496 = vpack.c.b16 %v2455, %v2454
    %v2497 = vpack.c.b16 %v2457, %v2456
    %v2498 = vpack.c.b16 %v2459, %v2458
    %v2499 = vpack.c.b16 %v2461, %v2460
    %v2500 = vpack.c.b16 %v2463, %v2462
    %v2501 = vpack.c.b16 %v2465, %v2464
    %v2502 = vpack.c.b16 %v2467, %v2466
    %v2503 = vpack.c.b16 %v2469, %v2468
    %v2504 = vpack.c.b16 %v2471, %v2470
    %v2505 = vpack.c.b16 %v2473, %v2472
    %2538 = vmatprep.subr.bf16.mxu0 0
    %2539 = vmatpush1.bf16.msra.mxu0 %v2481
    %2540 = vmatprep.subr.bf16.mxu0 0
    %2541 = vmatpush1.bf16.msra.mxu0 %v2480
    %2542 = vmatprep.subr.bf16.mxu0 0
    %2543 = vmatpush1.bf16.msra.mxu0 %v2479
    %2544 = vmatprep.subr.bf16.mxu0 0
    %2545 = vmatpush1.bf16.msra.mxu0 %v2478
    %2546 = vmatprep.subr.bf16.mxu0 0
    %2547 = vmatpush1.bf16.msra.mxu0 %v2477
    %2548 = vmatprep.subr.bf16.mxu0 0
    %2549 = vmatpush1.bf16.msra.mxu0 %v2476
    %2550 = vmatprep.subr.bf16.mxu0 0
    %2551 = vmatpush1.bf16.msra.mxu0 %v2475
    %2552 = vmatprep.subr.bf16.mxu0 0
    %2553 = vmatpush1.bf16.msra.mxu0 %v2474
    %2554 = vmatprep.subr.bf16.mxu0 0
    %2555 = vmatpush2.bf16.msra.mxu0 %v2489
    %2556 = vmatprep.subr.bf16.mxu0 0
    %2557 = vmatpush2.bf16.msra.mxu0 %v2488
    %2558 = vmatprep.subr.bf16.mxu0 0
    %2559 = vmatpush2.bf16.msra.mxu0 %v2487
    %2560 = vmatprep.subr.bf16.mxu0 0
    %2561 = vmatpush2.bf16.msra.mxu0 %v2486
    %2562 = vmatprep.subr.bf16.mxu0 0
    %2563 = vmatpush2.bf16.msra.mxu0 %v2485
    %2564 = vmatprep.subr.bf16.mxu0 0
    %2565 = vmatpush2.bf16.msra.mxu0 %v2484
    %2566 = vmatprep.subr.bf16.mxu0 0
    %2567 = vmatpush2.bf16.msra.mxu0 %v2483
    %2568 = vmatprep.subr.bf16.mxu0 0
    %2569 = vmatpush2.bf16.msra.mxu0 %v2482
    %2570 = vmatprep.mubr.bf16.mxu0 %v2272
    %2571 = vmatmul.mubr.bf16.gmra.mxu0 %v2271
    %v2572 = vpop.f32.mrf.mxu0
    %v2573 = vadd.f32 %v2344, %v2572
    %v2574 = vpop.f32.mrf.mxu0
    %v2575 = vpop.f32.mrf.mxu0
    %v2576 = vadd.f32 %v2344, %v2575
    %v2577 = vpop.f32.mrf.mxu0
    %2578 = vdwg.mxu0
    %2579 = vmatprep.subr.bf16.mxu0 0
    %2580 = vmatpush1.bf16.msra.mxu0 %v2497
    %2581 = vmatprep.subr.bf16.mxu0 0
    %2582 = vmatpush1.bf16.msra.mxu0 %v2496
    %2583 = vmatprep.subr.bf16.mxu0 0
    %2584 = vmatpush1.bf16.msra.mxu0 %v2495
    %2585 = vmatprep.subr.bf16.mxu0 0
    %2586 = vmatpush1.bf16.msra.mxu0 %v2494
    %2587 = vmatprep.subr.bf16.mxu0 0
    %2588 = vmatpush1.bf16.msra.mxu0 %v2493
    %2589 = vmatprep.subr.bf16.mxu0 0
    %2590 = vmatpush1.bf16.msra.mxu0 %v2492
    %2591 = vmatprep.subr.bf16.mxu0 0
    %2592 = vmatpush1.bf16.msra.mxu0 %v2491
    %2593 = vmatprep.subr.bf16.mxu0 0
    %2594 = vmatpush1.bf16.msra.mxu0 %v2490
    %2595 = vmatprep.subr.bf16.mxu0 0
    %2596 = vmatpush2.bf16.msra.mxu0 %v2505
    %2597 = vmatprep.subr.bf16.mxu0 0
    %2598 = vmatpush2.bf16.msra.mxu0 %v2504
    %2599 = vmatprep.subr.bf16.mxu0 0
    %2600 = vmatpush2.bf16.msra.mxu0 %v2503
    %2601 = vmatprep.subr.bf16.mxu0 0
    %2602 = vmatpush2.bf16.msra.mxu0 %v2502
    %2603 = vmatprep.subr.bf16.mxu0 0
    %2604 = vmatpush2.bf16.msra.mxu0 %v2501
    %2605 = vmatprep.subr.bf16.mxu0 0
    %2606 = vmatpush2.bf16.msra.mxu0 %v2500
    %2607 = vmatprep.subr.bf16.mxu0 0
    %2608 = vmatpush2.bf16.msra.mxu0 %v2499
    %2609 = vmatprep.subr.bf16.mxu0 0
    %2610 = vmatpush2.bf16.msra.mxu0 %v2498
    %2611 = vmatprep.mubr.bf16.mxu0 %v2274
    %2612 = vmatmul.mubr.bf16.gmra.mxu0 %v2273
    %v2613 = vpop.f32.mrf.mxu0
    %v2614 = vadd.f32 %v2573, %v2613
    %v2615 = vpop.f32.mrf.mxu0
    %v2616 = vpop.f32.mrf.mxu0
    %v2617 = vadd.f32 %v2576, %v2616
    %v2618 = vpop.f32.mrf.mxu0
    %2619 = vdwg.mxu0
    %2620 = vmax.xlane.f32.xlu0 %v2614
    %v2621 = vpop.xlane.xlu0 %2620
    %2622 = vmax.xlane.f32.xlu0 %v2617
    %v2623 = vpop.xlane.xlu0 %2622
    %v2624 = vsub.f32 %v2614, %v2621
    %v2625 = vsub.f32 %v2617, %v2623
    %v2626 = vmul.f32 %v2624, 1.442695
    %v2627 = vpow.pop %v2626
    %v2628 = vmul.f32 %v2625, 1.442695
    %v2629 = vpow.pop %v2628
    %2630 = vadd.xlane.f32.xlu0 %v2627
    %v2631 = vpop.xlane.xlu0 %2630
    %2632 = vadd.xlane.f32.xlu0 %v2629
    %v2633 = vpop.xlane.xlu0 %2632
    %v2634 = vrcp.pop %v2631
    %v2635 = vrcp.pop %v2633
    %v2636 = vmul.f32 %v2627, %v2634
    %v2637 = vmul.f32 %v2629, %v2635
    %2638 = vst [vmem:[#allocation8] sm:$0xff] %v2636
    %2639 = vst [vmem:[#allocation8 + $0x8] sm:$0xff] %v2637
    // Predicated region
    $region42: #{tpu_custom_call.1} parent=1 // pred_check
      _
    $region43: #{tpu_custom_call.1} parent=1 // pred_check_branch
      %2641 = sbr.rel (0) target = $region45
    $region44: #{tpu_custom_call.1} parent=1 // pred_region
      %s2643 = ssub.s32 256, 256
      %2644 = vsyncadd [#allocation4], %s2643
      %s2645 = sshll.u32 [#allocation8], 4
      %s2646 = int_to_ptr.vmem [resolvable:$true] %s2645
      %2651 = dma.vmem_to_hbm [thread:$0]  %s2646, 256, %s7, [#allocation4], 128, 128, 8
    $region45: #{tpu_custom_call.1} parent=1 // pred_fallthru
      _
    // Predicated region
    $region46: #{tpu_custom_call.1} parent=1 // pred_check
      _
    $region47: #{tpu_custom_call.1} parent=1 // pred_check_branch
      %2653 = sbr.rel (0) target = $region49
    $region48: #{tpu_custom_call.1} parent=1 // pred_region
      %2654 = dma.done [#allocation4], 256
    $region49: #{tpu_custom_call.1} parent=1 // pred_fallthru
      _
    %2655 = vsyncpa [#allocation3], 1
    %2656 = vsyncpa [#allocation6], 1
    %2657 = vsyncpa [#allocation4], 1

// kernel: tpu_custom_call.1
$region0: #{tpu_custom_call.1}
  #allocation0 [shape = 'u32[]', space=smem, size = 0x4, offset = 0x4, fixed_abs, tag = 'smem constant byte address 0x4 - core index']
  #allocation1 [shape = 'u32[144,128]{1,0:T(1,128)}', space=vmem, size = 0x12000, scoped, tag = 'internal scratch']
  %s0 = inlined_call_operand.vmem [shape: f32[16,8], index: 0, kind: input, shape index: {}]
  %s1 = inlined_call_operand.hbm [shape: bf16[8,1024], index: 1, kind: input, shape index: {}]
  %s2 = inlined_call_operand.vmem [shape: f32[1,1024], index: 2, kind: input, shape index: {}]
  %s3 = inlined_call_operand.hbm [shape: bf16[1024,512], index: 3, kind: input, shape index: {}]
  %s4 = inlined_call_operand.vmem [shape: f32[1,512], index: 4, kind: input, shape index: {}]
  %s5 = inlined_call_operand.hbm [shape: bf16[512,128], index: 5, kind: input, shape index: {}]
  %s6 = inlined_call_operand.vmem [shape: f32[1,128], index: 6, kind: input, shape index: {}]
  %s7 = inlined_call_operand.hbm [shape: f32[16,128], index: 7, kind: output, shape index: {}]
  %s8 = sld [smem:[#allocation0]]
  $region50: #{tpu_custom_call.1} parent=0
    _
  %s10 = ssub.s32 1, %s8
  %s11 = scalar_select 0, %s10, %s8
  $region1: #{tpu_custom_call.1} parent=0
    #allocation2 [shape = 'u8[16384]{0}', space=vmem, size = 0x4000, scoped, tag = 'input window, operand 1, single buffered']
    #allocation3 [shape = 's32[1]{0}', space=sflag, size = 0x4, scoped, tag = 'scoped memory for tpu_custom_call.1']
    #allocation4 [shape = 's32[1]{0}', space=sflag, size = 0x4, scoped, tag = 'scoped memory for tpu_custom_call.1']
    #allocation5 [shape = 'u8[1048576]{0}', space=vmem, size = 0x100000, scoped, tag = 'input window, operand 3, single buffered']
    #allocation6 [shape = 's32[1]{0}', space=sflag, size = 0x4, scoped, tag = 'scoped memory for tpu_custom_call.1']
    #allocation7 [shape = 'u8[131072]{0}', space=vmem, size = 0x20000, scoped, tag = 'input window, operand 5, single buffered']
    #allocation8 [shape = 'u8[8192]{0}', space=vmem, size = 0x2000, scoped, tag = 'output window, operand 0, single buffered']
    %12 = vsyncpa [#allocation3], 0
    %13 = vsyncpa [#allocation6], 0
    %14 = vsyncpa [#allocation4], 0
    // Predicated region
    $region2: #{tpu_custom_call.1} parent=1 // pred_check
      _
    $region3: #{tpu_custom_call.1} parent=1 // pred_check_branch
      %16 = sbr.rel (0) target = $region5
    $region4: #{tpu_custom_call.1} parent=1 // pred_region
      _
    $region5: #{tpu_custom_call.1} parent=1 // pred_fallthru
      _
    // Predicated region
    $region6: #{tpu_custom_call.1} parent=1 // pred_check
      _
    $region7: #{tpu_custom_call.1} parent=1 // pred_check_branch
      %18 = sbr.rel (0) target = $region9
    $region8: #{tpu_custom_call.1} parent=1 // pred_region
      %s20 = ssub.s32 512, 512
      %21 = vsyncadd [#allocation3], %s20
      %s23 = sshll.u32 [#allocation2], 4
      %s24 = int_to_ptr.vmem [resolvable:$true] %s23
      %26 = dma.hbm_to_vmem [thread:$0]  %s1, 512, %s24, [#allocation3]
    $region9: #{tpu_custom_call.1} parent=1 // pred_fallthru
      _
    // Predicated region
    $region10: #{tpu_custom_call.1} parent=1 // pred_check
      _
    $region11: #{tpu_custom_call.1} parent=1 // pred_check_branch
      %28 = sbr.rel (0) target = $region13
    $region12: #{tpu_custom_call.1} parent=1 // pred_region
      _
    $region13: #{tpu_custom_call.1} parent=1 // pred_fallthru
      _
    // Predicated region
    $region14: #{tpu_custom_call.1} parent=1 // pred_check
      _
    $region15: #{tpu_custom_call.1} parent=1 // pred_check_branch
      %30 = sbr.rel (0) target = $region17
    $region16: #{tpu_custom_call.1} parent=1 // pred_region
      %s32 = ssub.s32 32768, 32768
      %33 = vsyncadd [#allocation6], %s32
      %s34 = sshll.u32 [#allocation5], 4
      %s35 = int_to_ptr.vmem [resolvable:$true] %s34
      %40 = dma.hbm_to_vmem [thread:$0]  %s3, 32768, %s35, [#allocation6], 256, 256, 16
    $region17: #{tpu_custom_call.1} parent=1 // pred_fallthru
      _
    // Predicated region
    $region18: #{tpu_custom_call.1} parent=1 // pred_check
      _
    $region19: #{tpu_custom_call.1} parent=1 // pred_check_branch
      %42 = sbr.rel (0) target = $region21
    $region20: #{tpu_custom_call.1} parent=1 // pred_region
      _
    $region21: #{tpu_custom_call.1} parent=1 // pred_fallthru
      _
    // Predicated region
    $region22: #{tpu_custom_call.1} parent=1 // pred_check
      _
    $region23: #{tpu_custom_call.1} parent=1 // pred_check_branch
      %44 = sbr.rel (0) target = $region25
    $region24: #{tpu_custom_call.1} parent=1 // pred_region
      %s46 = ssub.s32 4096, 4096
      %47 = vsyncadd [#allocation6], %s46
      %s48 = sshll.u32 [#allocation7], 4
      %s49 = int_to_ptr.vmem [resolvable:$true] %s48
      %54 = dma.hbm_to_vmem [thread:$0]  %s5, 4096, %s49, [#allocation6], 64, 64, 4
    $region25: #{tpu_custom_call.1} parent=1 // pred_fallthru
      _
    // Predicated region
    $region26: #{tpu_custom_call.1} parent=1 // pred_check
      _
    $region27: #{tpu_custom_call.1} parent=1 // pred_check_branch
      %56 = sbr.rel (0) target = $region29
    $region28: #{tpu_custom_call.1} parent=1 // pred_region
      _
    $region29: #{tpu_custom_call.1} parent=1 // pred_fallthru
      _
    // Predicated region
    $region30: #{tpu_custom_call.1} parent=1 // pred_check
      _
    $region31: #{tpu_custom_call.1} parent=1 // pred_check_branch
      %58 = sbr.rel (0) target = $region33
    $region32: #{tpu_custom_call.1} parent=1 // pred_region
      %59 = dma.done [#allocation3], 512
    $region33: #{tpu_custom_call.1} parent=1 // pred_fallthru
      _
    // Predicated region
    $region34: #{tpu_custom_call.1} parent=1 // pred_check
      _
    $region35: #{tpu_custom_call.1} parent=1 // pred_check_branch
      %61 = sbr.rel (0) target = $region37
    $region36: #{tpu_custom_call.1} parent=1 // pred_region
      %62 = dma.done [#allocation6], 32768
    $region37: #{tpu_custom_call.1} parent=1 // pred_fallthru
      _
    // Predicated region
    $region38: #{tpu_custom_call.1} parent=1 // pred_check
      _
    $region39: #{tpu_custom_call.1} parent=1 // pred_check_branch
      %64 = sbr.rel (0) target = $region41
    $region40: #{tpu_custom_call.1} parent=1 // pred_region
      %65 = dma.done [#allocation6], 4096
    $region41: #{tpu_custom_call.1} parent=1 // pred_fallthru
      _
    %v67 = vld [vmem:[%s0] sm:$0xff]
    %v68 = vld [vmem:[%s0 + $0x8] sm:$0xff]
    %v69 = vpack.c.bf16 %v68, %v67
    %v70 = vld [vmem:[#allocation2] sm:$0xff]
    %v71 = vld [vmem:[#allocation2 + $0x8] sm:$0xff]
    %v72 = vld [vmem:[#allocation2 + $0x10] sm:$0xff]
    %v73 = vld [vmem:[#allocation2 + $0x18] sm:$0xff]
    %v74 = vld [vmem:[%s2] sm:$0xff]
    %v76 = vlaneseq
    %v77 = vshrl.u32 %v76, 7
    %v78 = vsub.s32 0, %v77
    %v79 = vrot.slane %v74, %v78
    %v80 = vlaneseq
    %v81 = vshrl.u32 %v80, 7
    %v82 = vsub.s32 1, %v81
    %v83 = vrot.slane %v74, %v82
    %v84 = vlaneseq
    %v85 = vshrl.u32 %v84, 7
    %v86 = vsub.s32 2, %v85
    %v87 = vrot.slane %v74, %v86
    %v88 = vlaneseq
    %v89 = vshrl.u32 %v88, 7
    %v90 = vsub.s32 3, %v89
    %v91 = vrot.slane %v74, %v90
    %v92 = vlaneseq
    %v93 = vshrl.u32 %v92, 7
    %v94 = vsub.s32 4, %v93
    %v95 = vrot.slane %v74, %v94
    %v96 = vlaneseq
    %v97 = vshrl.u32 %v96, 7
    %v98 = vsub.s32 5, %v97
    %v99 = vrot.slane %v74, %v98
    %v100 = vlaneseq
    %v101 = vshrl.u32 %v100, 7
    %v102 = vsub.s32 6, %v101
    %v103 = vrot.slane %v74, %v102
    %v104 = vlaneseq
    %v105 = vshrl.u32 %v104, 7
    %v106 = vsub.s32 7, %v105
    %v107 = vrot.slane %v74, %v106
    %v120 = vunpack.c.l.b16 %v70
    %v121 = vunpack.c.h.b16 %v70
    %v122 = vunpack.c.l.b16 %v71
    %v123 = vunpack.c.h.b16 %v71
    %v124 = vunpack.c.l.b16 %v72
    %v125 = vunpack.c.h.b16 %v72
    %v126 = vunpack.c.l.b16 %v73
    %v127 = vunpack.c.h.b16 %v73
    %v128 = vpack.c.b16 %v120, %v120
    %v129 = vpack.c.b16 %v121, %v121
    %v130 = vpack.c.b16 %v122, %v122
    %v131 = vpack.c.b16 %v123, %v123
    %v132 = vpack.c.b16 %v124, %v124
    %v133 = vpack.c.b16 %v125, %v125
    %v134 = vpack.c.b16 %v126, %v126
    %v135 = vpack.c.b16 %v127, %v127
    %vm136 = vcmask 64512
    %v138 = vsel %vm136, %v69, 0
    %vm140 = vcmask 1043456
    %v142 = vsel %vm140, %v128, 0
    %v145 = vsel %vm140, %v129, 0
    %v148 = vsel %vm140, %v130, 0
    %v151 = vsel %vm140, %v131, 0
    %v154 = vsel %vm140, %v132, 0
    %v157 = vsel %vm140, %v133, 0
    %v160 = vsel %vm140, %v134, 0
    %v163 = vsel %vm140, %v135, 0
    %165 = vmatprep.subr.bf16.mxu0 0
    %166 = vmatpush1.bf16.msra.mxu0 0
    %167 = vmatprep.subr.bf16.mxu0 0
    %168 = vmatpush1.bf16.msra.mxu0 0
    %169 = vmatprep.subr.bf16.mxu0 0
    %170 = vmatpush1.bf16.msra.mxu0 0
    %171 = vmatprep.subr.bf16.mxu0 0
    %172 = vmatpush1.bf16.msra.mxu0 0
    %173 = vmatprep.subr.bf16.mxu0 0
    %174 = vmatpush1.bf16.msra.mxu0 0
    %175 = vmatprep.subr.bf16.mxu0 0
    %176 = vmatpush1.bf16.msra.mxu0 0
    %177 = vmatprep.subr.bf16.mxu0 0
    %178 = vmatpush1.bf16.msra.mxu0 0
    %179 = vmatprep.subr.bf16.mxu0 %v145
    %180 = vmatpush1.bf16.msra.mxu0 %v142
    %181 = vmatprep.subr.bf16.mxu0 0
    %182 = vmatpush2.bf16.msra.mxu0 0
    %183 = vmatprep.subr.bf16.mxu0 0
    %184 = vmatpush2.bf16.msra.mxu0 0
    %185 = vmatprep.subr.bf16.mxu0 0
    %186 = vmatpush2.bf16.msra.mxu0 0
    %187 = vmatprep.subr.bf16.mxu0 0
    %188 = vmatpush2.bf16.msra.mxu0 0
    %189 = vmatprep.subr.bf16.mxu0 0
    %190 = vmatpush2.bf16.msra.mxu0 0
    %191 = vmatprep.subr.bf16.mxu0 0
    %192 = vmatpush2.bf16.msra.mxu0 0
    %193 = vmatprep.subr.bf16.mxu0 0
    %194 = vmatpush2.bf16.msra.mxu0 0
    %195 = vmatprep.subr.bf16.mxu0 0
    %196 = vmatpush2.bf16.msra.mxu0 0
    %197 = vmatprep.mubr.bf16.mxu0 0
    %198 = vmatmul.mubr.bf16.gmra.mxu0 %v138
    %v199 = vpop.f32.mrf.mxu0
    %v200 = vadd.f32 %v79, %v199
    %v201 = vpop.f32.mrf.mxu0
    %v202 = vadd.f32 %v83, %v201
    %v203 = vpop.f32.mrf.mxu0
    %v204 = vadd.f32 %v79, %v203
    %v205 = vpop.f32.mrf.mxu0
    %v206 = vadd.f32 %v83, %v205
    %207 = vdwg.mxu0
    %208 = vmatprep.subr.bf16.mxu0 0
    %209 = vmatpush1.bf16.msra.mxu0 0
    %210 = vmatprep.subr.bf16.mxu0 0
    %211 = vmatpush1.bf16.msra.mxu0 0
    %212 = vmatprep.subr.bf16.mxu0 0
    %213 = vmatpush1.bf16.msra.mxu0 0
    %214 = vmatprep.subr.bf16.mxu0 0
    %215 = vmatpush1.bf16.msra.mxu0 0
    %216 = vmatprep.subr.bf16.mxu0 0
    %217 = vmatpush1.bf16.msra.mxu0 0
    %218 = vmatprep.subr.bf16.mxu0 0
    %219 = vmatpush1.bf16.msra.mxu0 0
    %220 = vmatprep.subr.bf16.mxu0 0
    %221 = vmatpush1.bf16.msra.mxu0 0
    %222 = vmatprep.subr.bf16.mxu0 %v151
    %223 = vmatpush1.bf16.msra.mxu0 %v148
    %224 = vmatprep.subr.bf16.mxu0 0
    %225 = vmatpush2.bf16.msra.mxu0 0
    %226 = vmatprep.subr.bf16.mxu0 0
    %227 = vmatpush2.bf16.msra.mxu0 0
    %228 = vmatprep.subr.bf16.mxu0 0
    %229 = vmatpush2.bf16.msra.mxu0 0
    %230 = vmatprep.subr.bf16.mxu0 0
    %231 = vmatpush2.bf16.msra.mxu0 0
    %232 = vmatprep.subr.bf16.mxu0 0
    %233 = vmatpush2.bf16.msra.mxu0 0
    %234 = vmatprep.subr.bf16.mxu0 0
    %235 = vmatpush2.bf16.msra.mxu0 0
    %236 = vmatprep.subr.bf16.mxu0 0
    %237 = vmatpush2.bf16.msra.mxu0 0
    %238 = vmatprep.subr.bf16.mxu0 0
    %239 = vmatpush2.bf16.msra.mxu0 0
    %240 = vmatprep.mubr.bf16.mxu0 0
    %241 = vmatmul.mubr.bf16.gmra.mxu0 %v138
    %v242 = vpop.f32.mrf.mxu0
    %v243 = vadd.f32 %v87, %v242
    %v244 = vpop.f32.mrf.mxu0
    %v245 = vadd.f32 %v91, %v244
    %v246 = vpop.f32.mrf.mxu0
    %v247 = vadd.f32 %v87, %v246
    %v248 = vpop.f32.mrf.mxu0
    %v249 = vadd.f32 %v91, %v248
    %250 = vdwg.mxu0
    %251 = vmatprep.subr.bf16.mxu0 0
    %252 = vmatpush1.bf16.msra.mxu0 0
    %253 = vmatprep.subr.bf16.mxu0 0
    %254 = vmatpush1.bf16.msra.mxu0 0
    %255 = vmatprep.subr.bf16.mxu0 0
    %256 = vmatpush1.bf16.msra.mxu0 0
    %257 = vmatprep.subr.bf16.mxu0 0
    %258 = vmatpush1.bf16.msra.mxu0 0
    %259 = vmatprep.subr.bf16.mxu0 0
    %260 = vmatpush1.bf16.msra.mxu0 0
    %261 = vmatprep.subr.bf16.mxu0 0
    %262 = vmatpush1.bf16.msra.mxu0 0
    %263 = vmatprep.subr.bf16.mxu0 0
    %264 = vmatpush1.bf16.msra.mxu0 0
    %265 = vmatprep.subr.bf16.mxu0 %v157
    %266 = vmatpush1.bf16.msra.mxu0 %v154
    %267 = vmatprep.subr.bf16.mxu0 0
    %268 = vmatpush2.bf16.msra.mxu0 0
    %269 = vmatprep.subr.bf16.mxu0 0
    %270 = vmatpush2.bf16.msra.mxu0 0
    %271 = vmatprep.subr.bf16.mxu0 0
    %272 = vmatpush2.bf16.msra.mxu0 0
    %273 = vmatprep.subr.bf16.mxu0 0
    %274 = vmatpush2.bf16.msra.mxu0 0
    %275 = vmatprep.subr.bf16.mxu0 0
    %276 = vmatpush2.bf16.msra.mxu0 0
    %277 = vmatprep.subr.bf16.mxu0 0
    %278 = vmatpush2.bf16.msra.mxu0 0
    %279 = vmatprep.subr.bf16.mxu0 0
    %280 = vmatpush2.bf16.msra.mxu0 0
    %281 = vmatprep.subr.bf16.mxu0 0
    %282 = vmatpush2.bf16.msra.mxu0 0
    %283 = vmatprep.mubr.bf16.mxu0 0
    %284 = vmatmul.mubr.bf16.gmra.mxu0 %v138
    %v285 = vpop.f32.mrf.mxu0
    %v286 = vadd.f32 %v95, %v285
    %v287 = vpop.f32.mrf.mxu0
    %v288 = vadd.f32 %v99, %v287
    %v289 = vpop.f32.mrf.mxu0
    %v290 = vadd.f32 %v95, %v289
    %v291 = vpop.f32.mrf.mxu0
    %v292 = vadd.f32 %v99, %v291
    %293 = vdwg.mxu0
    %294 = vmatprep.subr.bf16.mxu0 0
    %295 = vmatpush1.bf16.msra.mxu0 0
    %296 = vmatprep.subr.bf16.mxu0 0
    %297 = vmatpush1.bf16.msra.mxu0 0
    %298 = vmatprep.subr.bf16.mxu0 0
    %299 = vmatpush1.bf16.msra.mxu0 0
    %300 = vmatprep.subr.bf16.mxu0 0
    %301 = vmatpush1.bf16.msra.mxu0 0
    %302 = vmatprep.subr.bf16.mxu0 0
    %303 = vmatpush1.bf16.msra.mxu0 0
    %304 = vmatprep.subr.bf16.mxu0 0
    %305 = vmatpush1.bf16.msra.mxu0 0
    %306 = vmatprep.subr.bf16.mxu0 0
    %307 = vmatpush1.bf16.msra.mxu0 0
    %308 = vmatprep.subr.bf16.mxu0 %v163
    %309 = vmatpush1.bf16.msra.mxu0 %v160
    %310 = vmatprep.subr.bf16.mxu0 0
    %311 = vmatpush2.bf16.msra.mxu0 0
    %312 = vmatprep.subr.bf16.mxu0 0
    %313 = vmatpush2.bf16.msra.mxu0 0
    %314 = vmatprep.subr.bf16.mxu0 0
    %315 = vmatpush2.bf16.msra.mxu0 0
    %316 = vmatprep.subr.bf16.mxu0 0
    %317 = vmatpush2.bf16.msra.mxu0 0
    %318 = vmatprep.subr.bf16.mxu0 0
    %319 = vmatpush2.bf16.msra.mxu0 0
    %320 = vmatprep.subr.bf16.mxu0 0
    %321 = vmatpush2.bf16.msra.mxu0 0
    %322 = vmatprep.subr.bf16.mxu0 0
    %323 = vmatpush2.bf16.msra.mxu0 0
    %324 = vmatprep.subr.bf16.mxu0 0
    %325 = vmatpush2.bf16.msra.mxu0 0
    %326 = vmatprep.mubr.bf16.mxu0 0
    %327 = vmatmul.mubr.bf16.gmra.mxu0 %v138
    %v328 = vpop.f32.mrf.mxu0
    %v329 = vadd.f32 %v103, %v328
    %v330 = vpop.f32.mrf.mxu0
    %v331 = vadd.f32 %v107, %v330
    %v332 = vpop.f32.mrf.mxu0
    %v333 = vadd.f32 %v103, %v332
    %v334 = vpop.f32.mrf.mxu0
    %v335 = vadd.f32 %v107, %v334
    %336 = vdwg.mxu0
    %v337 = vmax.f32 %v200, 0.0
    %v338 = vmax.f32 %v202, 0.0
    %v339 = vmax.f32 %v243, 0.0
    %v340 = vmax.f32 %v245, 0.0
    %v341 = vmax.f32 %v286, 0.0
    %v342 = vmax.f32 %v288, 0.0
    %v343 = vmax.f32 %v329, 0.0
    %v344 = vmax.f32 %v331, 0.0
    %v345 = vmax.f32 %v204, 0.0
    %v346 = vmax.f32 %v206, 0.0
    %v347 = vmax.f32 %v247, 0.0
    %v348 = vmax.f32 %v249, 0.0
    %v349 = vmax.f32 %v290, 0.0
    %v350 = vmax.f32 %v292, 0.0
    %v351 = vmax.f32 %v333, 0.0
    %v352 = vmax.f32 %v335, 0.0
    %v353 = vpack.c.bf16 %v345, %v337
    %v354 = vpack.c.bf16 %v346, %v338
    %v355 = vpack.c.bf16 %v347, %v339
    %v356 = vpack.c.bf16 %v348, %v340
    %v357 = vpack.c.bf16 %v349, %v341
    %v358 = vpack.c.bf16 %v350, %v342
    %v359 = vpack.c.bf16 %v351, %v343
    %v360 = vpack.c.bf16 %v352, %v344
    %v361 = vld [vmem:[#allocation5] sm:$0xff]
    %v362 = vld [vmem:[#allocation5 + $0x8] sm:$0xff]
    %v363 = vld [vmem:[#allocation5 + $0x10] sm:$0xff]
    %v364 = vld [vmem:[#allocation5 + $0x18] sm:$0xff]
    %v365 = vld [vmem:[#allocation5 + $0x20] sm:$0xff]
    %v366 = vld [vmem:[#allocation5 + $0x28] sm:$0xff]
    %v367 = vld [vmem:[#allocation5 + $0x30] sm:$0xff]
    %v368 = vld [vmem:[#allocation5 + $0x38] sm:$0xff]
    %v369 = vld [vmem:[#allocation5 + $0x40] sm:$0xff]
    %v370 = vld [vmem:[#allocation5 + $0x48] sm:$0xff]
    %v371 = vld [vmem:[#allocation5 + $0x50] sm:$0xff]
    %v372 = vld [vmem:[#allocation5 + $0x58] sm:$0xff]
    %v373 = vld [vmem:[#allocation5 + $0x60] sm:$0xff]
    %v374 = vld [vmem:[#allocation5 + $0x68] sm:$0xff]
    %v375 = vld [vmem:[#allocation5 + $0x70] sm:$0xff]
    %v376 = vld [vmem:[#allocation5 + $0x78] sm:$0xff]
    %v377 = vld [vmem:[#allocation5 + $0x80] sm:$0xff]
    %v378 = vld [vmem:[#allocation5 + $0x88] sm:$0xff]
    %v379 = vld [vmem:[#allocation5 + $0x90] sm:$0xff]
    %v380 = vld [vmem:[#allocation5 + $0x98] sm:$0xff]
    %v381 = vld [vmem:[#allocation5 + $0xa0] sm:$0xff]
    %v382 = vld [vmem:[#allocation5 + $0xa8] sm:$0xff]
    %v383 = vld [vmem:[#allocation5 + $0xb0] sm:$0xff]
    %v384 = vld [vmem:[#allocation5 + $0xb8] sm:$0xff]
    %v385 = vld [vmem:[#allocation5 + $0xc0] sm:$0xff]
    %v386 = vld [vmem:[#allocation5 + $0xc8] sm:$0xff]
    %v387 = vld [vmem:[#allocation5 + $0xd0] sm:$0xff]
    %v388 = vld [vmem:[#allocation5 + $0xd8] sm:$0xff]
    %v389 = vld [vmem:[#allocation5 + $0xe0] sm:$0xff]
    %v390 = vld [vmem:[#allocation5 + $0xe8] sm:$0xff]
    %v391 = vld [vmem:[#allocation5 + $0xf0] sm:$0xff]
    %v392 = vld [vmem:[#allocation5 + $0xf8] sm:$0xff]
    %v393 = vld [vmem:[#allocation5 + $0x100] sm:$0xff]
    %v394 = vld [vmem:[#allocation5 + $0x108] sm:$0xff]
    %v395 = vld [vmem:[#allocation5 + $0x110] sm:$0xff]
    %v396 = vld [vmem:[#allocation5 + $0x118] sm:$0xff]
    %v397 = vld [vmem:[#allocation5 + $0x120] sm:$0xff]
    %v398 = vld [vmem:[#allocation5 + $0x128] sm:$0xff]
    %v399 = vld [vmem:[#allocation5 + $0x130] sm:$0xff]
    %v400 = vld [vmem:[#allocation5 + $0x138] sm:$0xff]
    %v401 = vld [vmem:[#allocation5 + $0x140] sm:$0xff]
    %v402 = vld [vmem:[#allocation5 + $0x148] sm:$0xff]
    %v403 = vld [vmem:[#allocation5 + $0x150] sm:$0xff]
    %v404 = vld [vmem:[#allocation5 + $0x158] sm:$0xff]
    %v405 = vld [vmem:[#allocation5 + $0x160] sm:$0xff]
    %v406 = vld [vmem:[#allocation5 + $0x168] sm:$0xff]
    %v407 = vld [vmem:[#allocation5 + $0x170] sm:$0xff]
    %v408 = vld [vmem:[#allocation5 + $0x178] sm:$0xff]
    %v409 = vld [vmem:[#allocation5 + $0x180] sm:$0xff]
    %v410 = vld [vmem:[#allocation5 + $0x188] sm:$0xff]
    %v411 = vld [vmem:[#allocation5 + $0x190] sm:$0xff]
    %v412 = vld [vmem:[#allocation5 + $0x198] sm:$0xff]
    %v413 = vld [vmem:[#allocation5 + $0x1a0] sm:$0xff]
    %v414 = vld [vmem:[#allocation5 + $0x1a8] sm:$0xff]
    %v415 = vld [vmem:[#allocation5 + $0x1b0] sm:$0xff]
    %v416 = vld [vmem:[#allocation5 + $0x1b8] sm:$0xff]
    %v417 = vld [vmem:[#allocation5 + $0x1c0] sm:$0xff]
    %v418 = vld [vmem:[#allocation5 + $0x1c8] sm:$0xff]
    %v419 = vld [vmem:[#allocation5 + $0x1d0] sm:$0xff]
    %v420 = vld [vmem:[#allocation5 + $0x1d8] sm:$0xff]
    %v421 = vld [vmem:[#allocation5 + $0x1e0] sm:$0xff]
    %v422 = vld [vmem:[#allocation5 + $0x1e8] sm:$0xff]
    %v423 = vld [vmem:[#allocation5 + $0x1f0] sm:$0xff]
    %v424 = vld [vmem:[#allocation5 + $0x1f8] sm:$0xff]
    %v425 = vld [vmem:[#allocation5 + $0x200] sm:$0xff]
    %v426 = vld [vmem:[#allocation5 + $0x208] sm:$0xff]
    %v427 = vld [vmem:[#allocation5 + $0x210] sm:$0xff]
    %v428 = vld [vmem:[#allocation5 + $0x218] sm:$0xff]
    %v429 = vld [vmem:[#allocation5 + $0x220] sm:$0xff]
    %v430 = vld [vmem:[#allocation5 + $0x228] sm:$0xff]
    %v431 = vld [vmem:[#allocation5 + $0x230] sm:$0xff]
    %v432 = vld [vmem:[#allocation5 + $0x238] sm:$0xff]
    %v433 = vld [vmem:[#allocation5 + $0x240] sm:$0xff]
    %v434 = vld [vmem:[#allocation5 + $0x248] sm:$0xff]
    %v435 = vld [vmem:[#allocation5 + $0x250] sm:$0xff]
    %v436 = vld [vmem:[#allocation5 + $0x258] sm:$0xff]
    %v437 = vld [vmem:[#allocation5 + $0x260] sm:$0xff]
    %v438 = vld [vmem:[#allocation5 + $0x268] sm:$0xff]
    %v439 = vld [vmem:[#allocation5 + $0x270] sm:$0xff]
    %v440 = vld [vmem:[#allocation5 + $0x278] sm:$0xff]
    %v441 = vld [vmem:[#allocation5 + $0x280] sm:$0xff]
    %v442 = vld [vmem:[#allocation5 + $0x288] sm:$0xff]
    %v443 = vld [vmem:[#allocation5 + $0x290] sm:$0xff]
    %v444 = vld [vmem:[#allocation5 + $0x298] sm:$0xff]
    %v445 = vld [vmem:[#allocation5 + $0x2a0] sm:$0xff]
    %v446 = vld [vmem:[#allocation5 + $0x2a8] sm:$0xff]
    %v447 = vld [vmem:[#allocation5 + $0x2b0] sm:$0xff]
    %v448 = vld [vmem:[#allocation5 + $0x2b8] sm:$0xff]
    %v449 = vld [vmem:[#allocation5 + $0x2c0] sm:$0xff]
    %v450 = vld [vmem:[#allocation5 + $0x2c8] sm:$0xff]
    %v451 = vld [vmem:[#allocation5 + $0x2d0] sm:$0xff]
    %v452 = vld [vmem:[#allocation5 + $0x2d8] sm:$0xff]
    %v453 = vld [vmem:[#allocation5 + $0x2e0] sm:$0xff]
    %v454 = vld [vmem:[#allocation5 + $0x2e8] sm:$0xff]
    %v455 = vld [vmem:[#allocation5 + $0x2f0] sm:$0xff]
    %v456 = vld [vmem:[#allocation5 + $0x2f8] sm:$0xff]
    %v457 = vld [vmem:[#allocation5 + $0x300] sm:$0xff]
    %v458 = vld [vmem:[#allocation5 + $0x308] sm:$0xff]
    %v459 = vld [vmem:[#allocation5 + $0x310] sm:$0xff]
    %v460 = vld [vmem:[#allocation5 + $0x318] sm:$0xff]
    %v461 = vld [vmem:[#allocation5 + $0x320] sm:$0xff]
    %v462 = vld [vmem:[#allocation5 + $0x328] sm:$0xff]
    %v463 = vld [vmem:[#allocation5 + $0x330] sm:$0xff]
    %v464 = vld [vmem:[#allocation5 + $0x338] sm:$0xff]
    %v465 = vld [vmem:[#allocation5 + $0x340] sm:$0xff]
    %v466 = vld [vmem:[#allocation5 + $0x348] sm:$0xff]
    %v467 = vld [vmem:[#allocation5 + $0x350] sm:$0xff]
    %v468 = vld [vmem:[#allocation5 + $0x358] sm:$0xff]
    %v469 = vld [vmem:[#allocation5 + $0x360] sm:$0xff]
    %v470 = vld [vmem:[#allocation5 + $0x368] sm:$0xff]
    %v471 = vld [vmem:[#allocation5 + $0x370] sm:$0xff]
    %v472 = vld [vmem:[#allocation5 + $0x378] sm:$0xff]
    %v473 = vld [vmem:[#allocation5 + $0x380] sm:$0xff]
    %v474 = vld [vmem:[#allocation5 + $0x388] sm:$0xff]
    %v475 = vld [vmem:[#allocation5 + $0x390] sm:$0xff]
    %v476 = vld [vmem:[#allocation5 + $0x398] sm:$0xff]
    %v477 = vld [vmem:[#allocation5 + $0x3a0] sm:$0xff]
    %v478 = vld [vmem:[#allocation5 + $0x3a8] sm:$0xff]
    %v479 = vld [vmem:[#allocation5 + $0x3b0] sm:$0xff]
    %v480 = vld [vmem:[#allocation5 + $0x3b8] sm:$0xff]
    %v481 = vld [vmem:[#allocation5 + $0x3c0] sm:$0xff]
    %v482 = vld [vmem:[#allocation5 + $0x3c8] sm:$0xff]
    %v483 = vld [vmem:[#allocation5 + $0x3d0] sm:$0xff]
    %v484 = vld [vmem:[#allocation5 + $0x3d8] sm:$0xff]
    %v485 = vld [vmem:[#allocation5 + $0x3e0] sm:$0xff]
    %v486 = vld [vmem:[#allocation5 + $0x3e8] sm:$0xff]
    %v487 = vld [vmem:[#allocation5 + $0x3f0] sm:$0xff]
    %v488 = vld [vmem:[#allocation5 + $0x3f8] sm:$0xff]
    %v489 = vld [vmem:[#allocation5 + $0x400] sm:$0xff]
    %v490 = vld [vmem:[#allocation5 + $0x408] sm:$0xff]
    %v491 = vld [vmem:[#allocation5 + $0x410] sm:$0xff]
    %v492 = vld [vmem:[#allocation5 + $0x418] sm:$0xff]
    %v493 = vld [vmem:[#allocation5 + $0x420] sm:$0xff]
    %v494 = vld [vmem:[#allocation5 + $0x428] sm:$0xff]
    %v495 = vld [vmem:[#allocation5 + $0x430] sm:$0xff]
    %v496 = vld [vmem:[#allocation5 + $0x438] sm:$0xff]
    %v497 = vld [vmem:[#allocation5 + $0x440] sm:$0xff]
    %v498 = vld [vmem:[#allocation5 + $0x448] sm:$0xff]
    %v499 = vld [vmem:[#allocation5 + $0x450] sm:$0xff]
    %v500 = vld [vmem:[#allocation5 + $0x458] sm:$0xff]
    %v501 = vld [vmem:[#allocation5 + $0x460] sm:$0xff]
    %v502 = vld [vmem:[#allocation5 + $0x468] sm:$0xff]
    %v503 = vld [vmem:[#allocation5 + $0x470] sm:$0xff]
    %v504 = vld [vmem:[#allocation5 + $0x478] sm:$0xff]
    %v505 = vld [vmem:[#allocation5 + $0x480] sm:$0xff]
    %v506 = vld [vmem:[#allocation5 + $0x488] sm:$0xff]
    %v507 = vld [vmem:[#allocation5 + $0x490] sm:$0xff]
    %v508 = vld [vmem:[#allocation5 + $0x498] sm:$0xff]
    %v509 = vld [vmem:[#allocation5 + $0x4a0] sm:$0xff]
    %v510 = vld [vmem:[#allocation5 + $0x4a8] sm:$0xff]
    %v511 = vld [vmem:[#allocation5 + $0x4b0] sm:$0xff]
    %v512 = vld [vmem:[#allocation5 + $0x4b8] sm:$0xff]
    %v513 = vld [vmem:[#allocation5 + $0x4c0] sm:$0xff]
    %v514 = vld [vmem:[#allocation5 + $0x4c8] sm:$0xff]
    %v515 = vld [vmem:[#allocation5 + $0x4d0] sm:$0xff]
    %v516 = vld [vmem:[#allocation5 + $0x4d8] sm:$0xff]
    %v517 = vld [vmem:[#allocation5 + $0x4e0] sm:$0xff]
    %v518 = vld [vmem:[#allocation5 + $0x4e8] sm:$0xff]
    %v519 = vld [vmem:[#allocation5 + $0x4f0] sm:$0xff]
    %v520 = vld [vmem:[#allocation5 + $0x4f8] sm:$0xff]
    %v521 = vld [vmem:[#allocation5 + $0x500] sm:$0xff]
    %v522 = vld [vmem:[#allocation5 + $0x508] sm:$0xff]
    %v523 = vld [vmem:[#allocation5 + $0x510] sm:$0xff]
    %v524 = vld [vmem:[#allocation5 + $0x518] sm:$0xff]
    %v525 = vld [vmem:[#allocation5 + $0x520] sm:$0xff]
    %v526 = vld [vmem:[#allocation5 + $0x528] sm:$0xff]
    %v527 = vld [vmem:[#allocation5 + $0x530] sm:$0xff]
    %v528 = vld [vmem:[#allocation5 + $0x538] sm:$0xff]
    %v529 = vld [vmem:[#allocation5 + $0x540] sm:$0xff]
    %v530 = vld [vmem:[#allocation5 + $0x548] sm:$0xff]
    %v531 = vld [vmem:[#allocation5 + $0x550] sm:$0xff]
    %v532 = vld [vmem:[#allocation5 + $0x558] sm:$0xff]
    %v533 = vld [vmem:[#allocation5 + $0x560] sm:$0xff]
    %v534 = vld [vmem:[#allocation5 + $0x568] sm:$0xff]
    %v535 = vld [vmem:[#allocation5 + $0x570] sm:$0xff]
    %v536 = vld [vmem:[#allocation5 + $0x578] sm:$0xff]
    %v537 = vld [vmem:[#allocation5 + $0x580] sm:$0xff]
    %v538 = vld [vmem:[#allocation5 + $0x588] sm:$0xff]
    %v539 = vld [vmem:[#allocation5 + $0x590] sm:$0xff]
    %v540 = vld [vmem:[#allocation5 + $0x598] sm:$0xff]
    %v541 = vld [vmem:[#allocation5 + $0x5a0] sm:$0xff]
    %v542 = vld [vmem:[#allocation5 + $0x5a8] sm:$0xff]
    %v543 = vld [vmem:[#allocation5 + $0x5b0] sm:$0xff]
    %v544 = vld [vmem:[#allocation5 + $0x5b8] sm:$0xff]
    %v545 = vld [vmem:[#allocation5 + $0x5c0] sm:$0xff]
    %v546 = vld [vmem:[#allocation5 + $0x5c8] sm:$0xff]
    %v547 = vld [vmem:[#allocation5 + $0x5d0] sm:$0xff]
    %v548 = vld [vmem:[#allocation5 + $0x5d8] sm:$0xff]
    %v549 = vld [vmem:[#allocation5 + $0x5e0] sm:$0xff]
    %v550 = vld [vmem:[#allocation5 + $0x5e8] sm:$0xff]
    %v551 = vld [vmem:[#allocation5 + $0x5f0] sm:$0xff]
    %v552 = vld [vmem:[#allocation5 + $0x5f8] sm:$0xff]
    %v553 = vld [vmem:[#allocation5 + $0x600] sm:$0xff]
    %v554 = vld [vmem:[#allocation5 + $0x608] sm:$0xff]
    %v555 = vld [vmem:[#allocation5 + $0x610] sm:$0xff]
    %v556 = vld [vmem:[#allocation5 + $0x618] sm:$0xff]
    %v557 = vld [vmem:[#allocation5 + $0x620] sm:$0xff]
    %v558 = vld [vmem:[#allocation5 + $0x628] sm:$0xff]
    %v559 = vld [vmem:[#allocation5 + $0x630] sm:$0xff]
    %v560 = vld [vmem:[#allocation5 + $0x638] sm:$0xff]
    %v561 = vld [vmem:[#allocation5 + $0x640] sm:$0xff]
    %v562 = vld [vmem:[#allocation5 + $0x648] sm:$0xff]
    %v563 = vld [vmem:[#allocation5 + $0x650] sm:$0xff]
    %v564 = vld [vmem:[#allocation5 + $0x658] sm:$0xff]
    %v565 = vld [vmem:[#allocation5 + $0x660] sm:$0xff]
    %v566 = vld [vmem:[#allocation5 + $0x668] sm:$0xff]
    %v567 = vld [vmem:[#allocation5 + $0x670] sm:$0xff]
    %v568 = vld [vmem:[#allocation5 + $0x678] sm:$0xff]
    %v569 = vld [vmem:[#allocation5 + $0x680] sm:$0xff]
    %v570 = vld [vmem:[#allocation5 + $0x688] sm:$0xff]
    %v571 = vld [vmem:[#allocation5 + $0x690] sm:$0xff]
    %v572 = vld [vmem:[#allocation5 + $0x698] sm:$0xff]
    %v573 = vld [vmem:[#allocation5 + $0x6a0] sm:$0xff]
    %v574 = vld [vmem:[#allocation5 + $0x6a8] sm:$0xff]
    %v575 = vld [vmem:[#allocation5 + $0x6b0] sm:$0xff]
    %v576 = vld [vmem:[#allocation5 + $0x6b8] sm:$0xff]
    %v577 = vld [vmem:[#allocation5 + $0x6c0] sm:$0xff]
    %v578 = vld [vmem:[#allocation5 + $0x6c8] sm:$0xff]
    %v579 = vld [vmem:[#allocation5 + $0x6d0] sm:$0xff]
    %v580 = vld [vmem:[#allocation5 + $0x6d8] sm:$0xff]
    %v581 = vld [vmem:[#allocation5 + $0x6e0] sm:$0xff]
    %v582 = vld [vmem:[#allocation5 + $0x6e8] sm:$0xff]
    %v583 = vld [vmem:[#allocation5 + $0x6f0] sm:$0xff]
    %v584 = vld [vmem:[#allocation5 + $0x6f8] sm:$0xff]
    %v585 = vld [vmem:[#allocation5 + $0x700] sm:$0xff]
    %v586 = vld [vmem:[#allocation5 + $0x708] sm:$0xff]
    %v587 = vld [vmem:[#allocation5 + $0x710] sm:$0xff]
    %v588 = vld [vmem:[#allocation5 + $0x718] sm:$0xff]
    %v589 = vld [vmem:[#allocation5 + $0x720] sm:$0xff]
    %v590 = vld [vmem:[#allocation5 + $0x728] sm:$0xff]
    %v591 = vld [vmem:[#allocation5 + $0x730] sm:$0xff]
    %v592 = vld [vmem:[#allocation5 + $0x738] sm:$0xff]
    %v593 = vld [vmem:[#allocation5 + $0x740] sm:$0xff]
    %v594 = vld [vmem:[#allocation5 + $0x748] sm:$0xff]
    %v595 = vld [vmem:[#allocation5 + $0x750] sm:$0xff]
    %v596 = vld [vmem:[#allocation5 + $0x758] sm:$0xff]
    %v597 = vld [vmem:[#allocation5 + $0x760] sm:$0xff]
    %v598 = vld [vmem:[#allocation5 + $0x768] sm:$0xff]
    %v599 = vld [vmem:[#allocation5 + $0x770] sm:$0xff]
    %v600 = vld [vmem:[#allocation5 + $0x778] sm:$0xff]
    %v601 = vld [vmem:[#allocation5 + $0x780] sm:$0xff]
    %v602 = vld [vmem:[#allocation5 + $0x788] sm:$0xff]
    %v603 = vld [vmem:[#allocation5 + $0x790] sm:$0xff]
    %v604 = vld [vmem:[#allocation5 + $0x798] sm:$0xff]
    %v605 = vld [vmem:[#allocation5 + $0x7a0] sm:$0xff]
    %v606 = vld [vmem:[#allocation5 + $0x7a8] sm:$0xff]
    %v607 = vld [vmem:[#allocation5 + $0x7b0] sm:$0xff]
    %v608 = vld [vmem:[#allocation5 + $0x7b8] sm:$0xff]
    %v609 = vld [vmem:[#allocation5 + $0x7c0] sm:$0xff]
    %v610 = vld [vmem:[#allocation5 + $0x7c8] sm:$0xff]
    %v611 = vld [vmem:[#allocation5 + $0x7d0] sm:$0xff]
    %v612 = vld [vmem:[#allocation5 + $0x7d8] sm:$0xff]
    %v613 = vld [vmem:[#allocation5 + $0x7e0] sm:$0xff]
    %v614 = vld [vmem:[#allocation5 + $0x7e8] sm:$0xff]
    %v615 = vld [vmem:[#allocation5 + $0x7f0] sm:$0xff]
    %v616 = vld [vmem:[#allocation5 + $0x7f8] sm:$0xff]
    %v617 = vld [vmem:[%s4] sm:$0xf]
    %v619 = vlaneseq
    %v620 = vshrl.u32 %v619, 7
    %v621 = vsub.s32 0, %v620
    %v622 = vrot.slane %v617, %v621
    %v623 = vlaneseq
    %v624 = vshrl.u32 %v623, 7
    %v625 = vsub.s32 1, %v624
    %v626 = vrot.slane %v617, %v625
    %v627 = vlaneseq
    %v628 = vshrl.u32 %v627, 7
    %v629 = vsub.s32 2, %v628
    %v630 = vrot.slane %v617, %v629
    %v631 = vlaneseq
    %v632 = vshrl.u32 %v631, 7
    %v633 = vsub.s32 3, %v632
    %v634 = vrot.slane %v617, %v633
    %v895 = vunpack.c.l.b16 %v361
    %v896 = vunpack.c.h.b16 %v361
    %v897 = vunpack.c.l.b16 %v362
    %v898 = vunpack.c.h.b16 %v362
    %v899 = vunpack.c.l.b16 %v363
    %v900 = vunpack.c.h.b16 %v363
    %v901 = vunpack.c.l.b16 %v364
    %v902 = vunpack.c.h.b16 %v364
    %v903 = vunpack.c.l.b16 %v365
    %v904 = vunpack.c.h.b16 %v365
    %v905 = vunpack.c.l.b16 %v366
    %v906 = vunpack.c.h.b16 %v366
    %v907 = vunpack.c.l.b16 %v367
    %v908 = vunpack.c.h.b16 %v367
    %v909 = vunpack.c.l.b16 %v368
    %v910 = vunpack.c.h.b16 %v368
    %v911 = vunpack.c.l.b16 %v369
    %v912 = vunpack.c.h.b16 %v369
    %v913 = vunpack.c.l.b16 %v370
    %v914 = vunpack.c.h.b16 %v370
    %v915 = vunpack.c.l.b16 %v371
    %v916 = vunpack.c.h.b16 %v371
    %v917 = vunpack.c.l.b16 %v372
    %v918 = vunpack.c.h.b16 %v372
    %v919 = vunpack.c.l.b16 %v373
    %v920 = vunpack.c.h.b16 %v373
    %v921 = vunpack.c.l.b16 %v374
    %v922 = vunpack.c.h.b16 %v374
    %v923 = vunpack.c.l.b16 %v375
    %v924 = vunpack.c.h.b16 %v375
    %v925 = vunpack.c.l.b16 %v376
    %v926 = vunpack.c.h.b16 %v376
    %v927 = vunpack.c.l.b16 %v377
    %v928 = vunpack.c.h.b16 %v377
    %v929 = vunpack.c.l.b16 %v378
    %v930 = vunpack.c.h.b16 %v378
    %v931 = vunpack.c.l.b16 %v379
    %v932 = vunpack.c.h.b16 %v379
    %v933 = vunpack.c.l.b16 %v380
    %v934 = vunpack.c.h.b16 %v380
    %v935 = vunpack.c.l.b16 %v381
    %v936 = vunpack.c.h.b16 %v381
    %v937 = vunpack.c.l.b16 %v382
    %v938 = vunpack.c.h.b16 %v382
    %v939 = vunpack.c.l.b16 %v383
    %v940 = vunpack.c.h.b16 %v383
    %v941 = vunpack.c.l.b16 %v384
    %v942 = vunpack.c.h.b16 %v384
    %v943 = vunpack.c.l.b16 %v385
    %v944 = vunpack.c.h.b16 %v385
    %v945 = vunpack.c.l.b16 %v386
    %v946 = vunpack.c.h.b16 %v386
    %v947 = vunpack.c.l.b16 %v387
    %v948 = vunpack.c.h.b16 %v387
    %v949 = vunpack.c.l.b16 %v388
    %v950 = vunpack.c.h.b16 %v388
    %v951 = vunpack.c.l.b16 %v389
    %v952 = vunpack.c.h.b16 %v389
    %v953 = vunpack.c.l.b16 %v390
    %v954 = vunpack.c.h.b16 %v390
    %v955 = vunpack.c.l.b16 %v391
    %v956 = vunpack.c.h.b16 %v391
    %v957 = vunpack.c.l.b16 %v392
    %v958 = vunpack.c.h.b16 %v392
    %v959 = vunpack.c.l.b16 %v393
    %v960 = vunpack.c.h.b16 %v393
    %v961 = vunpack.c.l.b16 %v394
    %v962 = vunpack.c.h.b16 %v394
    %v963 = vunpack.c.l.b16 %v395
    %v964 = vunpack.c.h.b16 %v395
    %v965 = vunpack.c.l.b16 %v396
    %v966 = vunpack.c.h.b16 %v396
    %v967 = vunpack.c.l.b16 %v397
    %v968 = vunpack.c.h.b16 %v397
    %v969 = vunpack.c.l.b16 %v398
    %v970 = vunpack.c.h.b16 %v398
    %v971 = vunpack.c.l.b16 %v399
    %v972 = vunpack.c.h.b16 %v399
    %v973 = vunpack.c.l.b16 %v400
    %v974 = vunpack.c.h.b16 %v400
    %v975 = vunpack.c.l.b16 %v401
    %v976 = vunpack.c.h.b16 %v401
    %v977 = vunpack.c.l.b16 %v402
    %v978 = vunpack.c.h.b16 %v402
    %v979 = vunpack.c.l.b16 %v403
    %v980 = vunpack.c.h.b16 %v403
    %v981 = vunpack.c.l.b16 %v404
    %v982 = vunpack.c.h.b16 %v404
    %v983 = vunpack.c.l.b16 %v405
    %v984 = vunpack.c.h.b16 %v405
    %v985 = vunpack.c.l.b16 %v406
    %v986 = vunpack.c.h.b16 %v406
    %v987 = vunpack.c.l.b16 %v407
    %v988 = vunpack.c.h.b16 %v407
    %v989 = vunpack.c.l.b16 %v408
    %v990 = vunpack.c.h.b16 %v408
    %v991 = vunpack.c.l.b16 %v409
    %v992 = vunpack.c.h.b16 %v409
    %v993 = vunpack.c.l.b16 %v410
    %v994 = vunpack.c.h.b16 %v410
    %v995 = vunpack.c.l.b16 %v411
    %v996 = vunpack.c.h.b16 %v411
    %v997 = vunpack.c.l.b16 %v412
    %v998 = vunpack.c.h.b16 %v412
    %v999 = vunpack.c.l.b16 %v413
    %v1000 = vunpack.c.h.b16 %v413
    %v1001 = vunpack.c.l.b16 %v414
    %v1002 = vunpack.c.h.b16 %v414
    %v1003 = vunpack.c.l.b16 %v415
    %v1004 = vunpack.c.h.b16 %v415
    %v1005 = vunpack.c.l.b16 %v416
    %v1006 = vunpack.c.h.b16 %v416
    %v1007 = vunpack.c.l.b16 %v417
    %v1008 = vunpack.c.h.b16 %v417
    %v1009 = vunpack.c.l.b16 %v418
    %v1010 = vunpack.c.h.b16 %v418
    %v1011 = vunpack.c.l.b16 %v419
    %v1012 = vunpack.c.h.b16 %v419
    %v1013 = vunpack.c.l.b16 %v420
    %v1014 = vunpack.c.h.b16 %v420
    %v1015 = vunpack.c.l.b16 %v421
    %v1016 = vunpack.c.h.b16 %v421
    %v1017 = vunpack.c.l.b16 %v422
    %v1018 = vunpack.c.h.b16 %v422
    %v1019 = vunpack.c.l.b16 %v423
    %v1020 = vunpack.c.h.b16 %v423
    %v1021 = vunpack.c.l.b16 %v424
    %v1022 = vunpack.c.h.b16 %v424
    %v1023 = vunpack.c.l.b16 %v425
    %v1024 = vunpack.c.h.b16 %v425
    %v1025 = vunpack.c.l.b16 %v426
    %v1026 = vunpack.c.h.b16 %v426
    %v1027 = vunpack.c.l.b16 %v427
    %v1028 = vunpack.c.h.b16 %v427
    %v1029 = vunpack.c.l.b16 %v428
    %v1030 = vunpack.c.h.b16 %v428
    %v1031 = vunpack.c.l.b16 %v429
    %v1032 = vunpack.c.h.b16 %v429
    %v1033 = vunpack.c.l.b16 %v430
    %v1034 = vunpack.c.h.b16 %v430
    %v1035 = vunpack.c.l.b16 %v431
    %v1036 = vunpack.c.h.b16 %v431
    %v1037 = vunpack.c.l.b16 %v432
    %v1038 = vunpack.c.h.b16 %v432
    %v1039 = vunpack.c.l.b16 %v433
    %v1040 = vunpack.c.h.b16 %v433
    %v1041 = vunpack.c.l.b16 %v434
    %v1042 = vunpack.c.h.b16 %v434
    %v1043 = vunpack.c.l.b16 %v435
    %v1044 = vunpack.c.h.b16 %v435
    %v1045 = vunpack.c.l.b16 %v436
    %v1046 = vunpack.c.h.b16 %v436
    %v1047 = vunpack.c.l.b16 %v437
    %v1048 = vunpack.c.h.b16 %v437
    %v1049 = vunpack.c.l.b16 %v438
    %v1050 = vunpack.c.h.b16 %v438
    %v1051 = vunpack.c.l.b16 %v439
    %v1052 = vunpack.c.h.b16 %v439
    %v1053 = vunpack.c.l.b16 %v440
    %v1054 = vunpack.c.h.b16 %v440
    %v1055 = vunpack.c.l.b16 %v441
    %v1056 = vunpack.c.h.b16 %v441
    %v1057 = vunpack.c.l.b16 %v442
    %v1058 = vunpack.c.h.b16 %v442
    %v1059 = vunpack.c.l.b16 %v443
    %v1060 = vunpack.c.h.b16 %v443
    %v1061 = vunpack.c.l.b16 %v444
    %v1062 = vunpack.c.h.b16 %v444
    %v1063 = vunpack.c.l.b16 %v445
    %v1064 = vunpack.c.h.b16 %v445
    %v1065 = vunpack.c.l.b16 %v446
    %v1066 = vunpack.c.h.b16 %v446
    %v1067 = vunpack.c.l.b16 %v447
    %v1068 = vunpack.c.h.b16 %v447
    %v1069 = vunpack.c.l.b16 %v448
    %v1070 = vunpack.c.h.b16 %v448
    %v1071 = vunpack.c.l.b16 %v449
    %v1072 = vunpack.c.h.b16 %v449
    %v1073 = vunpack.c.l.b16 %v450
    %v1074 = vunpack.c.h.b16 %v450
    %v1075 = vunpack.c.l.b16 %v451
    %v1076 = vunpack.c.h.b16 %v451
    %v1077 = vunpack.c.l.b16 %v452
    %v1078 = vunpack.c.h.b16 %v452
    %v1079 = vunpack.c.l.b16 %v453
    %v1080 = vunpack.c.h.b16 %v453
    %v1081 = vunpack.c.l.b16 %v454
    %v1082 = vunpack.c.h.b16 %v454
    %v1083 = vunpack.c.l.b16 %v455
    %v1084 = vunpack.c.h.b16 %v455
    %v1085 = vunpack.c.l.b16 %v456
    %v1086 = vunpack.c.h.b16 %v456
    %v1087 = vunpack.c.l.b16 %v457
    %v1088 = vunpack.c.h.b16 %v457
    %v1089 = vunpack.c.l.b16 %v458
    %v1090 = vunpack.c.h.b16 %v458
    %v1091 = vunpack.c.l.b16 %v459
    %v1092 = vunpack.c.h.b16 %v459
    %v1093 = vunpack.c.l.b16 %v460
    %v1094 = vunpack.c.h.b16 %v460
    %v1095 = vunpack.c.l.b16 %v461
    %v1096 = vunpack.c.h.b16 %v461
    %v1097 = vunpack.c.l.b16 %v462
    %v1098 = vunpack.c.h.b16 %v462
    %v1099 = vunpack.c.l.b16 %v463
    %v1100 = vunpack.c.h.b16 %v463
    %v1101 = vunpack.c.l.b16 %v464
    %v1102 = vunpack.c.h.b16 %v464
    %v1103 = vunpack.c.l.b16 %v465
    %v1104 = vunpack.c.h.b16 %v465
    %v1105 = vunpack.c.l.b16 %v466
    %v1106 = vunpack.c.h.b16 %v466
    %v1107 = vunpack.c.l.b16 %v467
    %v1108 = vunpack.c.h.b16 %v467
    %v1109 = vunpack.c.l.b16 %v468
    %v1110 = vunpack.c.h.b16 %v468
    %v1111 = vunpack.c.l.b16 %v469
    %v1112 = vunpack.c.h.b16 %v469
    %v1113 = vunpack.c.l.b16 %v470
    %v1114 = vunpack.c.h.b16 %v470
    %v1115 = vunpack.c.l.b16 %v471
    %v1116 = vunpack.c.h.b16 %v471
    %v1117 = vunpack.c.l.b16 %v472
    %v1118 = vunpack.c.h.b16 %v472
    %v1119 = vunpack.c.l.b16 %v473
    %v1120 = vunpack.c.h.b16 %v473
    %v1121 = vunpack.c.l.b16 %v474
    %v1122 = vunpack.c.h.b16 %v474
    %v1123 = vunpack.c.l.b16 %v475
    %v1124 = vunpack.c.h.b16 %v475
    %v1125 = vunpack.c.l.b16 %v476
    %v1126 = vunpack.c.h.b16 %v476
    %v1127 = vunpack.c.l.b16 %v477
    %v1128 = vunpack.c.h.b16 %v477
    %v1129 = vunpack.c.l.b16 %v478
    %v1130 = vunpack.c.h.b16 %v478
    %v1131 = vunpack.c.l.b16 %v479
    %v1132 = vunpack.c.h.b16 %v479
    %v1133 = vunpack.c.l.b16 %v480
    %v1134 = vunpack.c.h.b16 %v480
    %v1135 = vunpack.c.l.b16 %v481
    %v1136 = vunpack.c.h.b16 %v481
    %v1137 = vunpack.c.l.b16 %v482
    %v1138 = vunpack.c.h.b16 %v482
    %v1139 = vunpack.c.l.b16 %v483
    %v1140 = vunpack.c.h.b16 %v483
    %v1141 = vunpack.c.l.b16 %v484
    %v1142 = vunpack.c.h.b16 %v484
    %v1143 = vunpack.c.l.b16 %v485
    %v1144 = vunpack.c.h.b16 %v485
    %v1145 = vunpack.c.l.b16 %v486
    %v1146 = vunpack.c.h.b16 %v486
    %v1147 = vunpack.c.l.b16 %v487
    %v1148 = vunpack.c.h.b16 %v487
    %v1149 = vunpack.c.l.b16 %v488
    %v1150 = vunpack.c.h.b16 %v488
    %v1151 = vunpack.c.l.b16 %v489
    %v1152 = vunpack.c.h.b16 %v489
    %v1153 = vunpack.c.l.b16 %v490
    %v1154 = vunpack.c.h.b16 %v490
    %v1155 = vunpack.c.l.b16 %v491
    %v1156 = vunpack.c.h.b16 %v491
    %v1157 = vunpack.c.l.b16 %v492
    %v1158 = vunpack.c.h.b16 %v492
    %v1159 = vunpack.c.l.b16 %v493
    %v1160 = vunpack.c.h.b16 %v493
    %v1161 = vunpack.c.l.b16 %v494
    %v1162 = vunpack.c.h.b16 %v494
    %v1163 = vunpack.c.l.b16 %v495
    %v1164 = vunpack.c.h.b16 %v495
    %v1165 = vunpack.c.l.b16 %v496
    %v1166 = vunpack.c.h.b16 %v496
    %v1167 = vunpack.c.l.b16 %v497
    %v1168 = vunpack.c.h.b16 %v497
    %v1169 = vunpack.c.l.b16 %v498
    %v1170 = vunpack.c.h.b16 %v498
    %v1171 = vunpack.c.l.b16 %v499
    %v1172 = vunpack.c.h.b16 %v499
    %v1173 = vunpack.c.l.b16 %v500
    %v1174 = vunpack.c.h.b16 %v500
    %v1175 = vunpack.c.l.b16 %v501
    %v1176 = vunpack.c.h.b16 %v501
    %v1177 = vunpack.c.l.b16 %v502
    %v1178 = vunpack.c.h.b16 %v502
    %v1179 = vunpack.c.l.b16 %v503
    %v1180 = vunpack.c.h.b16 %v503
    %v1181 = vunpack.c.l.b16 %v504
    %v1182 = vunpack.c.h.b16 %v504
    %v1183 = vunpack.c.l.b16 %v505
    %v1184 = vunpack.c.h.b16 %v505
    %v1185 = vunpack.c.l.b16 %v506
    %v1186 = vunpack.c.h.b16 %v506
    %v1187 = vunpack.c.l.b16 %v507
    %v1188 = vunpack.c.h.b16 %v507
    %v1189 = vunpack.c.l.b16 %v508
    %v1190 = vunpack.c.h.b16 %v508
    %v1191 = vunpack.c.l.b16 %v509
    %v1192 = vunpack.c.h.b16 %v509
    %v1193 = vunpack.c.l.b16 %v510
    %v1194 = vunpack.c.h.b16 %v510
    %v1195 = vunpack.c.l.b16 %v511
    %v1196 = vunpack.c.h.b16 %v511
    %v1197 = vunpack.c.l.b16 %v512
    %v1198 = vunpack.c.h.b16 %v512
    %v1199 = vunpack.c.l.b16 %v513
    %v1200 = vunpack.c.h.b16 %v513
    %v1201 = vunpack.c.l.b16 %v514
    %v1202 = vunpack.c.h.b16 %v514
    %v1203 = vunpack.c.l.b16 %v515
    %v1204 = vunpack.c.h.b16 %v515
    %v1205 = vunpack.c.l.b16 %v516
    %v1206 = vunpack.c.h.b16 %v516
    %v1207 = vunpack.c.l.b16 %v517
    %v1208 = vunpack.c.h.b16 %v517
    %v1209 = vunpack.c.l.b16 %v518
    %v1210 = vunpack.c.h.b16 %v518
    %v1211 = vunpack.c.l.b16 %v519
    %v1212 = vunpack.c.h.b16 %v519
    %v1213 = vunpack.c.l.b16 %v520
    %v1214 = vunpack.c.h.b16 %v520
    %v1215 = vunpack.c.l.b16 %v521
    %v1216 = vunpack.c.h.b16 %v521
    %v1217 = vunpack.c.l.b16 %v522
    %v1218 = vunpack.c.h.b16 %v522
    %v1219 = vunpack.c.l.b16 %v523
    %v1220 = vunpack.c.h.b16 %v523
    %v1221 = vunpack.c.l.b16 %v524
    %v1222 = vunpack.c.h.b16 %v524
    %v1223 = vunpack.c.l.b16 %v525
    %v1224 = vunpack.c.h.b16 %v525
    %v1225 = vunpack.c.l.b16 %v526
    %v1226 = vunpack.c.h.b16 %v526
    %v1227 = vunpack.c.l.b16 %v527
    %v1228 = vunpack.c.h.b16 %v527
    %v1229 = vunpack.c.l.b16 %v528
    %v1230 = vunpack.c.h.b16 %v528
    %v1231 = vunpack.c.l.b16 %v529
    %v1232 = vunpack.c.h.b16 %v529
    %v1233 = vunpack.c.l.b16 %v530
    %v1234 = vunpack.c.h.b16 %v530
    %v1235 = vunpack.c.l.b16 %v531
    %v1236 = vunpack.c.h.b16 %v531
    %v1237 = vunpack.c.l.b16 %v532
    %v1238 = vunpack.c.h.b16 %v532
    %v1239 = vunpack.c.l.b16 %v533
    %v1240 = vunpack.c.h.b16 %v533
    %v1241 = vunpack.c.l.b16 %v534
    %v1242 = vunpack.c.h.b16 %v534
    %v1243 = vunpack.c.l.b16 %v535
    %v1244 = vunpack.c.h.b16 %v535
    %v1245 = vunpack.c.l.b16 %v536
    %v1246 = vunpack.c.h.b16 %v536
    %v1247 = vunpack.c.l.b16 %v537
    %v1248 = vunpack.c.h.b16 %v537
    %v1249 = vunpack.c.l.b16 %v538
    %v1250 = vunpack.c.h.b16 %v538
    %v1251 = vunpack.c.l.b16 %v539
    %v1252 = vunpack.c.h.b16 %v539
    %v1253 = vunpack.c.l.b16 %v540
    %v1254 = vunpack.c.h.b16 %v540
    %v1255 = vunpack.c.l.b16 %v541
    %v1256 = vunpack.c.h.b16 %v541
    %v1257 = vunpack.c.l.b16 %v542
    %v1258 = vunpack.c.h.b16 %v542
    %v1259 = vunpack.c.l.b16 %v543
    %v1260 = vunpack.c.h.b16 %v543
    %v1261 = vunpack.c.l.b16 %v544
    %v1262 = vunpack.c.h.b16 %v544
    %v1263 = vunpack.c.l.b16 %v545
    %v1264 = vunpack.c.h.b16 %v545
    %v1265 = vunpack.c.l.b16 %v546
    %v1266 = vunpack.c.h.b16 %v546
    %v1267 = vunpack.c.l.b16 %v547
    %v1268 = vunpack.c.h.b16 %v547
    %v1269 = vunpack.c.l.b16 %v548
    %v1270 = vunpack.c.h.b16 %v548
    %v1271 = vunpack.c.l.b16 %v549
    %v1272 = vunpack.c.h.b16 %v549
    %v1273 = vunpack.c.l.b16 %v550
    %v1274 = vunpack.c.h.b16 %v550
    %v1275 = vunpack.c.l.b16 %v551
    %v1276 = vunpack.c.h.b16 %v551
    %v1277 = vunpack.c.l.b16 %v552
    %v1278 = vunpack.c.h.b16 %v552
    %v1279 = vunpack.c.l.b16 %v553
    %v1280 = vunpack.c.h.b16 %v553
    %v1281 = vunpack.c.l.b16 %v554
    %v1282 = vunpack.c.h.b16 %v554
    %v1283 = vunpack.c.l.b16 %v555
    %v1284 = vunpack.c.h.b16 %v555
    %v1285 = vunpack.c.l.b16 %v556
    %v1286 = vunpack.c.h.b16 %v556
    %v1287 = vunpack.c.l.b16 %v557
    %v1288 = vunpack.c.h.b16 %v557
    %v1289 = vunpack.c.l.b16 %v558
    %v1290 = vunpack.c.h.b16 %v558
    %v1291 = vunpack.c.l.b16 %v559
    %v1292 = vunpack.c.h.b16 %v559
    %v1293 = vunpack.c.l.b16 %v560
    %v1294 = vunpack.c.h.b16 %v560
    %v1295 = vunpack.c.l.b16 %v561
    %v1296 = vunpack.c.h.b16 %v561
    %v1297 = vunpack.c.l.b16 %v562
    %v1298 = vunpack.c.h.b16 %v562
    %v1299 = vunpack.c.l.b16 %v563
    %v1300 = vunpack.c.h.b16 %v563
    %v1301 = vunpack.c.l.b16 %v564
    %v1302 = vunpack.c.h.b16 %v564
    %v1303 = vunpack.c.l.b16 %v565
    %v1304 = vunpack.c.h.b16 %v565
    %v1305 = vunpack.c.l.b16 %v566
    %v1306 = vunpack.c.h.b16 %v566
    %v1307 = vunpack.c.l.b16 %v567
    %v1308 = vunpack.c.h.b16 %v567
    %v1309 = vunpack.c.l.b16 %v568
    %v1310 = vunpack.c.h.b16 %v568
    %v1311 = vunpack.c.l.b16 %v569
    %v1312 = vunpack.c.h.b16 %v569
    %v1313 = vunpack.c.l.b16 %v570
    %v1314 = vunpack.c.h.b16 %v570
    %v1315 = vunpack.c.l.b16 %v571
    %v1316 = vunpack.c.h.b16 %v571
    %v1317 = vunpack.c.l.b16 %v572
    %v1318 = vunpack.c.h.b16 %v572
    %v1319 = vunpack.c.l.b16 %v573
    %v1320 = vunpack.c.h.b16 %v573
    %v1321 = vunpack.c.l.b16 %v574
    %v1322 = vunpack.c.h.b16 %v574
    %v1323 = vunpack.c.l.b16 %v575
    %v1324 = vunpack.c.h.b16 %v575
    %v1325 = vunpack.c.l.b16 %v576
    %v1326 = vunpack.c.h.b16 %v576
    %v1327 = vunpack.c.l.b16 %v577
    %v1328 = vunpack.c.h.b16 %v577
    %v1329 = vunpack.c.l.b16 %v578
    %v1330 = vunpack.c.h.b16 %v578
    %v1331 = vunpack.c.l.b16 %v579
    %v1332 = vunpack.c.h.b16 %v579
    %v1333 = vunpack.c.l.b16 %v580
    %v1334 = vunpack.c.h.b16 %v580
    %v1335 = vunpack.c.l.b16 %v581
    %v1336 = vunpack.c.h.b16 %v581
    %v1337 = vunpack.c.l.b16 %v582
    %v1338 = vunpack.c.h.b16 %v582
    %v1339 = vunpack.c.l.b16 %v583
    %v1340 = vunpack.c.h.b16 %v583
    %v1341 = vunpack.c.l.b16 %v584
    %v1342 = vunpack.c.h.b16 %v584
    %v1343 = vunpack.c.l.b16 %v585
    %v1344 = vunpack.c.h.b16 %v585
    %v1345 = vunpack.c.l.b16 %v586
    %v1346 = vunpack.c.h.b16 %v586
    %v1347 = vunpack.c.l.b16 %v587
    %v1348 = vunpack.c.h.b16 %v587
    %v1349 = vunpack.c.l.b16 %v588
    %v1350 = vunpack.c.h.b16 %v588
    %v1351 = vunpack.c.l.b16 %v589
    %v1352 = vunpack.c.h.b16 %v589
    %v1353 = vunpack.c.l.b16 %v590
    %v1354 = vunpack.c.h.b16 %v590
    %v1355 = vunpack.c.l.b16 %v591
    %v1356 = vunpack.c.h.b16 %v591
    %v1357 = vunpack.c.l.b16 %v592
    %v1358 = vunpack.c.h.b16 %v592
    %v1359 = vunpack.c.l.b16 %v593
    %v1360 = vunpack.c.h.b16 %v593
    %v1361 = vunpack.c.l.b16 %v594
    %v1362 = vunpack.c.h.b16 %v594
    %v1363 = vunpack.c.l.b16 %v595
    %v1364 = vunpack.c.h.b16 %v595
    %v1365 = vunpack.c.l.b16 %v596
    %v1366 = vunpack.c.h.b16 %v596
    %v1367 = vunpack.c.l.b16 %v597
    %v1368 = vunpack.c.h.b16 %v597
    %v1369 = vunpack.c.l.b16 %v598
    %v1370 = vunpack.c.h.b16 %v598
    %v1371 = vunpack.c.l.b16 %v599
    %v1372 = vunpack.c.h.b16 %v599
    %v1373 = vunpack.c.l.b16 %v600
    %v1374 = vunpack.c.h.b16 %v600
    %v1375 = vunpack.c.l.b16 %v601
    %v1376 = vunpack.c.h.b16 %v601
    %v1377 = vunpack.c.l.b16 %v602
    %v1378 = vunpack.c.h.b16 %v602
    %v1379 = vunpack.c.l.b16 %v603
    %v1380 = vunpack.c.h.b16 %v603
    %v1381 = vunpack.c.l.b16 %v604
    %v1382 = vunpack.c.h.b16 %v604
    %v1383 = vunpack.c.l.b16 %v605
    %v1384 = vunpack.c.h.b16 %v605
    %v1385 = vunpack.c.l.b16 %v606
    %v1386 = vunpack.c.h.b16 %v606
    %v1387 = vunpack.c.l.b16 %v607
    %v1388 = vunpack.c.h.b16 %v607
    %v1389 = vunpack.c.l.b16 %v608
    %v1390 = vunpack.c.h.b16 %v608
    %v1391 = vunpack.c.l.b16 %v609
    %v1392 = vunpack.c.h.b16 %v609
    %v1393 = vunpack.c.l.b16 %v610
    %v1394 = vunpack.c.h.b16 %v610
    %v1395 = vunpack.c.l.b16 %v611
    %v1396 = vunpack.c.h.b16 %v611
    %v1397 = vunpack.c.l.b16 %v612
    %v1398 = vunpack.c.h.b16 %v612
    %v1399 = vunpack.c.l.b16 %v613
    %v1400 = vunpack.c.h.b16 %v613
    %v1401 = vunpack.c.l.b16 %v614
    %v1402 = vunpack.c.h.b16 %v614
    %v1403 = vunpack.c.l.b16 %v615
    %v1404 = vunpack.c.h.b16 %v615
    %v1405 = vunpack.c.l.b16 %v616
    %v1406 = vunpack.c.h.b16 %v616
    %v1407 = vpack.c.b16 %v899, %v895
    %v1408 = vpack.c.b16 %v900, %v896
    %v1409 = vpack.c.b16 %v901, %v897
    %v1410 = vpack.c.b16 %v902, %v898
    %v1411 = vpack.c.b16 %v907, %v903
    %v1412 = vpack.c.b16 %v908, %v904
    %v1413 = vpack.c.b16 %v909, %v905
    %v1414 = vpack.c.b16 %v910, %v906
    %v1415 = vpack.c.b16 %v915, %v911
    %v1416 = vpack.c.b16 %v916, %v912
    %v1417 = vpack.c.b16 %v917, %v913
    %v1418 = vpack.c.b16 %v918, %v914
    %v1419 = vpack.c.b16 %v923, %v919
    %v1420 = vpack.c.b16 %v924, %v920
    %v1421 = vpack.c.b16 %v925, %v921
    %v1422 = vpack.c.b16 %v926, %v922
    %v1423 = vpack.c.b16 %v931, %v927
    %v1424 = vpack.c.b16 %v932, %v928
    %v1425 = vpack.c.b16 %v933, %v929
    %v1426 = vpack.c.b16 %v934, %v930
    %v1427 = vpack.c.b16 %v939, %v935
    %v1428 = vpack.c.b16 %v940, %v936
    %v1429 = vpack.c.b16 %v941, %v937
    %v1430 = vpack.c.b16 %v942, %v938
    %v1431 = vpack.c.b16 %v947, %v943
    %v1432 = vpack.c.b16 %v948, %v944
    %v1433 = vpack.c.b16 %v949, %v945
    %v1434 = vpack.c.b16 %v950, %v946
    %v1435 = vpack.c.b16 %v955, %v951
    %v1436 = vpack.c.b16 %v956, %v952
    %v1437 = vpack.c.b16 %v957, %v953
    %v1438 = vpack.c.b16 %v958, %v954
    %v1439 = vpack.c.b16 %v963, %v959
    %v1440 = vpack.c.b16 %v964, %v960
    %v1441 = vpack.c.b16 %v965, %v961
    %v1442 = vpack.c.b16 %v966, %v962
    %v1443 = vpack.c.b16 %v971, %v967
    %v1444 = vpack.c.b16 %v972, %v968
    %v1445 = vpack.c.b16 %v973, %v969
    %v1446 = vpack.c.b16 %v974, %v970
    %v1447 = vpack.c.b16 %v979, %v975
    %v1448 = vpack.c.b16 %v980, %v976
    %v1449 = vpack.c.b16 %v981, %v977
    %v1450 = vpack.c.b16 %v982, %v978
    %v1451 = vpack.c.b16 %v987, %v983
    %v1452 = vpack.c.b16 %v988, %v984
    %v1453 = vpack.c.b16 %v989, %v985
    %v1454 = vpack.c.b16 %v990, %v986
    %v1455 = vpack.c.b16 %v995, %v991
    %v1456 = vpack.c.b16 %v996, %v992
    %v1457 = vpack.c.b16 %v997, %v993
    %v1458 = vpack.c.b16 %v998, %v994
    %v1459 = vpack.c.b16 %v1003, %v999
    %v1460 = vpack.c.b16 %v1004, %v1000
    %v1461 = vpack.c.b16 %v1005, %v1001
    %v1462 = vpack.c.b16 %v1006, %v1002
    %v1463 = vpack.c.b16 %v1011, %v1007
    %v1464 = vpack.c.b16 %v1012, %v1008
    %v1465 = vpack.c.b16 %v1013, %v1009
    %v1466 = vpack.c.b16 %v1014, %v1010
    %v1467 = vpack.c.b16 %v1019, %v1015
    %v1468 = vpack.c.b16 %v1020, %v1016
    %v1469 = vpack.c.b16 %v1021, %v1017
    %v1470 = vpack.c.b16 %v1022, %v1018
    %v1471 = vpack.c.b16 %v1027, %v1023
    %v1472 = vpack.c.b16 %v1028, %v1024
    %v1473 = vpack.c.b16 %v1029, %v1025
    %v1474 = vpack.c.b16 %v1030, %v1026
    %v1475 = vpack.c.b16 %v1035, %v1031
    %v1476 = vpack.c.b16 %v1036, %v1032
    %v1477 = vpack.c.b16 %v1037, %v1033
    %v1478 = vpack.c.b16 %v1038, %v1034
    %v1479 = vpack.c.b16 %v1043, %v1039
    %v1480 = vpack.c.b16 %v1044, %v1040
    %v1481 = vpack.c.b16 %v1045, %v1041
    %v1482 = vpack.c.b16 %v1046, %v1042
    %v1483 = vpack.c.b16 %v1051, %v1047
    %v1484 = vpack.c.b16 %v1052, %v1048
    %v1485 = vpack.c.b16 %v1053, %v1049
    %v1486 = vpack.c.b16 %v1054, %v1050
    %v1487 = vpack.c.b16 %v1059, %v1055
    %v1488 = vpack.c.b16 %v1060, %v1056
    %v1489 = vpack.c.b16 %v1061, %v1057
    %v1490 = vpack.c.b16 %v1062, %v1058
    %v1491 = vpack.c.b16 %v1067, %v1063
    %v1492 = vpack.c.b16 %v1068, %v1064
    %v1493 = vpack.c.b16 %v1069, %v1065
    %v1494 = vpack.c.b16 %v1070, %v1066
    %v1495 = vpack.c.b16 %v1075, %v1071
    %v1496 = vpack.c.b16 %v1076, %v1072
    %v1497 = vpack.c.b16 %v1077, %v1073
    %v1498 = vpack.c.b16 %v1078, %v1074
    %v1499 = vpack.c.b16 %v1083, %v1079
    %v1500 = vpack.c.b16 %v1084, %v1080
    %v1501 = vpack.c.b16 %v1085, %v1081
    %v1502 = vpack.c.b16 %v1086, %v1082
    %v1503 = vpack.c.b16 %v1091, %v1087
    %v1504 = vpack.c.b16 %v1092, %v1088
    %v1505 = vpack.c.b16 %v1093, %v1089
    %v1506 = vpack.c.b16 %v1094, %v1090
    %v1507 = vpack.c.b16 %v1099, %v1095
    %v1508 = vpack.c.b16 %v1100, %v1096
    %v1509 = vpack.c.b16 %v1101, %v1097
    %v1510 = vpack.c.b16 %v1102, %v1098
    %v1511 = vpack.c.b16 %v1107, %v1103
    %v1512 = vpack.c.b16 %v1108, %v1104
    %v1513 = vpack.c.b16 %v1109, %v1105
    %v1514 = vpack.c.b16 %v1110, %v1106
    %v1515 = vpack.c.b16 %v1115, %v1111
    %v1516 = vpack.c.b16 %v1116, %v1112
    %v1517 = vpack.c.b16 %v1117, %v1113
    %v1518 = vpack.c.b16 %v1118, %v1114
    %v1519 = vpack.c.b16 %v1123, %v1119
    %v1520 = vpack.c.b16 %v1124, %v1120
    %v1521 = vpack.c.b16 %v1125, %v1121
    %v1522 = vpack.c.b16 %v1126, %v1122
    %v1523 = vpack.c.b16 %v1131, %v1127
    %v1524 = vpack.c.b16 %v1132, %v1128
    %v1525 = vpack.c.b16 %v1133, %v1129
    %v1526 = vpack.c.b16 %v1134, %v1130
    %v1527 = vpack.c.b16 %v1139, %v1135
    %v1528 = vpack.c.b16 %v1140, %v1136
    %v1529 = vpack.c.b16 %v1141, %v1137
    %v1530 = vpack.c.b16 %v1142, %v1138
    %v1531 = vpack.c.b16 %v1147, %v1143
    %v1532 = vpack.c.b16 %v1148, %v1144
    %v1533 = vpack.c.b16 %v1149, %v1145
    %v1534 = vpack.c.b16 %v1150, %v1146
    %v1535 = vpack.c.b16 %v1155, %v1151
    %v1536 = vpack.c.b16 %v1156, %v1152
    %v1537 = vpack.c.b16 %v1157, %v1153
    %v1538 = vpack.c.b16 %v1158, %v1154
    %v1539 = vpack.c.b16 %v1163, %v1159
    %v1540 = vpack.c.b16 %v1164, %v1160
    %v1541 = vpack.c.b16 %v1165, %v1161
    %v1542 = vpack.c.b16 %v1166, %v1162
    %v1543 = vpack.c.b16 %v1171, %v1167
    %v1544 = vpack.c.b16 %v1172, %v1168
    %v1545 = vpack.c.b16 %v1173, %v1169
    %v1546 = vpack.c.b16 %v1174, %v1170
    %v1547 = vpack.c.b16 %v1179, %v1175
    %v1548 = vpack.c.b16 %v1180, %v1176
    %v1549 = vpack.c.b16 %v1181, %v1177
    %v1550 = vpack.c.b16 %v1182, %v1178
    %v1551 = vpack.c.b16 %v1187, %v1183
    %v1552 = vpack.c.b16 %v1188, %v1184
    %v1553 = vpack.c.b16 %v1189, %v1185
    %v1554 = vpack.c.b16 %v1190, %v1186
    %v1555 = vpack.c.b16 %v1195, %v1191
    %v1556 = vpack.c.b16 %v1196, %v1192
    %v1557 = vpack.c.b16 %v1197, %v1193
    %v1558 = vpack.c.b16 %v1198, %v1194
    %v1559 = vpack.c.b16 %v1203, %v1199
    %v1560 = vpack.c.b16 %v1204, %v1200
    %v1561 = vpack.c.b16 %v1205, %v1201
    %v1562 = vpack.c.b16 %v1206, %v1202
    %v1563 = vpack.c.b16 %v1211, %v1207
    %v1564 = vpack.c.b16 %v1212, %v1208
    %v1565 = vpack.c.b16 %v1213, %v1209
    %v1566 = vpack.c.b16 %v1214, %v1210
    %v1567 = vpack.c.b16 %v1219, %v1215
    %v1568 = vpack.c.b16 %v1220, %v1216
    %v1569 = vpack.c.b16 %v1221, %v1217
    %v1570 = vpack.c.b16 %v1222, %v1218
    %v1571 = vpack.c.b16 %v1227, %v1223
    %v1572 = vpack.c.b16 %v1228, %v1224
    %v1573 = vpack.c.b16 %v1229, %v1225
    %v1574 = vpack.c.b16 %v1230, %v1226
    %v1575 = vpack.c.b16 %v1235, %v1231
    %v1576 = vpack.c.b16 %v1236, %v1232
    %v1577 = vpack.c.b16 %v1237, %v1233
    %v1578 = vpack.c.b16 %v1238, %v1234
    %v1579 = vpack.c.b16 %v1243, %v1239
    %v1580 = vpack.c.b16 %v1244, %v1240
    %v1581 = vpack.c.b16 %v1245, %v1241
    %v1582 = vpack.c.b16 %v1246, %v1242
    %v1583 = vpack.c.b16 %v1251, %v1247
    %v1584 = vpack.c.b16 %v1252, %v1248
    %v1585 = vpack.c.b16 %v1253, %v1249
    %v1586 = vpack.c.b16 %v1254, %v1250
    %v1587 = vpack.c.b16 %v1259, %v1255
    %v1588 = vpack.c.b16 %v1260, %v1256
    %v1589 = vpack.c.b16 %v1261, %v1257
    %v1590 = vpack.c.b16 %v1262, %v1258
    %v1591 = vpack.c.b16 %v1267, %v1263
    %v1592 = vpack.c.b16 %v1268, %v1264
    %v1593 = vpack.c.b16 %v1269, %v1265
    %v1594 = vpack.c.b16 %v1270, %v1266
    %v1595 = vpack.c.b16 %v1275, %v1271
    %v1596 = vpack.c.b16 %v1276, %v1272
    %v1597 = vpack.c.b16 %v1277, %v1273
    %v1598 = vpack.c.b16 %v1278, %v1274
    %v1599 = vpack.c.b16 %v1283, %v1279
    %v1600 = vpack.c.b16 %v1284, %v1280
    %v1601 = vpack.c.b16 %v1285, %v1281
    %v1602 = vpack.c.b16 %v1286, %v1282
    %v1603 = vpack.c.b16 %v1291, %v1287
    %v1604 = vpack.c.b16 %v1292, %v1288
    %v1605 = vpack.c.b16 %v1293, %v1289
    %v1606 = vpack.c.b16 %v1294, %v1290
    %v1607 = vpack.c.b16 %v1299, %v1295
    %v1608 = vpack.c.b16 %v1300, %v1296
    %v1609 = vpack.c.b16 %v1301, %v1297
    %v1610 = vpack.c.b16 %v1302, %v1298
    %v1611 = vpack.c.b16 %v1307, %v1303
    %v1612 = vpack.c.b16 %v1308, %v1304
    %v1613 = vpack.c.b16 %v1309, %v1305
    %v1614 = vpack.c.b16 %v1310, %v1306
    %v1615 = vpack.c.b16 %v1315, %v1311
    %v1616 = vpack.c.b16 %v1316, %v1312
    %v1617 = vpack.c.b16 %v1317, %v1313
    %v1618 = vpack.c.b16 %v1318, %v1314
    %v1619 = vpack.c.b16 %v1323, %v1319
    %v1620 = vpack.c.b16 %v1324, %v1320
    %v1621 = vpack.c.b16 %v1325, %v1321
    %v1622 = vpack.c.b16 %v1326, %v1322
    %v1623 = vpack.c.b16 %v1331, %v1327
    %v1624 = vpack.c.b16 %v1332, %v1328
    %v1625 = vpack.c.b16 %v1333, %v1329
    %v1626 = vpack.c.b16 %v1334, %v1330
    %v1627 = vpack.c.b16 %v1339, %v1335
    %v1628 = vpack.c.b16 %v1340, %v1336
    %v1629 = vpack.c.b16 %v1341, %v1337
    %v1630 = vpack.c.b16 %v1342, %v1338
    %v1631 = vpack.c.b16 %v1347, %v1343
    %v1632 = vpack.c.b16 %v1348, %v1344
    %v1633 = vpack.c.b16 %v1349, %v1345
    %v1634 = vpack.c.b16 %v1350, %v1346
    %v1635 = vpack.c.b16 %v1355, %v1351
    %v1636 = vpack.c.b16 %v1356, %v1352
    %v1637 = vpack.c.b16 %v1357, %v1353
    %v1638 = vpack.c.b16 %v1358, %v1354
    %v1639 = vpack.c.b16 %v1363, %v1359
    %v1640 = vpack.c.b16 %v1364, %v1360
    %v1641 = vpack.c.b16 %v1365, %v1361
    %v1642 = vpack.c.b16 %v1366, %v1362
    %v1643 = vpack.c.b16 %v1371, %v1367
    %v1644 = vpack.c.b16 %v1372, %v1368
    %v1645 = vpack.c.b16 %v1373, %v1369
    %v1646 = vpack.c.b16 %v1374, %v1370
    %v1647 = vpack.c.b16 %v1379, %v1375
    %v1648 = vpack.c.b16 %v1380, %v1376
    %v1649 = vpack.c.b16 %v1381, %v1377
    %v1650 = vpack.c.b16 %v1382, %v1378
    %v1651 = vpack.c.b16 %v1387, %v1383
    %v1652 = vpack.c.b16 %v1388, %v1384
    %v1653 = vpack.c.b16 %v1389, %v1385
    %v1654 = vpack.c.b16 %v1390, %v1386
    %v1655 = vpack.c.b16 %v1395, %v1391
    %v1656 = vpack.c.b16 %v1396, %v1392
    %v1657 = vpack.c.b16 %v1397, %v1393
    %v1658 = vpack.c.b16 %v1398, %v1394
    %v1659 = vpack.c.b16 %v1403, %v1399
    %v1660 = vpack.c.b16 %v1404, %v1400
    %v1661 = vpack.c.b16 %v1405, %v1401
    %v1662 = vpack.c.b16 %v1406, %v1402
    %1919 = vmatprep.subr.bf16.mxu0 %v1436
    %1920 = vmatpush1.bf16.msra.mxu0 %v1435
    %1921 = vmatprep.subr.bf16.mxu0 %v1432
    %1922 = vmatpush1.bf16.msra.mxu0 %v1431
    %1923 = vmatprep.subr.bf16.mxu0 %v1428
    %1924 = vmatpush1.bf16.msra.mxu0 %v1427
    %1925 = vmatprep.subr.bf16.mxu0 %v1424
    %1926 = vmatpush1.bf16.msra.mxu0 %v1423
    %1927 = vmatprep.subr.bf16.mxu0 %v1420
    %1928 = vmatpush1.bf16.msra.mxu0 %v1419
    %1929 = vmatprep.subr.bf16.mxu0 %v1416
    %1930 = vmatpush1.bf16.msra.mxu0 %v1415
    %1931 = vmatprep.subr.bf16.mxu0 %v1412
    %1932 = vmatpush1.bf16.msra.mxu0 %v1411
    %1933 = vmatprep.subr.bf16.mxu0 %v1408
    %1934 = vmatpush1.bf16.msra.mxu0 %v1407
    %1935 = vmatprep.subr.bf16.mxu0 %v1468
    %1936 = vmatpush2.bf16.msra.mxu0 %v1467
    %1937 = vmatprep.subr.bf16.mxu0 %v1464
    %1938 = vmatpush2.bf16.msra.mxu0 %v1463
    %1939 = vmatprep.subr.bf16.mxu0 %v1460
    %1940 = vmatpush2.bf16.msra.mxu0 %v1459
    %1941 = vmatprep.subr.bf16.mxu0 %v1456
    %1942 = vmatpush2.bf16.msra.mxu0 %v1455
    %1943 = vmatprep.subr.bf16.mxu0 %v1452
    %1944 = vmatpush2.bf16.msra.mxu0 %v1451
    %1945 = vmatprep.subr.bf16.mxu0 %v1448
    %1946 = vmatpush2.bf16.msra.mxu0 %v1447
    %1947 = vmatprep.subr.bf16.mxu0 %v1444
    %1948 = vmatpush2.bf16.msra.mxu0 %v1443
    %1949 = vmatprep.subr.bf16.mxu0 %v1440
    %1950 = vmatpush2.bf16.msra.mxu0 %v1439
    %1951 = vmatprep.mubr.bf16.mxu0 %v354
    %1952 = vmatmul.mubr.bf16.gmra.mxu0 %v353
    %v1953 = vpop.f32.mrf.mxu0
    %v1954 = vadd.f32 %v622, %v1953
    %v1955 = vpop.f32.mrf.mxu0
    %v1956 = vadd.f32 %v626, %v1955
    %v1957 = vpop.f32.mrf.mxu0
    %v1958 = vadd.f32 %v622, %v1957
    %v1959 = vpop.f32.mrf.mxu0
    %v1960 = vadd.f32 %v626, %v1959
    %1961 = vdwg.mxu0
    %1962 = vmatprep.subr.bf16.mxu0 %v1500
    %1963 = vmatpush1.bf16.msra.mxu0 %v1499
    %1964 = vmatprep.subr.bf16.mxu0 %v1496
    %1965 = vmatpush1.bf16.msra.mxu0 %v1495
    %1966 = vmatprep.subr.bf16.mxu0 %v1492
    %1967 = vmatpush1.bf16.msra.mxu0 %v1491
    %1968 = vmatprep.subr.bf16.mxu0 %v1488
    %1969 = vmatpush1.bf16.msra.mxu0 %v1487
    %1970 = vmatprep.subr.bf16.mxu0 %v1484
    %1971 = vmatpush1.bf16.msra.mxu0 %v1483
    %1972 = vmatprep.subr.bf16.mxu0 %v1480
    %1973 = vmatpush1.bf16.msra.mxu0 %v1479
    %1974 = vmatprep.subr.bf16.mxu0 %v1476
    %1975 = vmatpush1.bf16.msra.mxu0 %v1475
    %1976 = vmatprep.subr.bf16.mxu0 %v1472
    %1977 = vmatpush1.bf16.msra.mxu0 %v1471
    %1978 = vmatprep.subr.bf16.mxu0 %v1532
    %1979 = vmatpush2.bf16.msra.mxu0 %v1531
    %1980 = vmatprep.subr.bf16.mxu0 %v1528
    %1981 = vmatpush2.bf16.msra.mxu0 %v1527
    %1982 = vmatprep.subr.bf16.mxu0 %v1524
    %1983 = vmatpush2.bf16.msra.mxu0 %v1523
    %1984 = vmatprep.subr.bf16.mxu0 %v1520
    %1985 = vmatpush2.bf16.msra.mxu0 %v1519
    %1986 = vmatprep.subr.bf16.mxu0 %v1516
    %1987 = vmatpush2.bf16.msra.mxu0 %v1515
    %1988 = vmatprep.subr.bf16.mxu0 %v1512
    %1989 = vmatpush2.bf16.msra.mxu0 %v1511
    %1990 = vmatprep.subr.bf16.mxu0 %v1508
    %1991 = vmatpush2.bf16.msra.mxu0 %v1507
    %1992 = vmatprep.subr.bf16.mxu0 %v1504
    %1993 = vmatpush2.bf16.msra.mxu0 %v1503
    %1994 = vmatprep.mubr.bf16.mxu0 %v356
    %1995 = vmatmul.mubr.bf16.gmra.mxu0 %v355
    %v1996 = vpop.f32.mrf.mxu0
    %v1997 = vadd.f32 %v1954, %v1996
    %v1998 = vpop.f32.mrf.mxu0
    %v1999 = vadd.f32 %v1956, %v1998
    %v2000 = vpop.f32.mrf.mxu0
    %v2001 = vadd.f32 %v1958, %v2000
    %v2002 = vpop.f32.mrf.mxu0
    %v2003 = vadd.f32 %v1960, %v2002
    %2004 = vdwg.mxu0
    %2005 = vmatprep.subr.bf16.mxu0 %v1564
    %2006 = vmatpush1.bf16.msra.mxu0 %v1563
    %2007 = vmatprep.subr.bf16.mxu0 %v1560
    %2008 = vmatpush1.bf16.msra.mxu0 %v1559
    %2009 = vmatprep.subr.bf16.mxu0 %v1556
    %2010 = vmatpush1.bf16.msra.mxu0 %v1555
    %2011 = vmatprep.subr.bf16.mxu0 %v1552
    %2012 = vmatpush1.bf16.msra.mxu0 %v1551
    %2013 = vmatprep.subr.bf16.mxu0 %v1548
    %2014 = vmatpush1.bf16.msra.mxu0 %v1547
    %2015 = vmatprep.subr.bf16.mxu0 %v1544
    %2016 = vmatpush1.bf16.msra.mxu0 %v1543
    %2017 = vmatprep.subr.bf16.mxu0 %v1540
    %2018 = vmatpush1.bf16.msra.mxu0 %v1539
    %2019 = vmatprep.subr.bf16.mxu0 %v1536
    %2020 = vmatpush1.bf16.msra.mxu0 %v1535
    %2021 = vmatprep.subr.bf16.mxu0 %v1596
    %2022 = vmatpush2.bf16.msra.mxu0 %v1595
    %2023 = vmatprep.subr.bf16.mxu0 %v1592
    %2024 = vmatpush2.bf16.msra.mxu0 %v1591
    %2025 = vmatprep.subr.bf16.mxu0 %v1588
    %2026 = vmatpush2.bf16.msra.mxu0 %v1587
    %2027 = vmatprep.subr.bf16.mxu0 %v1584
    %2028 = vmatpush2.bf16.msra.mxu0 %v1583
    %2029 = vmatprep.subr.bf16.mxu0 %v1580
    %2030 = vmatpush2.bf16.msra.mxu0 %v1579
    %2031 = vmatprep.subr.bf16.mxu0 %v1576
    %2032 = vmatpush2.bf16.msra.mxu0 %v1575
    %2033 = vmatprep.subr.bf16.mxu0 %v1572
    %2034 = vmatpush2.bf16.msra.mxu0 %v1571
    %2035 = vmatprep.subr.bf16.mxu0 %v1568
    %2036 = vmatpush2.bf16.msra.mxu0 %v1567
    %2037 = vmatprep.mubr.bf16.mxu0 %v358
    %2038 = vmatmul.mubr.bf16.gmra.mxu0 %v357
    %v2039 = vpop.f32.mrf.mxu0
    %v2040 = vadd.f32 %v1997, %v2039
    %v2041 = vpop.f32.mrf.mxu0
    %v2042 = vadd.f32 %v1999, %v2041
    %v2043 = vpop.f32.mrf.mxu0
    %v2044 = vadd.f32 %v2001, %v2043
    %v2045 = vpop.f32.mrf.mxu0
    %v2046 = vadd.f32 %v2003, %v2045
    %2047 = vdwg.mxu0
    %2048 = vmatprep.subr.bf16.mxu0 %v1628
    %2049 = vmatpush1.bf16.msra.mxu0 %v1627
    %2050 = vmatprep.subr.bf16.mxu0 %v1624
    %2051 = vmatpush1.bf16.msra.mxu0 %v1623
    %2052 = vmatprep.subr.bf16.mxu0 %v1620
    %2053 = vmatpush1.bf16.msra.mxu0 %v1619
    %2054 = vmatprep.subr.bf16.mxu0 %v1616
    %2055 = vmatpush1.bf16.msra.mxu0 %v1615
    %2056 = vmatprep.subr.bf16.mxu0 %v1612
    %2057 = vmatpush1.bf16.msra.mxu0 %v1611
    %2058 = vmatprep.subr.bf16.mxu0 %v1608
    %2059 = vmatpush1.bf16.msra.mxu0 %v1607
    %2060 = vmatprep.subr.bf16.mxu0 %v1604
    %2061 = vmatpush1.bf16.msra.mxu0 %v1603
    %2062 = vmatprep.subr.bf16.mxu0 %v1600
    %2063 = vmatpush1.bf16.msra.mxu0 %v1599
    %2064 = vmatprep.subr.bf16.mxu0 %v1660
    %2065 = vmatpush2.bf16.msra.mxu0 %v1659
    %2066 = vmatprep.subr.bf16.mxu0 %v1656
    %2067 = vmatpush2.bf16.msra.mxu0 %v1655
    %2068 = vmatprep.subr.bf16.mxu0 %v1652
    %2069 = vmatpush2.bf16.msra.mxu0 %v1651
    %2070 = vmatprep.subr.bf16.mxu0 %v1648
    %2071 = vmatpush2.bf16.msra.mxu0 %v1647
    %2072 = vmatprep.subr.bf16.mxu0 %v1644
    %2073 = vmatpush2.bf16.msra.mxu0 %v1643
    %2074 = vmatprep.subr.bf16.mxu0 %v1640
    %2075 = vmatpush2.bf16.msra.mxu0 %v1639
    %2076 = vmatprep.subr.bf16.mxu0 %v1636
    %2077 = vmatpush2.bf16.msra.mxu0 %v1635
    %2078 = vmatprep.subr.bf16.mxu0 %v1632
    %2079 = vmatpush2.bf16.msra.mxu0 %v1631
    %2080 = vmatprep.mubr.bf16.mxu0 %v360
    %2081 = vmatmul.mubr.bf16.gmra.mxu0 %v359
    %v2082 = vpop.f32.mrf.mxu0
    %v2083 = vadd.f32 %v2040, %v2082
    %v2084 = vpop.f32.mrf.mxu0
    %v2085 = vadd.f32 %v2042, %v2084
    %v2086 = vpop.f32.mrf.mxu0
    %v2087 = vadd.f32 %v2044, %v2086
    %v2088 = vpop.f32.mrf.mxu0
    %v2089 = vadd.f32 %v2046, %v2088
    %2090 = vdwg.mxu0
    %2091 = vmatprep.subr.bf16.mxu0 %v1438
    %2092 = vmatpush1.bf16.msra.mxu0 %v1437
    %2093 = vmatprep.subr.bf16.mxu0 %v1434
    %2094 = vmatpush1.bf16.msra.mxu0 %v1433
    %2095 = vmatprep.subr.bf16.mxu0 %v1430
    %2096 = vmatpush1.bf16.msra.mxu0 %v1429
    %2097 = vmatprep.subr.bf16.mxu0 %v1426
    %2098 = vmatpush1.bf16.msra.mxu0 %v1425
    %2099 = vmatprep.subr.bf16.mxu0 %v1422
    %2100 = vmatpush1.bf16.msra.mxu0 %v1421
    %2101 = vmatprep.subr.bf16.mxu0 %v1418
    %2102 = vmatpush1.bf16.msra.mxu0 %v1417
    %2103 = vmatprep.subr.bf16.mxu0 %v1414
    %2104 = vmatpush1.bf16.msra.mxu0 %v1413
    %2105 = vmatprep.subr.bf16.mxu0 %v1410
    %2106 = vmatpush1.bf16.msra.mxu0 %v1409
    %2107 = vmatprep.subr.bf16.mxu0 %v1470
    %2108 = vmatpush2.bf16.msra.mxu0 %v1469
    %2109 = vmatprep.subr.bf16.mxu0 %v1466
    %2110 = vmatpush2.bf16.msra.mxu0 %v1465
    %2111 = vmatprep.subr.bf16.mxu0 %v1462
    %2112 = vmatpush2.bf16.msra.mxu0 %v1461
    %2113 = vmatprep.subr.bf16.mxu0 %v1458
    %2114 = vmatpush2.bf16.msra.mxu0 %v1457
    %2115 = vmatprep.subr.bf16.mxu0 %v1454
    %2116 = vmatpush2.bf16.msra.mxu0 %v1453
    %2117 = vmatprep.subr.bf16.mxu0 %v1450
    %2118 = vmatpush2.bf16.msra.mxu0 %v1449
    %2119 = vmatprep.subr.bf16.mxu0 %v1446
    %2120 = vmatpush2.bf16.msra.mxu0 %v1445
    %2121 = vmatprep.subr.bf16.mxu0 %v1442
    %2122 = vmatpush2.bf16.msra.mxu0 %v1441
    %2123 = vmatprep.mubr.bf16.mxu0 %v354
    %2124 = vmatmul.mubr.bf16.gmra.mxu0 %v353
    %v2125 = vpop.f32.mrf.mxu0
    %v2126 = vadd.f32 %v630, %v2125
    %v2127 = vpop.f32.mrf.mxu0
    %v2128 = vadd.f32 %v634, %v2127
    %v2129 = vpop.f32.mrf.mxu0
    %v2130 = vadd.f32 %v630, %v2129
    %v2131 = vpop.f32.mrf.mxu0
    %v2132 = vadd.f32 %v634, %v2131
    %2133 = vdwg.mxu0
    %2134 = vmatprep.subr.bf16.mxu0 %v1502
    %2135 = vmatpush1.bf16.msra.mxu0 %v1501
    %2136 = vmatprep.subr.bf16.mxu0 %v1498
    %2137 = vmatpush1.bf16.msra.mxu0 %v1497
    %2138 = vmatprep.subr.bf16.mxu0 %v1494
    %2139 = vmatpush1.bf16.msra.mxu0 %v1493
    %2140 = vmatprep.subr.bf16.mxu0 %v1490
    %2141 = vmatpush1.bf16.msra.mxu0 %v1489
    %2142 = vmatprep.subr.bf16.mxu0 %v1486
    %2143 = vmatpush1.bf16.msra.mxu0 %v1485
    %2144 = vmatprep.subr.bf16.mxu0 %v1482
    %2145 = vmatpush1.bf16.msra.mxu0 %v1481
    %2146 = vmatprep.subr.bf16.mxu0 %v1478
    %2147 = vmatpush1.bf16.msra.mxu0 %v1477
    %2148 = vmatprep.subr.bf16.mxu0 %v1474
    %2149 = vmatpush1.bf16.msra.mxu0 %v1473
    %2150 = vmatprep.subr.bf16.mxu0 %v1534
    %2151 = vmatpush2.bf16.msra.mxu0 %v1533
    %2152 = vmatprep.subr.bf16.mxu0 %v1530
    %2153 = vmatpush2.bf16.msra.mxu0 %v1529
    %2154 = vmatprep.subr.bf16.mxu0 %v1526
    %2155 = vmatpush2.bf16.msra.mxu0 %v1525
    %2156 = vmatprep.subr.bf16.mxu0 %v1522
    %2157 = vmatpush2.bf16.msra.mxu0 %v1521
    %2158 = vmatprep.subr.bf16.mxu0 %v1518
    %2159 = vmatpush2.bf16.msra.mxu0 %v1517
    %2160 = vmatprep.subr.bf16.mxu0 %v1514
    %2161 = vmatpush2.bf16.msra.mxu0 %v1513
    %2162 = vmatprep.subr.bf16.mxu0 %v1510
    %2163 = vmatpush2.bf16.msra.mxu0 %v1509
    %2164 = vmatprep.subr.bf16.mxu0 %v1506
    %2165 = vmatpush2.bf16.msra.mxu0 %v1505
    %2166 = vmatprep.mubr.bf16.mxu0 %v356
    %2167 = vmatmul.mubr.bf16.gmra.mxu0 %v355
    %v2168 = vpop.f32.mrf.mxu0
    %v2169 = vadd.f32 %v2126, %v2168
    %v2170 = vpop.f32.mrf.mxu0
    %v2171 = vadd.f32 %v2128, %v2170
    %v2172 = vpop.f32.mrf.mxu0
    %v2173 = vadd.f32 %v2130, %v2172
    %v2174 = vpop.f32.mrf.mxu0
    %v2175 = vadd.f32 %v2132, %v2174
    %2176 = vdwg.mxu0
    %2177 = vmatprep.subr.bf16.mxu0 %v1566
    %2178 = vmatpush1.bf16.msra.mxu0 %v1565
    %2179 = vmatprep.subr.bf16.mxu0 %v1562
    %2180 = vmatpush1.bf16.msra.mxu0 %v1561
    %2181 = vmatprep.subr.bf16.mxu0 %v1558
    %2182 = vmatpush1.bf16.msra.mxu0 %v1557
    %2183 = vmatprep.subr.bf16.mxu0 %v1554
    %2184 = vmatpush1.bf16.msra.mxu0 %v1553
    %2185 = vmatprep.subr.bf16.mxu0 %v1550
    %2186 = vmatpush1.bf16.msra.mxu0 %v1549
    %2187 = vmatprep.subr.bf16.mxu0 %v1546
    %2188 = vmatpush1.bf16.msra.mxu0 %v1545
    %2189 = vmatprep.subr.bf16.mxu0 %v1542
    %2190 = vmatpush1.bf16.msra.mxu0 %v1541
    %2191 = vmatprep.subr.bf16.mxu0 %v1538
    %2192 = vmatpush1.bf16.msra.mxu0 %v1537
    %2193 = vmatprep.subr.bf16.mxu0 %v1598
    %2194 = vmatpush2.bf16.msra.mxu0 %v1597
    %2195 = vmatprep.subr.bf16.mxu0 %v1594
    %2196 = vmatpush2.bf16.msra.mxu0 %v1593
    %2197 = vmatprep.subr.bf16.mxu0 %v1590
    %2198 = vmatpush2.bf16.msra.mxu0 %v1589
    %2199 = vmatprep.subr.bf16.mxu0 %v1586
    %2200 = vmatpush2.bf16.msra.mxu0 %v1585
    %2201 = vmatprep.subr.bf16.mxu0 %v1582
    %2202 = vmatpush2.bf16.msra.mxu0 %v1581
    %2203 = vmatprep.subr.bf16.mxu0 %v1578
    %2204 = vmatpush2.bf16.msra.mxu0 %v1577
    %2205 = vmatprep.subr.bf16.mxu0 %v1574
    %2206 = vmatpush2.bf16.msra.mxu0 %v1573
    %2207 = vmatprep.subr.bf16.mxu0 %v1570
    %2208 = vmatpush2.bf16.msra.mxu0 %v1569
    %2209 = vmatprep.mubr.bf16.mxu0 %v358
    %2210 = vmatmul.mubr.bf16.gmra.mxu0 %v357
    %v2211 = vpop.f32.mrf.mxu0
    %v2212 = vadd.f32 %v2169, %v2211
    %v2213 = vpop.f32.mrf.mxu0
    %v2214 = vadd.f32 %v2171, %v2213
    %v2215 = vpop.f32.mrf.mxu0
    %v2216 = vadd.f32 %v2173, %v2215
    %v2217 = vpop.f32.mrf.mxu0
    %v2218 = vadd.f32 %v2175, %v2217
    %2219 = vdwg.mxu0
    %2220 = vmatprep.subr.bf16.mxu0 %v1630
    %2221 = vmatpush1.bf16.msra.mxu0 %v1629
    %2222 = vmatprep.subr.bf16.mxu0 %v1626
    %2223 = vmatpush1.bf16.msra.mxu0 %v1625
    %2224 = vmatprep.subr.bf16.mxu0 %v1622
    %2225 = vmatpush1.bf16.msra.mxu0 %v1621
    %2226 = vmatprep.subr.bf16.mxu0 %v1618
    %2227 = vmatpush1.bf16.msra.mxu0 %v1617
    %2228 = vmatprep.subr.bf16.mxu0 %v1614
    %2229 = vmatpush1.bf16.msra.mxu0 %v1613
    %2230 = vmatprep.subr.bf16.mxu0 %v1610
    %2231 = vmatpush1.bf16.msra.mxu0 %v1609
    %2232 = vmatprep.subr.bf16.mxu0 %v1606
    %2233 = vmatpush1.bf16.msra.mxu0 %v1605
    %2234 = vmatprep.subr.bf16.mxu0 %v1602
    %2235 = vmatpush1.bf16.msra.mxu0 %v1601
    %2236 = vmatprep.subr.bf16.mxu0 %v1662
    %2237 = vmatpush2.bf16.msra.mxu0 %v1661
    %2238 = vmatprep.subr.bf16.mxu0 %v1658
    %2239 = vmatpush2.bf16.msra.mxu0 %v1657
    %2240 = vmatprep.subr.bf16.mxu0 %v1654
    %2241 = vmatpush2.bf16.msra.mxu0 %v1653
    %2242 = vmatprep.subr.bf16.mxu0 %v1650
    %2243 = vmatpush2.bf16.msra.mxu0 %v1649
    %2244 = vmatprep.subr.bf16.mxu0 %v1646
    %2245 = vmatpush2.bf16.msra.mxu0 %v1645
    %2246 = vmatprep.subr.bf16.mxu0 %v1642
    %2247 = vmatpush2.bf16.msra.mxu0 %v1641
    %2248 = vmatprep.subr.bf16.mxu0 %v1638
    %2249 = vmatpush2.bf16.msra.mxu0 %v1637
    %2250 = vmatprep.subr.bf16.mxu0 %v1634
    %2251 = vmatpush2.bf16.msra.mxu0 %v1633
    %2252 = vmatprep.mubr.bf16.mxu0 %v360
    %2253 = vmatmul.mubr.bf16.gmra.mxu0 %v359
    %v2254 = vpop.f32.mrf.mxu0
    %v2255 = vadd.f32 %v2212, %v2254
    %v2256 = vpop.f32.mrf.mxu0
    %v2257 = vadd.f32 %v2214, %v2256
    %v2258 = vpop.f32.mrf.mxu0
    %v2259 = vadd.f32 %v2216, %v2258
    %v2260 = vpop.f32.mrf.mxu0
    %v2261 = vadd.f32 %v2218, %v2260
    %2262 = vdwg.mxu0
    %v2263 = vmax.f32 %v2083, 0.0
    %v2264 = vmax.f32 %v2085, 0.0
    %v2265 = vmax.f32 %v2255, 0.0
    %v2266 = vmax.f32 %v2257, 0.0
    %v2267 = vmax.f32 %v2087, 0.0
    %v2268 = vmax.f32 %v2089, 0.0
    %v2269 = vmax.f32 %v2259, 0.0
    %v2270 = vmax.f32 %v2261, 0.0
    %v2271 = vpack.c.bf16 %v2267, %v2263
    %v2272 = vpack.c.bf16 %v2268, %v2264
    %v2273 = vpack.c.bf16 %v2269, %v2265
    %v2274 = vpack.c.bf16 %v2270, %v2266
    %v2275 = vld [vmem:[#allocation7] sm:$0xf]
    %v2276 = vld [vmem:[#allocation7 + $0x4] sm:$0xf]
    %v2277 = vld [vmem:[#allocation7 + $0x8] sm:$0xf]
    %v2278 = vld [vmem:[#allocation7 + $0xc] sm:$0xf]
    %v2279 = vld [vmem:[#allocation7 + $0x10] sm:$0xf]
    %v2280 = vld [vmem:[#allocation7 + $0x14] sm:$0xf]
    %v2281 = vld [vmem:[#allocation7 + $0x18] sm:$0xf]
    %v2282 = vld [vmem:[#allocation7 + $0x1c] sm:$0xf]
    %v2283 = vld [vmem:[#allocation7 + $0x20] sm:$0xf]
    %v2284 = vld [vmem:[#allocation7 + $0x24] sm:$0xf]
    %v2285 = vld [vmem:[#allocation7 + $0x28] sm:$0xf]
    %v2286 = vld [vmem:[#allocation7 + $0x2c] sm:$0xf]
    %v2287 = vld [vmem:[#allocation7 + $0x30] sm:$0xf]
    %v2288 = vld [vmem:[#allocation7 + $0x34] sm:$0xf]
    %v2289 = vld [vmem:[#allocation7 + $0x38] sm:$0xf]
    %v2290 = vld [vmem:[#allocation7 + $0x3c] sm:$0xf]
    %v2291 = vld [vmem:[#allocation7 + $0x40] sm:$0xf]
    %v2292 = vld [vmem:[#allocation7 + $0x44] sm:$0xf]
    %v2293 = vld [vmem:[#allocation7 + $0x48] sm:$0xf]
    %v2294 = vld [vmem:[#allocation7 + $0x4c] sm:$0xf]
    %v2295 = vld [vmem:[#allocation7 + $0x50] sm:$0xf]
    %v2296 = vld [vmem:[#allocation7 + $0x54] sm:$0xf]
    %v2297 = vld [vmem:[#allocation7 + $0x58] sm:$0xf]
    %v2298 = vld [vmem:[#allocation7 + $0x5c] sm:$0xf]
    %v2299 = vld [vmem:[#allocation7 + $0x60] sm:$0xf]
    %v2300 = vld [vmem:[#allocation7 + $0x64] sm:$0xf]
    %v2301 = vld [vmem:[#allocation7 + $0x68] sm:$0xf]
    %v2302 = vld [vmem:[#allocation7 + $0x6c] sm:$0xf]
    %v2303 = vld [vmem:[#allocation7 + $0x70] sm:$0xf]
    %v2304 = vld [vmem:[#allocation7 + $0x74] sm:$0xf]
    %v2305 = vld [vmem:[#allocation7 + $0x78] sm:$0xf]
    %v2306 = vld [vmem:[#allocation7 + $0x7c] sm:$0xf]
    %v2307 = vld [vmem:[#allocation7 + $0x80] sm:$0xf]
    %v2308 = vld [vmem:[#allocation7 + $0x84] sm:$0xf]
    %v2309 = vld [vmem:[#allocation7 + $0x88] sm:$0xf]
    %v2310 = vld [vmem:[#allocation7 + $0x8c] sm:$0xf]
    %v2311 = vld [vmem:[#allocation7 + $0x90] sm:$0xf]
    %v2312 = vld [vmem:[#allocation7 + $0x94] sm:$0xf]
    %v2313 = vld [vmem:[#allocation7 + $0x98] sm:$0xf]
    %v2314 = vld [vmem:[#allocation7 + $0x9c] sm:$0xf]
    %v2315 = vld [vmem:[#allocation7 + $0xa0] sm:$0xf]
    %v2316 = vld [vmem:[#allocation7 + $0xa4] sm:$0xf]
    %v2317 = vld [vmem:[#allocation7 + $0xa8] sm:$0xf]
    %v2318 = vld [vmem:[#allocation7 + $0xac] sm:$0xf]
    %v2319 = vld [vmem:[#allocation7 + $0xb0] sm:$0xf]
    %v2320 = vld [vmem:[#allocation7 + $0xb4] sm:$0xf]
    %v2321 = vld [vmem:[#allocation7 + $0xb8] sm:$0xf]
    %v2322 = vld [vmem:[#allocation7 + $0xbc] sm:$0xf]
    %v2323 = vld [vmem:[#allocation7 + $0xc0] sm:$0xf]
    %v2324 = vld [vmem:[#allocation7 + $0xc4] sm:$0xf]
    %v2325 = vld [vmem:[#allocation7 + $0xc8] sm:$0xf]
    %v2326 = vld [vmem:[#allocation7 + $0xcc] sm:$0xf]
    %v2327 = vld [vmem:[#allocation7 + $0xd0] sm:$0xf]
    %v2328 = vld [vmem:[#allocation7 + $0xd4] sm:$0xf]
    %v2329 = vld [vmem:[#allocation7 + $0xd8] sm:$0xf]
    %v2330 = vld [vmem:[#allocation7 + $0xdc] sm:$0xf]
    %v2331 = vld [vmem:[#allocation7 + $0xe0] sm:$0xf]
    %v2332 = vld [vmem:[#allocation7 + $0xe4] sm:$0xf]
    %v2333 = vld [vmem:[#allocation7 + $0xe8] sm:$0xf]
    %v2334 = vld [vmem:[#allocation7 + $0xec] sm:$0xf]
    %v2335 = vld [vmem:[#allocation7 + $0xf0] sm:$0xf]
    %v2336 = vld [vmem:[#allocation7 + $0xf4] sm:$0xf]
    %v2337 = vld [vmem:[#allocation7 + $0xf8] sm:$0xf]
    %v2338 = vld [vmem:[#allocation7 + $0xfc] sm:$0xf]
    %v2339 = vld [vmem:[%s6] sm:$0x1]
    %v2341 = vlaneseq
    %v2342 = vshrl.u32 %v2341, 7
    %v2343 = vsub.s32 0, %v2342
    %v2344 = vrot.slane %v2339, %v2343
    %v2410 = vunpack.c.l.b16 %v2275
    %v2411 = vunpack.c.l.b16 %v2276
    %v2412 = vunpack.c.l.b16 %v2277
    %v2413 = vunpack.c.l.b16 %v2278
    %v2414 = vunpack.c.l.b16 %v2279
    %v2415 = vunpack.c.l.b16 %v2280
    %v2416 = vunpack.c.l.b16 %v2281
    %v2417 = vunpack.c.l.b16 %v2282
    %v2418 = vunpack.c.l.b16 %v2283
    %v2419 = vunpack.c.l.b16 %v2284
    %v2420 = vunpack.c.l.b16 %v2285
    %v2421 = vunpack.c.l.b16 %v2286
    %v2422 = vunpack.c.l.b16 %v2287
    %v2423 = vunpack.c.l.b16 %v2288
    %v2424 = vunpack.c.l.b16 %v2289
    %v2425 = vunpack.c.l.b16 %v2290
    %v2426 = vunpack.c.l.b16 %v2291
    %v2427 = vunpack.c.l.b16 %v2292
    %v2428 = vunpack.c.l.b16 %v2293
    %v2429 = vunpack.c.l.b16 %v2294
    %v2430 = vunpack.c.l.b16 %v2295
    %v2431 = vunpack.c.l.b16 %v2296
    %v2432 = vunpack.c.l.b16 %v2297
    %v2433 = vunpack.c.l.b16 %v2298
    %v2434 = vunpack.c.l.b16 %v2299
    %v2435 = vunpack.c.l.b16 %v2300
    %v2436 = vunpack.c.l.b16 %v2301
    %v2437 = vunpack.c.l.b16 %v2302
    %v2438 = vunpack.c.l.b16 %v2303
    %v2439 = vunpack.c.l.b16 %v2304
    %v2440 = vunpack.c.l.b16 %v2305
    %v2441 = vunpack.c.l.b16 %v2306
    %v2442 = vunpack.c.l.b16 %v2307
    %v2443 = vunpack.c.l.b16 %v2308
    %v2444 = vunpack.c.l.b16 %v2309
    %v2445 = vunpack.c.l.b16 %v2310
    %v2446 = vunpack.c.l.b16 %v2311
    %v2447 = vunpack.c.l.b16 %v2312
    %v2448 = vunpack.c.l.b16 %v2313
    %v2449 = vunpack.c.l.b16 %v2314
    %v2450 = vunpack.c.l.b16 %v2315
    %v2451 = vunpack.c.l.b16 %v2316
    %v2452 = vunpack.c.l.b16 %v2317
    %v2453 = vunpack.c.l.b16 %v2318
    %v2454 = vunpack.c.l.b16 %v2319
    %v2455 = vunpack.c.l.b16 %v2320
    %v2456 = vunpack.c.l.b16 %v2321
    %v2457 = vunpack.c.l.b16 %v2322
    %v2458 = vunpack.c.l.b16 %v2323
    %v2459 = vunpack.c.l.b16 %v2324
    %v2460 = vunpack.c.l.b16 %v2325
    %v2461 = vunpack.c.l.b16 %v2326
    %v2462 = vunpack.c.l.b16 %v2327
    %v2463 = vunpack.c.l.b16 %v2328
    %v2464 = vunpack.c.l.b16 %v2329
    %v2465 = vunpack.c.l.b16 %v2330
    %v2466 = vunpack.c.l.b16 %v2331
    %v2467 = vunpack.c.l.b16 %v2332
    %v2468 = vunpack.c.l.b16 %v2333
    %v2469 = vunpack.c.l.b16 %v2334
    %v2470 = vunpack.c.l.b16 %v2335
    %v2471 = vunpack.c.l.b16 %v2336
    %v2472 = vunpack.c.l.b16 %v2337
    %v2473 = vunpack.c.l.b16 %v2338
    %v2474 = vpack.c.b16 %v2411, %v2410
    %v2475 = vpack.c.b16 %v2413, %v2412
    %v2476 = vpack.c.b16 %v2415, %v2414
    %v2477 = vpack.c.b16 %v2417, %v2416
    %v2478 = vpack.c.b16 %v2419, %v2418
    %v2479 = vpack.c.b16 %v2421, %v2420
    %v2480 = vpack.c.b16 %v2423, %v2422
    %v2481 = vpack.c.b16 %v2425, %v2424
    %v2482 = vpack.c.b16 %v2427, %v2426
    %v2483 = vpack.c.b16 %v2429, %v2428
    %v2484 = vpack.c.b16 %v2431, %v2430
    %v2485 = vpack.c.b16 %v2433, %v2432
    %v2486 = vpack.c.b16 %v2435, %v2434
    %v2487 = vpack.c.b16 %v2437, %v2436
    %v2488 = vpack.c.b16 %v2439, %v2438
    %v2489 = vpack.c.b16 %v2441, %v2440
    %v2490 = vpack.c.b16 %v2443, %v2442
    %v2491 = vpack.c.b16 %v2445, %v2444
    %v2492 = vpack.c.b16 %v2447, %v2446
    %v2493 = vpack.c.b16 %v2449, %v2448
    %v2494 = vpack.c.b16 %v2451, %v2450
    %v2495 = vpack.c.b16 %v2453, %v2452
    %v2496 = vpack.c.b16 %v2455, %v2454
    %v2497 = vpack.c.b16 %v2457, %v2456
    %v2498 = vpack.c.b16 %v2459, %v2458
    %v2499 = vpack.c.b16 %v2461, %v2460
    %v2500 = vpack.c.b16 %v2463, %v2462
    %v2501 = vpack.c.b16 %v2465, %v2464
    %v2502 = vpack.c.b16 %v2467, %v2466
    %v2503 = vpack.c.b16 %v2469, %v2468
    %v2504 = vpack.c.b16 %v2471, %v2470
    %v2505 = vpack.c.b16 %v2473, %v2472
    %2538 = vmatprep.subr.bf16.mxu0 0
    %2539 = vmatpush1.bf16.msra.mxu0 %v2481
    %2540 = vmatprep.subr.bf16.mxu0 0
    %2541 = vmatpush1.bf16.msra.mxu0 %v2480
    %2542 = vmatprep.subr.bf16.mxu0 0
    %2543 = vmatpush1.bf16.msra.mxu0 %v2479
    %2544 = vmatprep.subr.bf16.mxu0 0
    %2545 = vmatpush1.bf16.msra.mxu0 %v2478
    %2546 = vmatprep.subr.bf16.mxu0 0
    %2547 = vmatpush1.bf16.msra.mxu0 %v2477
    %2548 = vmatprep.subr.bf16.mxu0 0
    %2549 = vmatpush1.bf16.msra.mxu0 %v2476
    %2550 = vmatprep.subr.bf16.mxu0 0
    %2551 = vmatpush1.bf16.msra.mxu0 %v2475
    %2552 = vmatprep.subr.bf16.mxu0 0
    %2553 = vmatpush1.bf16.msra.mxu0 %v2474
    %2554 = vmatprep.subr.bf16.mxu0 0
    %2555 = vmatpush2.bf16.msra.mxu0 %v2489
    %2556 = vmatprep.subr.bf16.mxu0 0
    %2557 = vmatpush2.bf16.msra.mxu0 %v2488
    %2558 = vmatprep.subr.bf16.mxu0 0
    %2559 = vmatpush2.bf16.msra.mxu0 %v2487
    %2560 = vmatprep.subr.bf16.mxu0 0
    %2561 = vmatpush2.bf16.msra.mxu0 %v2486
    %2562 = vmatprep.subr.bf16.mxu0 0
    %2563 = vmatpush2.bf16.msra.mxu0 %v2485
    %2564 = vmatprep.subr.bf16.mxu0 0
    %2565 = vmatpush2.bf16.msra.mxu0 %v2484
    %2566 = vmatprep.subr.bf16.mxu0 0
    %2567 = vmatpush2.bf16.msra.mxu0 %v2483
    %2568 = vmatprep.subr.bf16.mxu0 0
    %2569 = vmatpush2.bf16.msra.mxu0 %v2482
    %2570 = vmatprep.mubr.bf16.mxu0 %v2272
    %2571 = vmatmul.mubr.bf16.gmra.mxu0 %v2271
    %v2572 = vpop.f32.mrf.mxu0
    %v2573 = vadd.f32 %v2344, %v2572
    %v2574 = vpop.f32.mrf.mxu0
    %v2575 = vpop.f32.mrf.mxu0
    %v2576 = vadd.f32 %v2344, %v2575
    %v2577 = vpop.f32.mrf.mxu0
    %2578 = vdwg.mxu0
    %2579 = vmatprep.subr.bf16.mxu0 0
    %2580 = vmatpush1.bf16.msra.mxu0 %v2497
    %2581 = vmatprep.subr.bf16.mxu0 0
    %2582 = vmatpush1.bf16.msra.mxu0 %v2496
    %2583 = vmatprep.subr.bf16.mxu0 0
    %2584 = vmatpush1.bf16.msra.mxu0 %v2495
    %2585 = vmatprep.subr.bf16.mxu0 0
    %2586 = vmatpush1.bf16.msra.mxu0 %v2494
    %2587 = vmatprep.subr.bf16.mxu0 0
    %2588 = vmatpush1.bf16.msra.mxu0 %v2493
    %2589 = vmatprep.subr.bf16.mxu0 0
    %2590 = vmatpush1.bf16.msra.mxu0 %v2492
    %2591 = vmatprep.subr.bf16.mxu0 0
    %2592 = vmatpush1.bf16.msra.mxu0 %v2491
    %2593 = vmatprep.subr.bf16.mxu0 0
    %2594 = vmatpush1.bf16.msra.mxu0 %v2490
    %2595 = vmatprep.subr.bf16.mxu0 0
    %2596 = vmatpush2.bf16.msra.mxu0 %v2505
    %2597 = vmatprep.subr.bf16.mxu0 0
    %2598 = vmatpush2.bf16.msra.mxu0 %v2504
    %2599 = vmatprep.subr.bf16.mxu0 0
    %2600 = vmatpush2.bf16.msra.mxu0 %v2503
    %2601 = vmatprep.subr.bf16.mxu0 0
    %2602 = vmatpush2.bf16.msra.mxu0 %v2502
    %2603 = vmatprep.subr.bf16.mxu0 0
    %2604 = vmatpush2.bf16.msra.mxu0 %v2501
    %2605 = vmatprep.subr.bf16.mxu0 0
    %2606 = vmatpush2.bf16.msra.mxu0 %v2500
    %2607 = vmatprep.subr.bf16.mxu0 0
    %2608 = vmatpush2.bf16.msra.mxu0 %v2499
    %2609 = vmatprep.subr.bf16.mxu0 0
    %2610 = vmatpush2.bf16.msra.mxu0 %v2498
    %2611 = vmatprep.mubr.bf16.mxu0 %v2274
    %2612 = vmatmul.mubr.bf16.gmra.mxu0 %v2273
    %v2613 = vpop.f32.mrf.mxu0
    %v2614 = vadd.f32 %v2573, %v2613
    %v2615 = vpop.f32.mrf.mxu0
    %v2616 = vpop.f32.mrf.mxu0
    %v2617 = vadd.f32 %v2576, %v2616
    %v2618 = vpop.f32.mrf.mxu0
    %2619 = vdwg.mxu0
    %2620 = vmax.xlane.f32.xlu0 %v2614
    %v2621 = vpop.xlane.xlu0 %2620
    %2622 = vmax.xlane.f32.xlu0 %v2617
    %v2623 = vpop.xlane.xlu0 %2622
    %v2624 = vsub.f32 %v2614, %v2621
    %v2625 = vsub.f32 %v2617, %v2623
    %v2626 = vmul.f32 %v2624, 1.442695
    %v2627 = vpow.pop %v2626
    %v2628 = vmul.f32 %v2625, 1.442695
    %v2629 = vpow.pop %v2628
    %2630 = vadd.xlane.f32.xlu0 %v2627
    %v2631 = vpop.xlane.xlu0 %2630
    %2632 = vadd.xlane.f32.xlu0 %v2629
    %v2633 = vpop.xlane.xlu0 %2632
    %v2634 = vrcp.pop %v2631
    %v2635 = vrcp.pop %v2633
    %v2636 = vmul.f32 %v2627, %v2634
    %v2637 = vmul.f32 %v2629, %v2635
    %2638 = vst [vmem:[#allocation8] sm:$0xff] %v2636
    %2639 = vst [vmem:[#allocation8 + $0x8] sm:$0xff] %v2637
    // Predicated region
    $region42: #{tpu_custom_call.1} parent=1 // pred_check
      _
    $region43: #{tpu_custom_call.1} parent=1 // pred_check_branch
      %2641 = sbr.rel (0) target = $region45
    $region44: #{tpu_custom_call.1} parent=1 // pred_region
      %s2643 = ssub.s32 256, 256
      %2644 = vsyncadd [#allocation4], %s2643
      %s2645 = sshll.u32 [#allocation8], 4
      %s2646 = int_to_ptr.vmem [resolvable:$true] %s2645
      %2651 = dma.vmem_to_hbm [thread:$0]  %s2646, 256, %s7, [#allocation4], 128, 128, 8
    $region45: #{tpu_custom_call.1} parent=1 // pred_fallthru
      _
    // Predicated region
    $region46: #{tpu_custom_call.1} parent=1 // pred_check
      _
    $region47: #{tpu_custom_call.1} parent=1 // pred_check_branch
      %2653 = sbr.rel (0) target = $region49
    $region48: #{tpu_custom_call.1} parent=1 // pred_region
      %2654 = dma.done [#allocation4], 256
    $region49: #{tpu_custom_call.1} parent=1 // pred_fallthru
      _
    %2655 = vsyncpa [#allocation3], 1
    %2656 = vsyncpa [#allocation6], 1
    %2657 = vsyncpa [#allocation4], 1

</llo_original>
